<compile_context>
chip_gen: v6e
topology: v6e:2x2x1
jax: 0.10.0
libtpu: 0.0.40
codegen_flags: <defaults>
</compile_context>

<pallas_src>
import math
import jax
import jax.numpy as jnp
from jax.experimental import pallas as pl
from jax.experimental.pallas import tpu as pltpu

EPS = 1e-5                      # PyTorch nn.LayerNorm default eps
NEG_INF = -1e30                 # finite "minus infinity" for the causal mask bias
LANE = 128                      # TPU lane width (lane-dense output padding)
MATMUL_DTYPE = jnp.bfloat16     # MXU operand dtype (f32 accumulation). jnp.float32 for exact parity.


# ----------------------------- in-kernel helpers -----------------------------
def _layer_norm(x, gamma, beta):
    # x: (N, D) f32; gamma/beta: (1, D) f32
    mean = jnp.mean(x, axis=-1, keepdims=True)
    var = jnp.mean((x - mean) ** 2, axis=-1, keepdims=True)   # biased, like PyTorch
    return (x - mean) * jax.lax.rsqrt(var + EPS) * gamma + beta


def _gelu_exact(x):
    # nn.GELU() default (erf-based)
    return 0.5 * x * (1.0 + jax.lax.erf(x * (1.0 / math.sqrt(2.0))))


# ----------------------------- fused Pallas kernel ----------------------------
def make_fused_kernel(B, S, D, H, L, causal):
    """Entire Transformer forward (post-embedding) for the whole batch in one kernel."""
    dh = D // H
    N = B * S
    scale = 1.0 / math.sqrt(dh)

    def kernel(x_ref,
               ln1_g, ln1_b, wq, wk, wv, bq, bk, bv, wo, bo,
               ln2_g, ln2_b, w1, b1, w2, b2,
               fn_g, fn_b, w_out, b_out,
               out_ref):
        x = x_ref[...]                                            # (N, D) f32

        if causal:
            row = jax.lax.broadcasted_iota(jnp.int32, (S, S), 0)
            col = jax.lax.broadcasted_iota(jnp.int32, (S, S), 1)
            # additive mask bias, hoisted out of all loops
            mask_bias = jnp.where(col <= row, 0.0, NEG_INF).astype(jnp.float32)[None, :, :]

        for l in range(L):                                        # static unroll (L = 2)
            # ---- x = x + attention(layer_norm_1(x)) ----
            h = _layer_norm(x, ln1_g[l], ln1_b[l])                # f32
            hb = h.astype(MATMUL_DTYPE)
            attn = jnp.zeros((N, D), jnp.float32)
            for hh in range(H):                                   # static unroll (H = 4)
                q = jnp.dot(hb, wq[l, hh], preferred_element_type=jnp.float32) + bq[l, hh]
                k = jnp.dot(hb, wk[l, hh], preferred_element_type=jnp.float32) + bk[l, hh]
                v = jnp.dot(hb, wv[l, hh], preferred_element_type=jnp.float32) + bv[l, hh]
                # (N, dh) -> (B, S, dh); single-batch-dim einsum handles all B at once
                q3 = q.reshape(B, S, dh).astype(MATMUL_DTYPE)
                k3 = k.reshape(B, S, dh).astype(MATMUL_DTYPE)
                v3 = v.reshape(B, S, dh).astype(MATMUL_DTYPE)
                s = jnp.einsum('bqd,bkd->bqk', q3, k3,
                               preferred_element_type=jnp.float32) * scale   # (B, S, S) f32
                if causal:
                    s = s + mask_bias
                s = s - jnp.max(s, axis=-1, keepdims=True)
                p = jnp.exp(s)
                p = p * pl.reciprocal(jnp.sum(p, axis=-1, keepdims=True), approx=True)
                o3 = jnp.einsum('bqk,bkd->bqd', p.astype(MATMUL_DTYPE), v3,
                                preferred_element_type=jnp.float32)          # (B, S, dh)
                o2 = o3.reshape(N, dh).astype(MATMUL_DTYPE)
                # output projection accumulated per head: concat(heads) @ Wo == sum_h o_h @ Wo_h
                attn = attn + jnp.dot(o2, wo[l, hh], preferred_element_type=jnp.float32)
            x = x + attn + bo[l]

            # ---- x = x + feed_forward(layer_norm_2(x)) ----
            h2 = _layer_norm(x, ln2_g[l], ln2_b[l])
            a = jnp.dot(h2.astype(MATMUL_DTYPE), w1[l],
                        preferred_element_type=jnp.float32) + b1[l]
            a = _gelu_exact(a)
            ff = jnp.dot(a.astype(MATMUL_DTYPE), w2[l],
                         preferred_element_type=jnp.float32) + b2[l]
            # TODO(synk): nn.Dropout in training mode not implemented; identity (eval/inference mode).
            x = x + ff

        # ---- final_norm + output_layer (vocab padded to 128 lanes -> lane-dense store) ----
        hf = _layer_norm(x, fn_g[...], fn_b[...])
        out_ref[...] = jnp.dot(hf.astype(MATMUL_DTYPE), w_out[...],
                               preferred_element_type=jnp.float32) + b_out[...]

    return kernel


# ----------------------------- weight preparation ------------------------------
def prepare_weights(params, num_heads):
    """Stack per-layer weights, split Q/K/V/out-proj by head, cast matmul operands to bf16,
    and pad the output projection to a lane-dense (128-wide) vocab dim.  Plain-JAX prep."""
    L = len(params["layers"])
    D = params["tok_emb"].shape[1]
    H = num_heads
    dh = D // H

    def stack(name):
        return jnp.stack([lp[name] for lp in params["layers"]], axis=0)

    def split_w_cols(w):   # (L, D, D) -> (L, H, D, dh): head h uses columns [h*dh:(h+1)*dh]
        return w.reshape(L, D, H, dh).transpose(0, 2, 1, 3)

    def split_b_cols(b):   # (L, 1, D) -> (L, H, 1, dh)
        return b.reshape(L, 1, H, dh).transpose(0, 2, 1, 3)

    V = params["w_out"].shape[1]
    Vp = ((V + LANE - 1) // LANE) * LANE
    w_out_p = jnp.pad(params["w_out"], ((0, 0), (0, Vp - V)))
    b_out_p = jnp.pad(params["b_out"], ((0, 0), (0, Vp - V)))

    wd = dict(
        ln1_g=stack("ln1_g"), ln1_b=stack("ln1_b"),
        wq=split_w_cols(stack("wq")).astype(MATMUL_DTYPE),
        wk=split_w_cols(stack("wk")).astype(MATMUL_DTYPE),
        wv=split_w_cols(stack("wv")).astype(MATMUL_DTYPE),
        bq=split_b_cols(stack("bq")),
        bk=split_b_cols(stack("bk")),
        bv=split_b_cols(stack("bv")),
        wo=stack("wo").reshape(L, H, dh, D).astype(MATMUL_DTYPE),   # head h uses rows [h*dh:(h+1)*dh]
        bo=stack("bo"),
        ln2_g=stack("ln2_g"), ln2_b=stack("ln2_b"),
        w1=stack("w1").astype(MATMUL_DTYPE), b1=stack("b1"),
        w2=stack("w2").astype(MATMUL_DTYPE), b2=stack("b2"),
        fn_g=params["fn_g"], fn_b=params["fn_b"],
        w_out=w_out_p.astype(MATMUL_DTYPE), b_out=b_out_p,
    )
    return wd, Vp


# ----------------------------- forward wrapper ---------------------------------
def transformer_forward(token_ids, params, num_heads, causal):
    B, S = token_ids.shape
    D = params["tok_emb"].shape[1]
    V = params["w_out"].shape[1]
    L = len(params["layers"])

    # Embedding lookup + learnable positional encoding (gather glue in plain JAX).
    x = jnp.take(params["tok_emb"], token_ids, axis=0) + params["pos_emb"][None, :S, :]
    x2 = x.reshape(B * S, D).astype(jnp.float32)                 # batch folded into rows

    wd, Vp = prepare_weights(params, num_heads)
    kernel = make_fused_kernel(B, S, D, num_heads, L, causal)

    # Single grid-less pallas_call: every operand is a full-array VMEM ref (total << 1 MiB,
    # fits all of v5e/v6e/v7x scoped VMEM comfortably).
    # TODO(synk): at B=2 a 'parallel' batch grid axis could engage v7x's second TensorCore;
    # kept single-step here per the batch-folding recommendation (zero cost on v5e/v6e).
    out = pl.pallas_call(
        kernel,
        out_shape=jax.ShapeDtypeStruct((B * S, Vp), jnp.float32),
        compiler_params=pltpu.CompilerParams(vmem_limit_bytes=32 * 1024 * 1024),
    )(x2,
      wd["ln1_g"], wd["ln1_b"], wd["wq"], wd["wk"], wd["wv"],
      wd["bq"], wd["bk"], wd["bv"], wd["wo"], wd["bo"],
      wd["ln2_g"], wd["ln2_b"], wd["w1"], wd["b1"], wd["w2"], wd["b2"],
      wd["fn_g"], wd["fn_b"], wd["w_out"], wd["b_out"])

    return out[:, :V].reshape(B, S, V)                           # drop lane padding


# ----------------------------- parameters --------------------------------------
def init_params(key, vocab_size, window_size, embed_dim, num_heads, num_layers):
    D, I = embed_dim, 4 * embed_dim
    n_keys = 2 + num_layers * 6 + 1
    keys = iter(jax.random.split(key, n_keys))

    def w(k, shape, scale=0.02):
        return (scale * jax.random.normal(k, shape)).astype(jnp.float32)

    params = {
        "tok_emb": w(next(keys), (vocab_size, D)),
        "pos_emb": w(next(keys), (window_size, D)),
        "layers": [],
        "fn_g": jnp.ones((1, D), jnp.float32),
        "fn_b": jnp.zeros((1, D), jnp.float32),
    }
    for _ in range(num_layers):
        layer = {
            "ln1_g": jnp.ones((1, D), jnp.float32), "ln1_b": jnp.zeros((1, D), jnp.float32),
            "wq": w(next(keys), (D, D)), "bq": jnp.zeros((1, D), jnp.float32),
            "wk": w(next(keys), (D, D)), "bk": jnp.zeros((1, D), jnp.float32),
            "wv": w(next(keys), (D, D)), "bv": jnp.zeros((1, D), jnp.float32),
            "wo": w(next(keys), (D, D)), "bo": jnp.zeros((1, D), jnp.float32),
            "ln2_g": jnp.ones((1, D), jnp.float32), "ln2_b": jnp.zeros((1, D), jnp.float32),
            "w1": w(next(keys), (D, I)), "b1": jnp.zeros((1, I), jnp.float32),
            "w2": w(next(keys), (I, D)), "b2": jnp.zeros((1, D), jnp.float32),
        }
        params["layers"].append(layer)
    params["w_out"] = w(next(keys), (D, vocab_size))
    params["b_out"] = jnp.zeros((1, vocab_size), jnp.float32)
    return params


# ----------------------------- main ---------------------------------------------
if __name__ == "__main__":
    # TransformerConfig: embed_dim=32, window_size=8, vocab_size=16,
    # attention_head_size=4 heads, attention_layer_size=2 layers,
    # hidden_dropout_prob=0.1 (identity at inference), inference_mode=True (causal mask).
    embed_dim, window_size, vocab_size = 32, 8, 16
    num_heads, num_layers = 4, 2
    batch = 2

    key = jax.random.PRNGKey(0)
    k_ids, k_params = jax.random.split(key)
    token_ids = jax.random.randint(k_ids, (batch, window_size), 0, vocab_size, dtype=jnp.int32)
    params = init_params(k_params, vocab_size, window_size, embed_dim, num_heads, num_layers)

    logits = transformer_forward(token_ids, params, num_heads, causal=True)
    jax.block_until_ready(logits)
    assert logits.shape == (batch, window_size, vocab_size)
    assert bool(jnp.all(jnp.isfinite(logits)))
    print("KERNEL_OK")
</pallas_src>

<mosaic_0001>
module attributes {stable_mosaic.version = 11 : i64} {
  func.func @kernel(%arg0: memref<16x32xf32, #tpu.memory_space<vmem>>, %arg1: memref<2x1x32xf32, #tpu.memory_space<vmem>>, %arg2: memref<2x1x32xf32, #tpu.memory_space<vmem>>, %arg3: memref<2x4x32x8xbf16, #tpu.memory_space<vmem>>, %arg4: memref<2x4x32x8xbf16, #tpu.memory_space<vmem>>, %arg5: memref<2x4x32x8xbf16, #tpu.memory_space<vmem>>, %arg6: memref<2x4x1x8xf32, #tpu.memory_space<vmem>>, %arg7: memref<2x4x1x8xf32, #tpu.memory_space<vmem>>, %arg8: memref<2x4x1x8xf32, #tpu.memory_space<vmem>>, %arg9: memref<2x4x8x32xbf16, #tpu.memory_space<vmem>>, %arg10: memref<2x1x32xf32, #tpu.memory_space<vmem>>, %arg11: memref<2x1x32xf32, #tpu.memory_space<vmem>>, %arg12: memref<2x1x32xf32, #tpu.memory_space<vmem>>, %arg13: memref<2x32x128xbf16, #tpu.memory_space<vmem>>, %arg14: memref<2x1x128xf32, #tpu.memory_space<vmem>>, %arg15: memref<2x128x32xbf16, #tpu.memory_space<vmem>>, %arg16: memref<2x1x32xf32, #tpu.memory_space<vmem>>, %arg17: memref<1x32xf32, #tpu.memory_space<vmem>>, %arg18: memref<1x32xf32, #tpu.memory_space<vmem>>, %arg19: memref<32x128xbf16, #tpu.memory_space<vmem>>, %arg20: memref<1x128xf32, #tpu.memory_space<vmem>>, %arg21: memref<16x128xf32, #tpu.memory_space<vmem>>) attributes {dimension_semantics = [], scalar_prefetch = 0 : i64, scratch_operands = 0 : i64, tpu.core_type = #tpu.core_type<tc>} {
    %c0 = arith.constant 0 : index
    %c0_0 = arith.constant 0 : index
    %0 = vector.load %arg0[%c0, %c0_0] : memref<16x32xf32, #tpu.memory_space<vmem>>, vector<16x32xf32>
    %1 = tpu.iota {dimensions = array<i32: 0>} : vector<8x8xi32>
    %2 = tpu.iota {dimensions = array<i32: 1>} : vector<8x8xi32>
    %3 = arith.cmpi sle, %2, %1 : vector<8x8xi32>
    %cst = arith.constant 0.000000e+00 : f32
    %cst_1 = arith.constant -1.000000e+30 : f32
    %4 = vector.broadcast %cst : f32 to vector<8x8xf32>
    %5 = vector.broadcast %cst_1 : f32 to vector<8x8xf32>
    %6 = arith.select %3, %4, %5 : vector<8x8xi1>, vector<8x8xf32>
    %7 = vector.shape_cast %6 : vector<8x8xf32> to vector<1x8x8xf32>
    %c0_2 = arith.constant 0 : index
    %c0_3 = arith.constant 0 : index
    %c0_4 = arith.constant 0 : index
    %8 = vector.load %arg1[%c0_2, %c0_3, %c0_4] : memref<2x1x32xf32, #tpu.memory_space<vmem>>, vector<1x1x32xf32>
    %9 = vector.shape_cast %8 : vector<1x1x32xf32> to vector<1x32xf32>
    %c0_5 = arith.constant 0 : index
    %c0_6 = arith.constant 0 : index
    %c0_7 = arith.constant 0 : index
    %10 = vector.load %arg2[%c0_5, %c0_6, %c0_7] : memref<2x1x32xf32, #tpu.memory_space<vmem>>, vector<1x1x32xf32>
    %11 = vector.shape_cast %10 : vector<1x1x32xf32> to vector<1x32xf32>
    %cst_8 = arith.constant dense<0.000000e+00> : vector<16xf32>
    %12 = vector.multi_reduction <add>, %0, %cst_8 [1] : vector<16x32xf32> to vector<16xf32>
    %13 = vector.shape_cast %12 : vector<16xf32> to vector<16x1xf32>
    %cst_9 = arith.constant 3.200000e+01 : f32
    %14 = vector.broadcast %cst_9 : f32 to vector<16x1xf32>
    %15 = arith.divf %13, %14 : vector<16x1xf32>
    %16 = vector.broadcast %15 : vector<16x1xf32> to vector<16x32xf32>
    %17 = arith.subf %0, %16 : vector<16x32xf32>
    %18 = arith.mulf %17, %17 : vector<16x32xf32>
    %cst_10 = arith.constant dense<0.000000e+00> : vector<16xf32>
    %19 = vector.multi_reduction <add>, %18, %cst_10 [1] : vector<16x32xf32> to vector<16xf32>
    %20 = vector.shape_cast %19 : vector<16xf32> to vector<16x1xf32>
    %cst_11 = arith.constant 3.200000e+01 : f32
    %21 = vector.broadcast %cst_11 : f32 to vector<16x1xf32>
    %22 = arith.divf %20, %21 : vector<16x1xf32>
    %23 = vector.broadcast %15 : vector<16x1xf32> to vector<16x32xf32>
    %24 = arith.subf %0, %23 : vector<16x32xf32>
    %cst_12 = arith.constant 9.99999974E-6 : f32
    %25 = vector.broadcast %cst_12 : f32 to vector<16x1xf32>
    %26 = arith.addf %22, %25 : vector<16x1xf32>
    %27 = math.rsqrt %26 : vector<16x1xf32>
    %28 = vector.broadcast %27 : vector<16x1xf32> to vector<16x32xf32>
    %29 = arith.mulf %24, %28 : vector<16x32xf32>
    %30 = vector.broadcast %9 : vector<1x32xf32> to vector<16x32xf32>
    %31 = arith.mulf %29, %30 : vector<16x32xf32>
    %32 = vector.broadcast %11 : vector<1x32xf32> to vector<16x32xf32>
    %33 = arith.addf %31, %32 : vector<16x32xf32>
    %34 = arith.truncf %33 : vector<16x32xf32> to vector<16x32xbf16>
    %cst_13 = arith.constant 0.000000e+00 : f32
    %35 = vector.broadcast %cst_13 : f32 to vector<16x32xf32>
    %c0_14 = arith.constant 0 : index
    %c0_15 = arith.constant 0 : index
    %c0_16 = arith.constant 0 : index
    %c0_17 = arith.constant 0 : index
    %36 = vector.load %arg3[%c0_14, %c0_15, %c0_16, %c0_17] : memref<2x4x32x8xbf16, #tpu.memory_space<vmem>>, vector<1x1x32x8xbf16>
    %37 = vector.shape_cast %36 : vector<1x1x32x8xbf16> to vector<32x8xbf16>
    %cst_18 = arith.constant dense<0.000000e+00> : vector<16x8xf32>
    %38 = tpu.matmul %34, %37, %cst_18 {dimension_numbers = #tpu.dot_dimension_numbers<[1], [0], [0], [1], [0, 0, 1, 1], [], []>} : vector<16x32xbf16>, vector<32x8xbf16>, vector<16x8xf32> -> vector<16x8xf32>
    %c0_19 = arith.constant 0 : index
    %c0_20 = arith.constant 0 : index
    %c0_21 = arith.constant 0 : index
    %c0_22 = arith.constant 0 : index
    %39 = vector.load %arg6[%c0_19, %c0_20, %c0_21, %c0_22] : memref<2x4x1x8xf32, #tpu.memory_space<vmem>>, vector<1x1x1x8xf32>
    %40 = vector.shape_cast %39 : vector<1x1x1x8xf32> to vector<1x8xf32>
    %41 = vector.broadcast %40 : vector<1x8xf32> to vector<16x8xf32>
    %42 = arith.addf %38, %41 : vector<16x8xf32>
    %c0_23 = arith.constant 0 : index
    %c0_24 = arith.constant 0 : index
    %c0_25 = arith.constant 0 : index
    %c0_26 = arith.constant 0 : index
    %43 = vector.load %arg4[%c0_23, %c0_24, %c0_25, %c0_26] : memref<2x4x32x8xbf16, #tpu.memory_space<vmem>>, vector<1x1x32x8xbf16>
    %44 = vector.shape_cast %43 : vector<1x1x32x8xbf16> to vector<32x8xbf16>
    %cst_27 = arith.constant dense<0.000000e+00> : vector<16x8xf32>
    %45 = tpu.matmul %34, %44, %cst_27 {dimension_numbers = #tpu.dot_dimension_numbers<[1], [0], [0], [1], [0, 0, 1, 1], [], []>} : vector<16x32xbf16>, vector<32x8xbf16>, vector<16x8xf32> -> vector<16x8xf32>
    %c0_28 = arith.constant 0 : index
    %c0_29 = arith.constant 0 : index
    %c0_30 = arith.constant 0 : index
    %c0_31 = arith.constant 0 : index
    %46 = vector.load %arg7[%c0_28, %c0_29, %c0_30, %c0_31] : memref<2x4x1x8xf32, #tpu.memory_space<vmem>>, vector<1x1x1x8xf32>
    %47 = vector.shape_cast %46 : vector<1x1x1x8xf32> to vector<1x8xf32>
    %48 = vector.broadcast %47 : vector<1x8xf32> to vector<16x8xf32>
    %49 = arith.addf %45, %48 : vector<16x8xf32>
    %c0_32 = arith.constant 0 : index
    %c0_33 = arith.constant 0 : index
    %c0_34 = arith.constant 0 : index
    %c0_35 = arith.constant 0 : index
    %50 = vector.load %arg5[%c0_32, %c0_33, %c0_34, %c0_35] : memref<2x4x32x8xbf16, #tpu.memory_space<vmem>>, vector<1x1x32x8xbf16>
    %51 = vector.shape_cast %50 : vector<1x1x32x8xbf16> to vector<32x8xbf16>
    %cst_36 = arith.constant dense<0.000000e+00> : vector<16x8xf32>
    %52 = tpu.matmul %34, %51, %cst_36 {dimension_numbers = #tpu.dot_dimension_numbers<[1], [0], [0], [1], [0, 0, 1, 1], [], []>} : vector<16x32xbf16>, vector<32x8xbf16>, vector<16x8xf32> -> vector<16x8xf32>
    %c0_37 = arith.constant 0 : index
    %c0_38 = arith.constant 0 : index
    %c0_39 = arith.constant 0 : index
    %c0_40 = arith.constant 0 : index
    %53 = vector.load %arg8[%c0_37, %c0_38, %c0_39, %c0_40] : memref<2x4x1x8xf32, #tpu.memory_space<vmem>>, vector<1x1x1x8xf32>
    %54 = vector.shape_cast %53 : vector<1x1x1x8xf32> to vector<1x8xf32>
    %55 = vector.broadcast %54 : vector<1x8xf32> to vector<16x8xf32>
    %56 = arith.addf %52, %55 : vector<16x8xf32>
    %57 = vector.shape_cast %42 : vector<16x8xf32> to vector<2x8x8xf32>
    %58 = arith.truncf %57 : vector<2x8x8xf32> to vector<2x8x8xbf16>
    %59 = vector.shape_cast %49 : vector<16x8xf32> to vector<2x8x8xf32>
    %60 = arith.truncf %59 : vector<2x8x8xf32> to vector<2x8x8xbf16>
    %61 = vector.shape_cast %56 : vector<16x8xf32> to vector<2x8x8xf32>
    %62 = arith.truncf %61 : vector<2x8x8xf32> to vector<2x8x8xbf16>
    "tpu.trace_start"() <{level = 10 : i32, message = "bqd,bkd->bqk"}> : () -> ()
    %cst_41 = arith.constant dense<0.000000e+00> : vector<2x8x8xf32>
    %63 = tpu.matmul %58, %60, %cst_41 {dimension_numbers = #tpu.dot_dimension_numbers<[2], [2], [1], [1], [0, 0, 0, 1, 1, 1], [0], [0]>} : vector<2x8x8xbf16>, vector<2x8x8xbf16>, vector<2x8x8xf32> -> vector<2x8x8xf32>
    "tpu.trace_stop"() : () -> ()
    %cst_42 = arith.constant 0.353553385 : f32
    %64 = vector.broadcast %cst_42 : f32 to vector<2x8x8xf32>
    %65 = arith.mulf %63, %64 : vector<2x8x8xf32>
    %66 = vector.broadcast %7 : vector<1x8x8xf32> to vector<2x8x8xf32>
    %67 = arith.addf %65, %66 : vector<2x8x8xf32>
    %cst_43 = arith.constant dense<0xFF800000> : vector<2x8xf32>
    %68 = vector.multi_reduction <maximumf>, %67, %cst_43 [2] : vector<2x8x8xf32> to vector<2x8xf32>
    %69 = vector.shape_cast %68 : vector<2x8xf32> to vector<2x8x1xf32>
    %70 = vector.broadcast %69 : vector<2x8x1xf32> to vector<2x8x8xf32>
    %71 = arith.subf %67, %70 : vector<2x8x8xf32>
    %72 = math.exp %71 : vector<2x8x8xf32>
    %cst_44 = arith.constant dense<0.000000e+00> : vector<2x8xf32>
    %73 = vector.multi_reduction <add>, %72, %cst_44 [2] : vector<2x8x8xf32> to vector<2x8xf32>
    %74 = vector.shape_cast %73 : vector<2x8xf32> to vector<2x8x1xf32>
    %75 = tpu.reciprocal %74 {approx = true} : vector<2x8x1xf32> -> vector<2x8x1xf32>
    %76 = vector.broadcast %75 : vector<2x8x1xf32> to vector<2x8x8xf32>
    %77 = arith.mulf %72, %76 : vector<2x8x8xf32>
    %78 = arith.truncf %77 : vector<2x8x8xf32> to vector<2x8x8xbf16>
    "tpu.trace_start"() <{level = 10 : i32, message = "bqk,bkd->bqd"}> : () -> ()
    %cst_45 = arith.constant dense<0.000000e+00> : vector<2x8x8xf32>
    %79 = tpu.matmul %78, %62, %cst_45 {dimension_numbers = #tpu.dot_dimension_numbers<[2], [1], [1], [2], [0, 0, 0, 1, 1, 2], [0], [0]>} : vector<2x8x8xbf16>, vector<2x8x8xbf16>, vector<2x8x8xf32> -> vector<2x8x8xf32>
    "tpu.trace_stop"() : () -> ()
    %80 = vector.shape_cast %79 : vector<2x8x8xf32> to vector<16x8xf32>
    %81 = arith.truncf %80 : vector<16x8xf32> to vector<16x8xbf16>
    %c0_46 = arith.constant 0 : index
    %c0_47 = arith.constant 0 : index
    %c0_48 = arith.constant 0 : index
    %c0_49 = arith.constant 0 : index
    %82 = vector.load %arg9[%c0_46, %c0_47, %c0_48, %c0_49] : memref<2x4x8x32xbf16, #tpu.memory_space<vmem>>, vector<1x1x8x32xbf16>
    %83 = vector.shape_cast %82 : vector<1x1x8x32xbf16> to vector<8x32xbf16>
    %cst_50 = arith.constant dense<0.000000e+00> : vector<16x32xf32>
    %84 = tpu.matmul %81, %83, %cst_50 {dimension_numbers = #tpu.dot_dimension_numbers<[1], [0], [0], [1], [0, 0, 1, 1], [], []>} : vector<16x8xbf16>, vector<8x32xbf16>, vector<16x32xf32> -> vector<16x32xf32>
    %85 = arith.addf %35, %84 : vector<16x32xf32>
    %c0_51 = arith.constant 0 : index
    %c1 = arith.constant 1 : index
    %c0_52 = arith.constant 0 : index
    %c0_53 = arith.constant 0 : index
    %86 = vector.load %arg3[%c0_51, %c1, %c0_52, %c0_53] : memref<2x4x32x8xbf16, #tpu.memory_space<vmem>>, vector<1x1x32x8xbf16>
    %87 = vector.shape_cast %86 : vector<1x1x32x8xbf16> to vector<32x8xbf16>
    %cst_54 = arith.constant dense<0.000000e+00> : vector<16x8xf32>
    %88 = tpu.matmul %34, %87, %cst_54 {dimension_numbers = #tpu.dot_dimension_numbers<[1], [0], [0], [1], [0, 0, 1, 1], [], []>} : vector<16x32xbf16>, vector<32x8xbf16>, vector<16x8xf32> -> vector<16x8xf32>
    %c0_55 = arith.constant 0 : index
    %c1_56 = arith.constant 1 : index
    %c0_57 = arith.constant 0 : index
    %c0_58 = arith.constant 0 : index
    %89 = vector.load %arg6[%c0_55, %c1_56, %c0_57, %c0_58] : memref<2x4x1x8xf32, #tpu.memory_space<vmem>>, vector<1x1x1x8xf32>
    %90 = vector.shape_cast %89 : vector<1x1x1x8xf32> to vector<1x8xf32>
    %91 = vector.broadcast %90 : vector<1x8xf32> to vector<16x8xf32>
    %92 = arith.addf %88, %91 : vector<16x8xf32>
    %c0_59 = arith.constant 0 : index
    %c1_60 = arith.constant 1 : index
    %c0_61 = arith.constant 0 : index
    %c0_62 = arith.constant 0 : index
    %93 = vector.load %arg4[%c0_59, %c1_60, %c0_61, %c0_62] : memref<2x4x32x8xbf16, #tpu.memory_space<vmem>>, vector<1x1x32x8xbf16>
    %94 = vector.shape_cast %93 : vector<1x1x32x8xbf16> to vector<32x8xbf16>
    %cst_63 = arith.constant dense<0.000000e+00> : vector<16x8xf32>
    %95 = tpu.matmul %34, %94, %cst_63 {dimension_numbers = #tpu.dot_dimension_numbers<[1], [0], [0], [1], [0, 0, 1, 1], [], []>} : vector<16x32xbf16>, vector<32x8xbf16>, vector<16x8xf32> -> vector<16x8xf32>
    %c0_64 = arith.constant 0 : index
    %c1_65 = arith.constant 1 : index
    %c0_66 = arith.constant 0 : index
    %c0_67 = arith.constant 0 : index
    %96 = vector.load %arg7[%c0_64, %c1_65, %c0_66, %c0_67] : memref<2x4x1x8xf32, #tpu.memory_space<vmem>>, vector<1x1x1x8xf32>
    %97 = vector.shape_cast %96 : vector<1x1x1x8xf32> to vector<1x8xf32>
    %98 = vector.broadcast %97 : vector<1x8xf32> to vector<16x8xf32>
    %99 = arith.addf %95, %98 : vector<16x8xf32>
    %c0_68 = arith.constant 0 : index
    %c1_69 = arith.constant 1 : index
    %c0_70 = arith.constant 0 : index
    %c0_71 = arith.constant 0 : index
    %100 = vector.load %arg5[%c0_68, %c1_69, %c0_70, %c0_71] : memref<2x4x32x8xbf16, #tpu.memory_space<vmem>>, vector<1x1x32x8xbf16>
    %101 = vector.shape_cast %100 : vector<1x1x32x8xbf16> to vector<32x8xbf16>
    %cst_72 = arith.constant dense<0.000000e+00> : vector<16x8xf32>
    %102 = tpu.matmul %34, %101, %cst_72 {dimension_numbers = #tpu.dot_dimension_numbers<[1], [0], [0], [1], [0, 0, 1, 1], [], []>} : vector<16x32xbf16>, vector<32x8xbf16>, vector<16x8xf32> -> vector<16x8xf32>
    %c0_73 = arith.constant 0 : index
    %c1_74 = arith.constant 1 : index
    %c0_75 = arith.constant 0 : index
    %c0_76 = arith.constant 0 : index
    %103 = vector.load %arg8[%c0_73, %c1_74, %c0_75, %c0_76] : memref<2x4x1x8xf32, #tpu.memory_space<vmem>>, vector<1x1x1x8xf32>
    %104 = vector.shape_cast %103 : vector<1x1x1x8xf32> to vector<1x8xf32>
    %105 = vector.broadcast %104 : vector<1x8xf32> to vector<16x8xf32>
    %106 = arith.addf %102, %105 : vector<16x8xf32>
    %107 = vector.shape_cast %92 : vector<16x8xf32> to vector<2x8x8xf32>
    %108 = arith.truncf %107 : vector<2x8x8xf32> to vector<2x8x8xbf16>
    %109 = vector.shape_cast %99 : vector<16x8xf32> to vector<2x8x8xf32>
    %110 = arith.truncf %109 : vector<2x8x8xf32> to vector<2x8x8xbf16>
    %111 = vector.shape_cast %106 : vector<16x8xf32> to vector<2x8x8xf32>
    %112 = arith.truncf %111 : vector<2x8x8xf32> to vector<2x8x8xbf16>
    "tpu.trace_start"() <{level = 10 : i32, message = "bqd,bkd->bqk"}> : () -> ()
    %cst_77 = arith.constant dense<0.000000e+00> : vector<2x8x8xf32>
    %113 = tpu.matmul %108, %110, %cst_77 {dimension_numbers = #tpu.dot_dimension_numbers<[2], [2], [1], [1], [0, 0, 0, 1, 1, 1], [0], [0]>} : vector<2x8x8xbf16>, vector<2x8x8xbf16>, vector<2x8x8xf32> -> vector<2x8x8xf32>
    "tpu.trace_stop"() : () -> ()
    %cst_78 = arith.constant 0.353553385 : f32
    %114 = vector.broadcast %cst_78 : f32 to vector<2x8x8xf32>
    %115 = arith.mulf %113, %114 : vector<2x8x8xf32>
    %116 = vector.broadcast %7 : vector<1x8x8xf32> to vector<2x8x8xf32>
    %117 = arith.addf %115, %116 : vector<2x8x8xf32>
    %cst_79 = arith.constant dense<0xFF800000> : vector<2x8xf32>
    %118 = vector.multi_reduction <maximumf>, %117, %cst_79 [2] : vector<2x8x8xf32> to vector<2x8xf32>
    %119 = vector.shape_cast %118 : vector<2x8xf32> to vector<2x8x1xf32>
    %120 = vector.broadcast %119 : vector<2x8x1xf32> to vector<2x8x8xf32>
    %121 = arith.subf %117, %120 : vector<2x8x8xf32>
    %122 = math.exp %121 : vector<2x8x8xf32>
    %cst_80 = arith.constant dense<0.000000e+00> : vector<2x8xf32>
    %123 = vector.multi_reduction <add>, %122, %cst_80 [2] : vector<2x8x8xf32> to vector<2x8xf32>
    %124 = vector.shape_cast %123 : vector<2x8xf32> to vector<2x8x1xf32>
    %125 = tpu.reciprocal %124 {approx = true} : vector<2x8x1xf32> -> vector<2x8x1xf32>
    %126 = vector.broadcast %125 : vector<2x8x1xf32> to vector<2x8x8xf32>
    %127 = arith.mulf %122, %126 : vector<2x8x8xf32>
    %128 = arith.truncf %127 : vector<2x8x8xf32> to vector<2x8x8xbf16>
    "tpu.trace_start"() <{level = 10 : i32, message = "bqk,bkd->bqd"}> : () -> ()
    %cst_81 = arith.constant dense<0.000000e+00> : vector<2x8x8xf32>
    %129 = tpu.matmul %128, %112, %cst_81 {dimension_numbers = #tpu.dot_dimension_numbers<[2], [1], [1], [2], [0, 0, 0, 1, 1, 2], [0], [0]>} : vector<2x8x8xbf16>, vector<2x8x8xbf16>, vector<2x8x8xf32> -> vector<2x8x8xf32>
    "tpu.trace_stop"() : () -> ()
    %130 = vector.shape_cast %129 : vector<2x8x8xf32> to vector<16x8xf32>
    %131 = arith.truncf %130 : vector<16x8xf32> to vector<16x8xbf16>
    %c0_82 = arith.constant 0 : index
    %c1_83 = arith.constant 1 : index
    %c0_84 = arith.constant 0 : index
    %c0_85 = arith.constant 0 : index
    %132 = vector.load %arg9[%c0_82, %c1_83, %c0_84, %c0_85] : memref<2x4x8x32xbf16, #tpu.memory_space<vmem>>, vector<1x1x8x32xbf16>
    %133 = vector.shape_cast %132 : vector<1x1x8x32xbf16> to vector<8x32xbf16>
    %cst_86 = arith.constant dense<0.000000e+00> : vector<16x32xf32>
    %134 = tpu.matmul %131, %133, %cst_86 {dimension_numbers = #tpu.dot_dimension_numbers<[1], [0], [0], [1], [0, 0, 1, 1], [], []>} : vector<16x8xbf16>, vector<8x32xbf16>, vector<16x32xf32> -> vector<16x32xf32>
    %135 = arith.addf %85, %134 : vector<16x32xf32>
    %c0_87 = arith.constant 0 : index
    %c2 = arith.constant 2 : index
    %c0_88 = arith.constant 0 : index
    %c0_89 = arith.constant 0 : index
    %136 = vector.load %arg3[%c0_87, %c2, %c0_88, %c0_89] : memref<2x4x32x8xbf16, #tpu.memory_space<vmem>>, vector<1x1x32x8xbf16>
    %137 = vector.shape_cast %136 : vector<1x1x32x8xbf16> to vector<32x8xbf16>
    %cst_90 = arith.constant dense<0.000000e+00> : vector<16x8xf32>
    %138 = tpu.matmul %34, %137, %cst_90 {dimension_numbers = #tpu.dot_dimension_numbers<[1], [0], [0], [1], [0, 0, 1, 1], [], []>} : vector<16x32xbf16>, vector<32x8xbf16>, vector<16x8xf32> -> vector<16x8xf32>
    %c0_91 = arith.constant 0 : index
    %c2_92 = arith.constant 2 : index
    %c0_93 = arith.constant 0 : index
    %c0_94 = arith.constant 0 : index
    %139 = vector.load %arg6[%c0_91, %c2_92, %c0_93, %c0_94] : memref<2x4x1x8xf32, #tpu.memory_space<vmem>>, vector<1x1x1x8xf32>
    %140 = vector.shape_cast %139 : vector<1x1x1x8xf32> to vector<1x8xf32>
    %141 = vector.broadcast %140 : vector<1x8xf32> to vector<16x8xf32>
    %142 = arith.addf %138, %141 : vector<16x8xf32>
    %c0_95 = arith.constant 0 : index
    %c2_96 = arith.constant 2 : index
    %c0_97 = arith.constant 0 : index
    %c0_98 = arith.constant 0 : index
    %143 = vector.load %arg4[%c0_95, %c2_96, %c0_97, %c0_98] : memref<2x4x32x8xbf16, #tpu.memory_space<vmem>>, vector<1x1x32x8xbf16>
    %144 = vector.shape_cast %143 : vector<1x1x32x8xbf16> to vector<32x8xbf16>
    %cst_99 = arith.constant dense<0.000000e+00> : vector<16x8xf32>
    %145 = tpu.matmul %34, %144, %cst_99 {dimension_numbers = #tpu.dot_dimension_numbers<[1], [0], [0], [1], [0, 0, 1, 1], [], []>} : vector<16x32xbf16>, vector<32x8xbf16>, vector<16x8xf32> -> vector<16x8xf32>
    %c0_100 = arith.constant 0 : index
    %c2_101 = arith.constant 2 : index
    %c0_102 = arith.constant 0 : index
    %c0_103 = arith.constant 0 : index
    %146 = vector.load %arg7[%c0_100, %c2_101, %c0_102, %c0_103] : memref<2x4x1x8xf32, #tpu.memory_space<vmem>>, vector<1x1x1x8xf32>
    %147 = vector.shape_cast %146 : vector<1x1x1x8xf32> to vector<1x8xf32>
    %148 = vector.broadcast %147 : vector<1x8xf32> to vector<16x8xf32>
    %149 = arith.addf %145, %148 : vector<16x8xf32>
    %c0_104 = arith.constant 0 : index
    %c2_105 = arith.constant 2 : index
    %c0_106 = arith.constant 0 : index
    %c0_107 = arith.constant 0 : index
    %150 = vector.load %arg5[%c0_104, %c2_105, %c0_106, %c0_107] : memref<2x4x32x8xbf16, #tpu.memory_space<vmem>>, vector<1x1x32x8xbf16>
    %151 = vector.shape_cast %150 : vector<1x1x32x8xbf16> to vector<32x8xbf16>
    %cst_108 = arith.constant dense<0.000000e+00> : vector<16x8xf32>
    %152 = tpu.matmul %34, %151, %cst_108 {dimension_numbers = #tpu.dot_dimension_numbers<[1], [0], [0], [1], [0, 0, 1, 1], [], []>} : vector<16x32xbf16>, vector<32x8xbf16>, vector<16x8xf32> -> vector<16x8xf32>
    %c0_109 = arith.constant 0 : index
    %c2_110 = arith.constant 2 : index
    %c0_111 = arith.constant 0 : index
    %c0_112 = arith.constant 0 : index
    %153 = vector.load %arg8[%c0_109, %c2_110, %c0_111, %c0_112] : memref<2x4x1x8xf32, #tpu.memory_space<vmem>>, vector<1x1x1x8xf32>
    %154 = vector.shape_cast %153 : vector<1x1x1x8xf32> to vector<1x8xf32>
    %155 = vector.broadcast %154 : vector<1x8xf32> to vector<16x8xf32>
    %156 = arith.addf %152, %155 : vector<16x8xf32>
    %157 = vector.shape_cast %142 : vector<16x8xf32> to vector<2x8x8xf32>
    %158 = arith.truncf %157 : vector<2x8x8xf32> to vector<2x8x8xbf16>
    %159 = vector.shape_cast %149 : vector<16x8xf32> to vector<2x8x8xf32>
    %160 = arith.truncf %159 : vector<2x8x8xf32> to vector<2x8x8xbf16>
    %161 = vector.shape_cast %156 : vector<16x8xf32> to vector<2x8x8xf32>
    %162 = arith.truncf %161 : vector<2x8x8xf32> to vector<2x8x8xbf16>
    "tpu.trace_start"() <{level = 10 : i32, message = "bqd,bkd->bqk"}> : () -> ()
    %cst_113 = arith.constant dense<0.000000e+00> : vector<2x8x8xf32>
    %163 = tpu.matmul %158, %160, %cst_113 {dimension_numbers = #tpu.dot_dimension_numbers<[2], [2], [1], [1], [0, 0, 0, 1, 1, 1], [0], [0]>} : vector<2x8x8xbf16>, vector<2x8x8xbf16>, vector<2x8x8xf32> -> vector<2x8x8xf32>
    "tpu.trace_stop"() : () -> ()
    %cst_114 = arith.constant 0.353553385 : f32
    %164 = vector.broadcast %cst_114 : f32 to vector<2x8x8xf32>
    %165 = arith.mulf %163, %164 : vector<2x8x8xf32>
    %166 = vector.broadcast %7 : vector<1x8x8xf32> to vector<2x8x8xf32>
    %167 = arith.addf %165, %166 : vector<2x8x8xf32>
    %cst_115 = arith.constant dense<0xFF800000> : vector<2x8xf32>
    %168 = vector.multi_reduction <maximumf>, %167, %cst_115 [2] : vector<2x8x8xf32> to vector<2x8xf32>
    %169 = vector.shape_cast %168 : vector<2x8xf32> to vector<2x8x1xf32>
    %170 = vector.broadcast %169 : vector<2x8x1xf32> to vector<2x8x8xf32>
    %171 = arith.subf %167, %170 : vector<2x8x8xf32>
    %172 = math.exp %171 : vector<2x8x8xf32>
    %cst_116 = arith.constant dense<0.000000e+00> : vector<2x8xf32>
    %173 = vector.multi_reduction <add>, %172, %cst_116 [2] : vector<2x8x8xf32> to vector<2x8xf32>
    %174 = vector.shape_cast %173 : vector<2x8xf32> to vector<2x8x1xf32>
    %175 = tpu.reciprocal %174 {approx = true} : vector<2x8x1xf32> -> vector<2x8x1xf32>
    %176 = vector.broadcast %175 : vector<2x8x1xf32> to vector<2x8x8xf32>
    %177 = arith.mulf %172, %176 : vector<2x8x8xf32>
    %178 = arith.truncf %177 : vector<2x8x8xf32> to vector<2x8x8xbf16>
    "tpu.trace_start"() <{level = 10 : i32, message = "bqk,bkd->bqd"}> : () -> ()
    %cst_117 = arith.constant dense<0.000000e+00> : vector<2x8x8xf32>
    %179 = tpu.matmul %178, %162, %cst_117 {dimension_numbers = #tpu.dot_dimension_numbers<[2], [1], [1], [2], [0, 0, 0, 1, 1, 2], [0], [0]>} : vector<2x8x8xbf16>, vector<2x8x8xbf16>, vector<2x8x8xf32> -> vector<2x8x8xf32>
    "tpu.trace_stop"() : () -> ()
    %180 = vector.shape_cast %179 : vector<2x8x8xf32> to vector<16x8xf32>
    %181 = arith.truncf %180 : vector<16x8xf32> to vector<16x8xbf16>
    %c0_118 = arith.constant 0 : index
    %c2_119 = arith.constant 2 : index
    %c0_120 = arith.constant 0 : index
    %c0_121 = arith.constant 0 : index
    %182 = vector.load %arg9[%c0_118, %c2_119, %c0_120, %c0_121] : memref<2x4x8x32xbf16, #tpu.memory_space<vmem>>, vector<1x1x8x32xbf16>
    %183 = vector.shape_cast %182 : vector<1x1x8x32xbf16> to vector<8x32xbf16>
    %cst_122 = arith.constant dense<0.000000e+00> : vector<16x32xf32>
    %184 = tpu.matmul %181, %183, %cst_122 {dimension_numbers = #tpu.dot_dimension_numbers<[1], [0], [0], [1], [0, 0, 1, 1], [], []>} : vector<16x8xbf16>, vector<8x32xbf16>, vector<16x32xf32> -> vector<16x32xf32>
    %185 = arith.addf %135, %184 : vector<16x32xf32>
    %c0_123 = arith.constant 0 : index
    %c3 = arith.constant 3 : index
    %c0_124 = arith.constant 0 : index
    %c0_125 = arith.constant 0 : index
    %186 = vector.load %arg3[%c0_123, %c3, %c0_124, %c0_125] : memref<2x4x32x8xbf16, #tpu.memory_space<vmem>>, vector<1x1x32x8xbf16>
    %187 = vector.shape_cast %186 : vector<1x1x32x8xbf16> to vector<32x8xbf16>
    %cst_126 = arith.constant dense<0.000000e+00> : vector<16x8xf32>
    %188 = tpu.matmul %34, %187, %cst_126 {dimension_numbers = #tpu.dot_dimension_numbers<[1], [0], [0], [1], [0, 0, 1, 1], [], []>} : vector<16x32xbf16>, vector<32x8xbf16>, vector<16x8xf32> -> vector<16x8xf32>
    %c0_127 = arith.constant 0 : index
    %c3_128 = arith.constant 3 : index
    %c0_129 = arith.constant 0 : index
    %c0_130 = arith.constant 0 : index
    %189 = vector.load %arg6[%c0_127, %c3_128, %c0_129, %c0_130] : memref<2x4x1x8xf32, #tpu.memory_space<vmem>>, vector<1x1x1x8xf32>
    %190 = vector.shape_cast %189 : vector<1x1x1x8xf32> to vector<1x8xf32>
    %191 = vector.broadcast %190 : vector<1x8xf32> to vector<16x8xf32>
    %192 = arith.addf %188, %191 : vector<16x8xf32>
    %c0_131 = arith.constant 0 : index
    %c3_132 = arith.constant 3 : index
    %c0_133 = arith.constant 0 : index
    %c0_134 = arith.constant 0 : index
    %193 = vector.load %arg4[%c0_131, %c3_132, %c0_133, %c0_134] : memref<2x4x32x8xbf16, #tpu.memory_space<vmem>>, vector<1x1x32x8xbf16>
    %194 = vector.shape_cast %193 : vector<1x1x32x8xbf16> to vector<32x8xbf16>
    %cst_135 = arith.constant dense<0.000000e+00> : vector<16x8xf32>
    %195 = tpu.matmul %34, %194, %cst_135 {dimension_numbers = #tpu.dot_dimension_numbers<[1], [0], [0], [1], [0, 0, 1, 1], [], []>} : vector<16x32xbf16>, vector<32x8xbf16>, vector<16x8xf32> -> vector<16x8xf32>
    %c0_136 = arith.constant 0 : index
    %c3_137 = arith.constant 3 : index
    %c0_138 = arith.constant 0 : index
    %c0_139 = arith.constant 0 : index
    %196 = vector.load %arg7[%c0_136, %c3_137, %c0_138, %c0_139] : memref<2x4x1x8xf32, #tpu.memory_space<vmem>>, vector<1x1x1x8xf32>
    %197 = vector.shape_cast %196 : vector<1x1x1x8xf32> to vector<1x8xf32>
    %198 = vector.broadcast %197 : vector<1x8xf32> to vector<16x8xf32>
    %199 = arith.addf %195, %198 : vector<16x8xf32>
    %c0_140 = arith.constant 0 : index
    %c3_141 = arith.constant 3 : index
    %c0_142 = arith.constant 0 : index
    %c0_143 = arith.constant 0 : index
    %200 = vector.load %arg5[%c0_140, %c3_141, %c0_142, %c0_143] : memref<2x4x32x8xbf16, #tpu.memory_space<vmem>>, vector<1x1x32x8xbf16>
    %201 = vector.shape_cast %200 : vector<1x1x32x8xbf16> to vector<32x8xbf16>
    %cst_144 = arith.constant dense<0.000000e+00> : vector<16x8xf32>
    %202 = tpu.matmul %34, %201, %cst_144 {dimension_numbers = #tpu.dot_dimension_numbers<[1], [0], [0], [1], [0, 0, 1, 1], [], []>} : vector<16x32xbf16>, vector<32x8xbf16>, vector<16x8xf32> -> vector<16x8xf32>
    %c0_145 = arith.constant 0 : index
    %c3_146 = arith.constant 3 : index
    %c0_147 = arith.constant 0 : index
    %c0_148 = arith.constant 0 : index
    %203 = vector.load %arg8[%c0_145, %c3_146, %c0_147, %c0_148] : memref<2x4x1x8xf32, #tpu.memory_space<vmem>>, vector<1x1x1x8xf32>
    %204 = vector.shape_cast %203 : vector<1x1x1x8xf32> to vector<1x8xf32>
    %205 = vector.broadcast %204 : vector<1x8xf32> to vector<16x8xf32>
    %206 = arith.addf %202, %205 : vector<16x8xf32>
    %207 = vector.shape_cast %192 : vector<16x8xf32> to vector<2x8x8xf32>
    %208 = arith.truncf %207 : vector<2x8x8xf32> to vector<2x8x8xbf16>
    %209 = vector.shape_cast %199 : vector<16x8xf32> to vector<2x8x8xf32>
    %210 = arith.truncf %209 : vector<2x8x8xf32> to vector<2x8x8xbf16>
    %211 = vector.shape_cast %206 : vector<16x8xf32> to vector<2x8x8xf32>
    %212 = arith.truncf %211 : vector<2x8x8xf32> to vector<2x8x8xbf16>
    "tpu.trace_start"() <{level = 10 : i32, message = "bqd,bkd->bqk"}> : () -> ()
    %cst_149 = arith.constant dense<0.000000e+00> : vector<2x8x8xf32>
    %213 = tpu.matmul %208, %210, %cst_149 {dimension_numbers = #tpu.dot_dimension_numbers<[2], [2], [1], [1], [0, 0, 0, 1, 1, 1], [0], [0]>} : vector<2x8x8xbf16>, vector<2x8x8xbf16>, vector<2x8x8xf32> -> vector<2x8x8xf32>
    "tpu.trace_stop"() : () -> ()
    %cst_150 = arith.constant 0.353553385 : f32
    %214 = vector.broadcast %cst_150 : f32 to vector<2x8x8xf32>
    %215 = arith.mulf %213, %214 : vector<2x8x8xf32>
    %216 = vector.broadcast %7 : vector<1x8x8xf32> to vector<2x8x8xf32>
    %217 = arith.addf %215, %216 : vector<2x8x8xf32>
    %cst_151 = arith.constant dense<0xFF800000> : vector<2x8xf32>
    %218 = vector.multi_reduction <maximumf>, %217, %cst_151 [2] : vector<2x8x8xf32> to vector<2x8xf32>
    %219 = vector.shape_cast %218 : vector<2x8xf32> to vector<2x8x1xf32>
    %220 = vector.broadcast %219 : vector<2x8x1xf32> to vector<2x8x8xf32>
    %221 = arith.subf %217, %220 : vector<2x8x8xf32>
    %222 = math.exp %221 : vector<2x8x8xf32>
    %cst_152 = arith.constant dense<0.000000e+00> : vector<2x8xf32>
    %223 = vector.multi_reduction <add>, %222, %cst_152 [2] : vector<2x8x8xf32> to vector<2x8xf32>
    %224 = vector.shape_cast %223 : vector<2x8xf32> to vector<2x8x1xf32>
    %225 = tpu.reciprocal %224 {approx = true} : vector<2x8x1xf32> -> vector<2x8x1xf32>
    %226 = vector.broadcast %225 : vector<2x8x1xf32> to vector<2x8x8xf32>
    %227 = arith.mulf %222, %226 : vector<2x8x8xf32>
    %228 = arith.truncf %227 : vector<2x8x8xf32> to vector<2x8x8xbf16>
    "tpu.trace_start"() <{level = 10 : i32, message = "bqk,bkd->bqd"}> : () -> ()
    %cst_153 = arith.constant dense<0.000000e+00> : vector<2x8x8xf32>
    %229 = tpu.matmul %228, %212, %cst_153 {dimension_numbers = #tpu.dot_dimension_numbers<[2], [1], [1], [2], [0, 0, 0, 1, 1, 2], [0], [0]>} : vector<2x8x8xbf16>, vector<2x8x8xbf16>, vector<2x8x8xf32> -> vector<2x8x8xf32>
    "tpu.trace_stop"() : () -> ()
    %230 = vector.shape_cast %229 : vector<2x8x8xf32> to vector<16x8xf32>
    %231 = arith.truncf %230 : vector<16x8xf32> to vector<16x8xbf16>
    %c0_154 = arith.constant 0 : index
    %c3_155 = arith.constant 3 : index
    %c0_156 = arith.constant 0 : index
    %c0_157 = arith.constant 0 : index
    %232 = vector.load %arg9[%c0_154, %c3_155, %c0_156, %c0_157] : memref<2x4x8x32xbf16, #tpu.memory_space<vmem>>, vector<1x1x8x32xbf16>
    %233 = vector.shape_cast %232 : vector<1x1x8x32xbf16> to vector<8x32xbf16>
    %cst_158 = arith.constant dense<0.000000e+00> : vector<16x32xf32>
    %234 = tpu.matmul %231, %233, %cst_158 {dimension_numbers = #tpu.dot_dimension_numbers<[1], [0], [0], [1], [0, 0, 1, 1], [], []>} : vector<16x8xbf16>, vector<8x32xbf16>, vector<16x32xf32> -> vector<16x32xf32>
    %235 = arith.addf %185, %234 : vector<16x32xf32>
    %236 = arith.addf %0, %235 : vector<16x32xf32>
    %c0_159 = arith.constant 0 : index
    %c0_160 = arith.constant 0 : index
    %c0_161 = arith.constant 0 : index
    %237 = vector.load %arg10[%c0_159, %c0_160, %c0_161] : memref<2x1x32xf32, #tpu.memory_space<vmem>>, vector<1x1x32xf32>
    %238 = vector.shape_cast %237 : vector<1x1x32xf32> to vector<1x32xf32>
    %239 = vector.broadcast %238 : vector<1x32xf32> to vector<16x32xf32>
    %240 = arith.addf %236, %239 : vector<16x32xf32>
    %c0_162 = arith.constant 0 : index
    %c0_163 = arith.constant 0 : index
    %c0_164 = arith.constant 0 : index
    %241 = vector.load %arg11[%c0_162, %c0_163, %c0_164] : memref<2x1x32xf32, #tpu.memory_space<vmem>>, vector<1x1x32xf32>
    %242 = vector.shape_cast %241 : vector<1x1x32xf32> to vector<1x32xf32>
    %c0_165 = arith.constant 0 : index
    %c0_166 = arith.constant 0 : index
    %c0_167 = arith.constant 0 : index
    %243 = vector.load %arg12[%c0_165, %c0_166, %c0_167] : memref<2x1x32xf32, #tpu.memory_space<vmem>>, vector<1x1x32xf32>
    %244 = vector.shape_cast %243 : vector<1x1x32xf32> to vector<1x32xf32>
    %cst_168 = arith.constant dense<0.000000e+00> : vector<16xf32>
    %245 = vector.multi_reduction <add>, %240, %cst_168 [1] : vector<16x32xf32> to vector<16xf32>
    %246 = vector.shape_cast %245 : vector<16xf32> to vector<16x1xf32>
    %cst_169 = arith.constant 3.200000e+01 : f32
    %247 = vector.broadcast %cst_169 : f32 to vector<16x1xf32>
    %248 = arith.divf %246, %247 : vector<16x1xf32>
    %249 = vector.broadcast %248 : vector<16x1xf32> to vector<16x32xf32>
    %250 = arith.subf %240, %249 : vector<16x32xf32>
    %251 = arith.mulf %250, %250 : vector<16x32xf32>
    %cst_170 = arith.constant dense<0.000000e+00> : vector<16xf32>
    %252 = vector.multi_reduction <add>, %251, %cst_170 [1] : vector<16x32xf32> to vector<16xf32>
    %253 = vector.shape_cast %252 : vector<16xf32> to vector<16x1xf32>
    %cst_171 = arith.constant 3.200000e+01 : f32
    %254 = vector.broadcast %cst_171 : f32 to vector<16x1xf32>
    %255 = arith.divf %253, %254 : vector<16x1xf32>
    %256 = vector.broadcast %248 : vector<16x1xf32> to vector<16x32xf32>
    %257 = arith.subf %240, %256 : vector<16x32xf32>
    %cst_172 = arith.constant 9.99999974E-6 : f32
    %258 = vector.broadcast %cst_172 : f32 to vector<16x1xf32>
    %259 = arith.addf %255, %258 : vector<16x1xf32>
    %260 = math.rsqrt %259 : vector<16x1xf32>
    %261 = vector.broadcast %260 : vector<16x1xf32> to vector<16x32xf32>
    %262 = arith.mulf %257, %261 : vector<16x32xf32>
    %263 = vector.broadcast %242 : vector<1x32xf32> to vector<16x32xf32>
    %264 = arith.mulf %262, %263 : vector<16x32xf32>
    %265 = vector.broadcast %244 : vector<1x32xf32> to vector<16x32xf32>
    %266 = arith.addf %264, %265 : vector<16x32xf32>
    %267 = arith.truncf %266 : vector<16x32xf32> to vector<16x32xbf16>
    %c0_173 = arith.constant 0 : index
    %c0_174 = arith.constant 0 : index
    %c0_175 = arith.constant 0 : index
    %268 = vector.load %arg13[%c0_173, %c0_174, %c0_175] : memref<2x32x128xbf16, #tpu.memory_space<vmem>>, vector<1x32x128xbf16>
    %269 = vector.shape_cast %268 : vector<1x32x128xbf16> to vector<32x128xbf16>
    %cst_176 = arith.constant dense<0.000000e+00> : vector<16x128xf32>
    %270 = tpu.matmul %267, %269, %cst_176 {dimension_numbers = #tpu.dot_dimension_numbers<[1], [0], [0], [1], [0, 0, 1, 1], [], []>} : vector<16x32xbf16>, vector<32x128xbf16>, vector<16x128xf32> -> vector<16x128xf32>
    %c0_177 = arith.constant 0 : index
    %c0_178 = arith.constant 0 : index
    %c0_179 = arith.constant 0 : index
    %271 = vector.load %arg14[%c0_177, %c0_178, %c0_179] : memref<2x1x128xf32, #tpu.memory_space<vmem>>, vector<1x1x128xf32>
    %272 = vector.shape_cast %271 : vector<1x1x128xf32> to vector<1x128xf32>
    %273 = vector.broadcast %272 : vector<1x128xf32> to vector<16x128xf32>
    %274 = arith.addf %270, %273 : vector<16x128xf32>
    %cst_180 = arith.constant 5.000000e-01 : f32
    %275 = vector.broadcast %cst_180 : f32 to vector<16x128xf32>
    %276 = arith.mulf %275, %274 : vector<16x128xf32>
    %cst_181 = arith.constant 0.707106769 : f32
    %277 = vector.broadcast %cst_181 : f32 to vector<16x128xf32>
    %278 = arith.mulf %274, %277 : vector<16x128xf32>
    %279 = math.erf %278 : vector<16x128xf32>
    %cst_182 = arith.constant 1.000000e+00 : f32
    %280 = vector.broadcast %cst_182 : f32 to vector<16x128xf32>
    %281 = arith.addf %280, %279 : vector<16x128xf32>
    %282 = arith.mulf %276, %281 : vector<16x128xf32>
    %283 = arith.truncf %282 : vector<16x128xf32> to vector<16x128xbf16>
    %c0_183 = arith.constant 0 : index
    %c0_184 = arith.constant 0 : index
    %c0_185 = arith.constant 0 : index
    %284 = vector.load %arg15[%c0_183, %c0_184, %c0_185] : memref<2x128x32xbf16, #tpu.memory_space<vmem>>, vector<1x128x32xbf16>
    %285 = vector.shape_cast %284 : vector<1x128x32xbf16> to vector<128x32xbf16>
    %cst_186 = arith.constant dense<0.000000e+00> : vector<16x32xf32>
    %286 = tpu.matmul %283, %285, %cst_186 {dimension_numbers = #tpu.dot_dimension_numbers<[1], [0], [0], [1], [0, 0, 1, 1], [], []>} : vector<16x128xbf16>, vector<128x32xbf16>, vector<16x32xf32> -> vector<16x32xf32>
    %c0_187 = arith.constant 0 : index
    %c0_188 = arith.constant 0 : index
    %c0_189 = arith.constant 0 : index
    %287 = vector.load %arg16[%c0_187, %c0_188, %c0_189] : memref<2x1x32xf32, #tpu.memory_space<vmem>>, vector<1x1x32xf32>
    %288 = vector.shape_cast %287 : vector<1x1x32xf32> to vector<1x32xf32>
    %289 = vector.broadcast %288 : vector<1x32xf32> to vector<16x32xf32>
    %290 = arith.addf %286, %289 : vector<16x32xf32>
    %291 = arith.addf %240, %290 : vector<16x32xf32>
    %c1_190 = arith.constant 1 : index
    %c0_191 = arith.constant 0 : index
    %c0_192 = arith.constant 0 : index
    %292 = vector.load %arg1[%c1_190, %c0_191, %c0_192] : memref<2x1x32xf32, #tpu.memory_space<vmem>>, vector<1x1x32xf32>
    %293 = vector.shape_cast %292 : vector<1x1x32xf32> to vector<1x32xf32>
    %c1_193 = arith.constant 1 : index
    %c0_194 = arith.constant 0 : index
    %c0_195 = arith.constant 0 : index
    %294 = vector.load %arg2[%c1_193, %c0_194, %c0_195] : memref<2x1x32xf32, #tpu.memory_space<vmem>>, vector<1x1x32xf32>
    %295 = vector.shape_cast %294 : vector<1x1x32xf32> to vector<1x32xf32>
    %cst_196 = arith.constant dense<0.000000e+00> : vector<16xf32>
    %296 = vector.multi_reduction <add>, %291, %cst_196 [1] : vector<16x32xf32> to vector<16xf32>
    %297 = vector.shape_cast %296 : vector<16xf32> to vector<16x1xf32>
    %cst_197 = arith.constant 3.200000e+01 : f32
    %298 = vector.broadcast %cst_197 : f32 to vector<16x1xf32>
    %299 = arith.divf %297, %298 : vector<16x1xf32>
    %300 = vector.broadcast %299 : vector<16x1xf32> to vector<16x32xf32>
    %301 = arith.subf %291, %300 : vector<16x32xf32>
    %302 = arith.mulf %301, %301 : vector<16x32xf32>
    %cst_198 = arith.constant dense<0.000000e+00> : vector<16xf32>
    %303 = vector.multi_reduction <add>, %302, %cst_198 [1] : vector<16x32xf32> to vector<16xf32>
    %304 = vector.shape_cast %303 : vector<16xf32> to vector<16x1xf32>
    %cst_199 = arith.constant 3.200000e+01 : f32
    %305 = vector.broadcast %cst_199 : f32 to vector<16x1xf32>
    %306 = arith.divf %304, %305 : vector<16x1xf32>
    %307 = vector.broadcast %299 : vector<16x1xf32> to vector<16x32xf32>
    %308 = arith.subf %291, %307 : vector<16x32xf32>
    %cst_200 = arith.constant 9.99999974E-6 : f32
    %309 = vector.broadcast %cst_200 : f32 to vector<16x1xf32>
    %310 = arith.addf %306, %309 : vector<16x1xf32>
    %311 = math.rsqrt %310 : vector<16x1xf32>
    %312 = vector.broadcast %311 : vector<16x1xf32> to vector<16x32xf32>
    %313 = arith.mulf %308, %312 : vector<16x32xf32>
    %314 = vector.broadcast %293 : vector<1x32xf32> to vector<16x32xf32>
    %315 = arith.mulf %313, %314 : vector<16x32xf32>
    %316 = vector.broadcast %295 : vector<1x32xf32> to vector<16x32xf32>
    %317 = arith.addf %315, %316 : vector<16x32xf32>
    %318 = arith.truncf %317 : vector<16x32xf32> to vector<16x32xbf16>
    %cst_201 = arith.constant 0.000000e+00 : f32
    %319 = vector.broadcast %cst_201 : f32 to vector<16x32xf32>
    %c1_202 = arith.constant 1 : index
    %c0_203 = arith.constant 0 : index
    %c0_204 = arith.constant 0 : index
    %c0_205 = arith.constant 0 : index
    %320 = vector.load %arg3[%c1_202, %c0_203, %c0_204, %c0_205] : memref<2x4x32x8xbf16, #tpu.memory_space<vmem>>, vector<1x1x32x8xbf16>
    %321 = vector.shape_cast %320 : vector<1x1x32x8xbf16> to vector<32x8xbf16>
    %cst_206 = arith.constant dense<0.000000e+00> : vector<16x8xf32>
    %322 = tpu.matmul %318, %321, %cst_206 {dimension_numbers = #tpu.dot_dimension_numbers<[1], [0], [0], [1], [0, 0, 1, 1], [], []>} : vector<16x32xbf16>, vector<32x8xbf16>, vector<16x8xf32> -> vector<16x8xf32>
    %c1_207 = arith.constant 1 : index
    %c0_208 = arith.constant 0 : index
    %c0_209 = arith.constant 0 : index
    %c0_210 = arith.constant 0 : index
    %323 = vector.load %arg6[%c1_207, %c0_208, %c0_209, %c0_210] : memref<2x4x1x8xf32, #tpu.memory_space<vmem>>, vector<1x1x1x8xf32>
    %324 = vector.shape_cast %323 : vector<1x1x1x8xf32> to vector<1x8xf32>
    %325 = vector.broadcast %324 : vector<1x8xf32> to vector<16x8xf32>
    %326 = arith.addf %322, %325 : vector<16x8xf32>
    %c1_211 = arith.constant 1 : index
    %c0_212 = arith.constant 0 : index
    %c0_213 = arith.constant 0 : index
    %c0_214 = arith.constant 0 : index
    %327 = vector.load %arg4[%c1_211, %c0_212, %c0_213, %c0_214] : memref<2x4x32x8xbf16, #tpu.memory_space<vmem>>, vector<1x1x32x8xbf16>
    %328 = vector.shape_cast %327 : vector<1x1x32x8xbf16> to vector<32x8xbf16>
    %cst_215 = arith.constant dense<0.000000e+00> : vector<16x8xf32>
    %329 = tpu.matmul %318, %328, %cst_215 {dimension_numbers = #tpu.dot_dimension_numbers<[1], [0], [0], [1], [0, 0, 1, 1], [], []>} : vector<16x32xbf16>, vector<32x8xbf16>, vector<16x8xf32> -> vector<16x8xf32>
    %c1_216 = arith.constant 1 : index
    %c0_217 = arith.constant 0 : index
    %c0_218 = arith.constant 0 : index
    %c0_219 = arith.constant 0 : index
    %330 = vector.load %arg7[%c1_216, %c0_217, %c0_218, %c0_219] : memref<2x4x1x8xf32, #tpu.memory_space<vmem>>, vector<1x1x1x8xf32>
    %331 = vector.shape_cast %330 : vector<1x1x1x8xf32> to vector<1x8xf32>
    %332 = vector.broadcast %331 : vector<1x8xf32> to vector<16x8xf32>
    %333 = arith.addf %329, %332 : vector<16x8xf32>
    %c1_220 = arith.constant 1 : index
    %c0_221 = arith.constant 0 : index
    %c0_222 = arith.constant 0 : index
    %c0_223 = arith.constant 0 : index
    %334 = vector.load %arg5[%c1_220, %c0_221, %c0_222, %c0_223] : memref<2x4x32x8xbf16, #tpu.memory_space<vmem>>, vector<1x1x32x8xbf16>
    %335 = vector.shape_cast %334 : vector<1x1x32x8xbf16> to vector<32x8xbf16>
    %cst_224 = arith.constant dense<0.000000e+00> : vector<16x8xf32>
    %336 = tpu.matmul %318, %335, %cst_224 {dimension_numbers = #tpu.dot_dimension_numbers<[1], [0], [0], [1], [0, 0, 1, 1], [], []>} : vector<16x32xbf16>, vector<32x8xbf16>, vector<16x8xf32> -> vector<16x8xf32>
    %c1_225 = arith.constant 1 : index
    %c0_226 = arith.constant 0 : index
    %c0_227 = arith.constant 0 : index
    %c0_228 = arith.constant 0 : index
    %337 = vector.load %arg8[%c1_225, %c0_226, %c0_227, %c0_228] : memref<2x4x1x8xf32, #tpu.memory_space<vmem>>, vector<1x1x1x8xf32>
    %338 = vector.shape_cast %337 : vector<1x1x1x8xf32> to vector<1x8xf32>
    %339 = vector.broadcast %338 : vector<1x8xf32> to vector<16x8xf32>
    %340 = arith.addf %336, %339 : vector<16x8xf32>
    %341 = vector.shape_cast %326 : vector<16x8xf32> to vector<2x8x8xf32>
    %342 = arith.truncf %341 : vector<2x8x8xf32> to vector<2x8x8xbf16>
    %343 = vector.shape_cast %333 : vector<16x8xf32> to vector<2x8x8xf32>
    %344 = arith.truncf %343 : vector<2x8x8xf32> to vector<2x8x8xbf16>
    %345 = vector.shape_cast %340 : vector<16x8xf32> to vector<2x8x8xf32>
    %346 = arith.truncf %345 : vector<2x8x8xf32> to vector<2x8x8xbf16>
    "tpu.trace_start"() <{level = 10 : i32, message = "bqd,bkd->bqk"}> : () -> ()
    %cst_229 = arith.constant dense<0.000000e+00> : vector<2x8x8xf32>
    %347 = tpu.matmul %342, %344, %cst_229 {dimension_numbers = #tpu.dot_dimension_numbers<[2], [2], [1], [1], [0, 0, 0, 1, 1, 1], [0], [0]>} : vector<2x8x8xbf16>, vector<2x8x8xbf16>, vector<2x8x8xf32> -> vector<2x8x8xf32>
    "tpu.trace_stop"() : () -> ()
    %cst_230 = arith.constant 0.353553385 : f32
    %348 = vector.broadcast %cst_230 : f32 to vector<2x8x8xf32>
    %349 = arith.mulf %347, %348 : vector<2x8x8xf32>
    %350 = vector.broadcast %7 : vector<1x8x8xf32> to vector<2x8x8xf32>
    %351 = arith.addf %349, %350 : vector<2x8x8xf32>
    %cst_231 = arith.constant dense<0xFF800000> : vector<2x8xf32>
    %352 = vector.multi_reduction <maximumf>, %351, %cst_231 [2] : vector<2x8x8xf32> to vector<2x8xf32>
    %353 = vector.shape_cast %352 : vector<2x8xf32> to vector<2x8x1xf32>
    %354 = vector.broadcast %353 : vector<2x8x1xf32> to vector<2x8x8xf32>
    %355 = arith.subf %351, %354 : vector<2x8x8xf32>
    %356 = math.exp %355 : vector<2x8x8xf32>
    %cst_232 = arith.constant dense<0.000000e+00> : vector<2x8xf32>
    %357 = vector.multi_reduction <add>, %356, %cst_232 [2] : vector<2x8x8xf32> to vector<2x8xf32>
    %358 = vector.shape_cast %357 : vector<2x8xf32> to vector<2x8x1xf32>
    %359 = tpu.reciprocal %358 {approx = true} : vector<2x8x1xf32> -> vector<2x8x1xf32>
    %360 = vector.broadcast %359 : vector<2x8x1xf32> to vector<2x8x8xf32>
    %361 = arith.mulf %356, %360 : vector<2x8x8xf32>
    %362 = arith.truncf %361 : vector<2x8x8xf32> to vector<2x8x8xbf16>
    "tpu.trace_start"() <{level = 10 : i32, message = "bqk,bkd->bqd"}> : () -> ()
    %cst_233 = arith.constant dense<0.000000e+00> : vector<2x8x8xf32>
    %363 = tpu.matmul %362, %346, %cst_233 {dimension_numbers = #tpu.dot_dimension_numbers<[2], [1], [1], [2], [0, 0, 0, 1, 1, 2], [0], [0]>} : vector<2x8x8xbf16>, vector<2x8x8xbf16>, vector<2x8x8xf32> -> vector<2x8x8xf32>
    "tpu.trace_stop"() : () -> ()
    %364 = vector.shape_cast %363 : vector<2x8x8xf32> to vector<16x8xf32>
    %365 = arith.truncf %364 : vector<16x8xf32> to vector<16x8xbf16>
    %c1_234 = arith.constant 1 : index
    %c0_235 = arith.constant 0 : index
    %c0_236 = arith.constant 0 : index
    %c0_237 = arith.constant 0 : index
    %366 = vector.load %arg9[%c1_234, %c0_235, %c0_236, %c0_237] : memref<2x4x8x32xbf16, #tpu.memory_space<vmem>>, vector<1x1x8x32xbf16>
    %367 = vector.shape_cast %366 : vector<1x1x8x32xbf16> to vector<8x32xbf16>
    %cst_238 = arith.constant dense<0.000000e+00> : vector<16x32xf32>
    %368 = tpu.matmul %365, %367, %cst_238 {dimension_numbers = #tpu.dot_dimension_numbers<[1], [0], [0], [1], [0, 0, 1, 1], [], []>} : vector<16x8xbf16>, vector<8x32xbf16>, vector<16x32xf32> -> vector<16x32xf32>
    %369 = arith.addf %319, %368 : vector<16x32xf32>
    %c1_239 = arith.constant 1 : index
    %c1_240 = arith.constant 1 : index
    %c0_241 = arith.constant 0 : index
    %c0_242 = arith.constant 0 : index
    %370 = vector.load %arg3[%c1_239, %c1_240, %c0_241, %c0_242] : memref<2x4x32x8xbf16, #tpu.memory_space<vmem>>, vector<1x1x32x8xbf16>
    %371 = vector.shape_cast %370 : vector<1x1x32x8xbf16> to vector<32x8xbf16>
    %cst_243 = arith.constant dense<0.000000e+00> : vector<16x8xf32>
    %372 = tpu.matmul %318, %371, %cst_243 {dimension_numbers = #tpu.dot_dimension_numbers<[1], [0], [0], [1], [0, 0, 1, 1], [], []>} : vector<16x32xbf16>, vector<32x8xbf16>, vector<16x8xf32> -> vector<16x8xf32>
    %c1_244 = arith.constant 1 : index
    %c1_245 = arith.constant 1 : index
    %c0_246 = arith.constant 0 : index
    %c0_247 = arith.constant 0 : index
    %373 = vector.load %arg6[%c1_244, %c1_245, %c0_246, %c0_247] : memref<2x4x1x8xf32, #tpu.memory_space<vmem>>, vector<1x1x1x8xf32>
    %374 = vector.shape_cast %373 : vector<1x1x1x8xf32> to vector<1x8xf32>
    %375 = vector.broadcast %374 : vector<1x8xf32> to vector<16x8xf32>
    %376 = arith.addf %372, %375 : vector<16x8xf32>
    %c1_248 = arith.constant 1 : index
    %c1_249 = arith.constant 1 : index
    %c0_250 = arith.constant 0 : index
    %c0_251 = arith.constant 0 : index
    %377 = vector.load %arg4[%c1_248, %c1_249, %c0_250, %c0_251] : memref<2x4x32x8xbf16, #tpu.memory_space<vmem>>, vector<1x1x32x8xbf16>
    %378 = vector.shape_cast %377 : vector<1x1x32x8xbf16> to vector<32x8xbf16>
    %cst_252 = arith.constant dense<0.000000e+00> : vector<16x8xf32>
    %379 = tpu.matmul %318, %378, %cst_252 {dimension_numbers = #tpu.dot_dimension_numbers<[1], [0], [0], [1], [0, 0, 1, 1], [], []>} : vector<16x32xbf16>, vector<32x8xbf16>, vector<16x8xf32> -> vector<16x8xf32>
    %c1_253 = arith.constant 1 : index
    %c1_254 = arith.constant 1 : index
    %c0_255 = arith.constant 0 : index
    %c0_256 = arith.constant 0 : index
    %380 = vector.load %arg7[%c1_253, %c1_254, %c0_255, %c0_256] : memref<2x4x1x8xf32, #tpu.memory_space<vmem>>, vector<1x1x1x8xf32>
    %381 = vector.shape_cast %380 : vector<1x1x1x8xf32> to vector<1x8xf32>
    %382 = vector.broadcast %381 : vector<1x8xf32> to vector<16x8xf32>
    %383 = arith.addf %379, %382 : vector<16x8xf32>
    %c1_257 = arith.constant 1 : index
    %c1_258 = arith.constant 1 : index
    %c0_259 = arith.constant 0 : index
    %c0_260 = arith.constant 0 : index
    %384 = vector.load %arg5[%c1_257, %c1_258, %c0_259, %c0_260] : memref<2x4x32x8xbf16, #tpu.memory_space<vmem>>, vector<1x1x32x8xbf16>
    %385 = vector.shape_cast %384 : vector<1x1x32x8xbf16> to vector<32x8xbf16>
    %cst_261 = arith.constant dense<0.000000e+00> : vector<16x8xf32>
    %386 = tpu.matmul %318, %385, %cst_261 {dimension_numbers = #tpu.dot_dimension_numbers<[1], [0], [0], [1], [0, 0, 1, 1], [], []>} : vector<16x32xbf16>, vector<32x8xbf16>, vector<16x8xf32> -> vector<16x8xf32>
    %c1_262 = arith.constant 1 : index
    %c1_263 = arith.constant 1 : index
    %c0_264 = arith.constant 0 : index
    %c0_265 = arith.constant 0 : index
    %387 = vector.load %arg8[%c1_262, %c1_263, %c0_264, %c0_265] : memref<2x4x1x8xf32, #tpu.memory_space<vmem>>, vector<1x1x1x8xf32>
    %388 = vector.shape_cast %387 : vector<1x1x1x8xf32> to vector<1x8xf32>
    %389 = vector.broadcast %388 : vector<1x8xf32> to vector<16x8xf32>
    %390 = arith.addf %386, %389 : vector<16x8xf32>
    %391 = vector.shape_cast %376 : vector<16x8xf32> to vector<2x8x8xf32>
    %392 = arith.truncf %391 : vector<2x8x8xf32> to vector<2x8x8xbf16>
    %393 = vector.shape_cast %383 : vector<16x8xf32> to vector<2x8x8xf32>
    %394 = arith.truncf %393 : vector<2x8x8xf32> to vector<2x8x8xbf16>
    %395 = vector.shape_cast %390 : vector<16x8xf32> to vector<2x8x8xf32>
    %396 = arith.truncf %395 : vector<2x8x8xf32> to vector<2x8x8xbf16>
    "tpu.trace_start"() <{level = 10 : i32, message = "bqd,bkd->bqk"}> : () -> ()
    %cst_266 = arith.constant dense<0.000000e+00> : vector<2x8x8xf32>
    %397 = tpu.matmul %392, %394, %cst_266 {dimension_numbers = #tpu.dot_dimension_numbers<[2], [2], [1], [1], [0, 0, 0, 1, 1, 1], [0], [0]>} : vector<2x8x8xbf16>, vector<2x8x8xbf16>, vector<2x8x8xf32> -> vector<2x8x8xf32>
    "tpu.trace_stop"() : () -> ()
    %cst_267 = arith.constant 0.353553385 : f32
    %398 = vector.broadcast %cst_267 : f32 to vector<2x8x8xf32>
    %399 = arith.mulf %397, %398 : vector<2x8x8xf32>
    %400 = vector.broadcast %7 : vector<1x8x8xf32> to vector<2x8x8xf32>
    %401 = arith.addf %399, %400 : vector<2x8x8xf32>
    %cst_268 = arith.constant dense<0xFF800000> : vector<2x8xf32>
    %402 = vector.multi_reduction <maximumf>, %401, %cst_268 [2] : vector<2x8x8xf32> to vector<2x8xf32>
    %403 = vector.shape_cast %402 : vector<2x8xf32> to vector<2x8x1xf32>
    %404 = vector.broadcast %403 : vector<2x8x1xf32> to vector<2x8x8xf32>
    %405 = arith.subf %401, %404 : vector<2x8x8xf32>
    %406 = math.exp %405 : vector<2x8x8xf32>
    %cst_269 = arith.constant dense<0.000000e+00> : vector<2x8xf32>
    %407 = vector.multi_reduction <add>, %406, %cst_269 [2] : vector<2x8x8xf32> to vector<2x8xf32>
    %408 = vector.shape_cast %407 : vector<2x8xf32> to vector<2x8x1xf32>
    %409 = tpu.reciprocal %408 {approx = true} : vector<2x8x1xf32> -> vector<2x8x1xf32>
    %410 = vector.broadcast %409 : vector<2x8x1xf32> to vector<2x8x8xf32>
    %411 = arith.mulf %406, %410 : vector<2x8x8xf32>
    %412 = arith.truncf %411 : vector<2x8x8xf32> to vector<2x8x8xbf16>
    "tpu.trace_start"() <{level = 10 : i32, message = "bqk,bkd->bqd"}> : () -> ()
    %cst_270 = arith.constant dense<0.000000e+00> : vector<2x8x8xf32>
    %413 = tpu.matmul %412, %396, %cst_270 {dimension_numbers = #tpu.dot_dimension_numbers<[2], [1], [1], [2], [0, 0, 0, 1, 1, 2], [0], [0]>} : vector<2x8x8xbf16>, vector<2x8x8xbf16>, vector<2x8x8xf32> -> vector<2x8x8xf32>
    "tpu.trace_stop"() : () -> ()
    %414 = vector.shape_cast %413 : vector<2x8x8xf32> to vector<16x8xf32>
    %415 = arith.truncf %414 : vector<16x8xf32> to vector<16x8xbf16>
    %c1_271 = arith.constant 1 : index
    %c1_272 = arith.constant 1 : index
    %c0_273 = arith.constant 0 : index
    %c0_274 = arith.constant 0 : index
    %416 = vector.load %arg9[%c1_271, %c1_272, %c0_273, %c0_274] : memref<2x4x8x32xbf16, #tpu.memory_space<vmem>>, vector<1x1x8x32xbf16>
    %417 = vector.shape_cast %416 : vector<1x1x8x32xbf16> to vector<8x32xbf16>
    %cst_275 = arith.constant dense<0.000000e+00> : vector<16x32xf32>
    %418 = tpu.matmul %415, %417, %cst_275 {dimension_numbers = #tpu.dot_dimension_numbers<[1], [0], [0], [1], [0, 0, 1, 1], [], []>} : vector<16x8xbf16>, vector<8x32xbf16>, vector<16x32xf32> -> vector<16x32xf32>
    %419 = arith.addf %369, %418 : vector<16x32xf32>
    %c1_276 = arith.constant 1 : index
    %c2_277 = arith.constant 2 : index
    %c0_278 = arith.constant 0 : index
    %c0_279 = arith.constant 0 : index
    %420 = vector.load %arg3[%c1_276, %c2_277, %c0_278, %c0_279] : memref<2x4x32x8xbf16, #tpu.memory_space<vmem>>, vector<1x1x32x8xbf16>
    %421 = vector.shape_cast %420 : vector<1x1x32x8xbf16> to vector<32x8xbf16>
    %cst_280 = arith.constant dense<0.000000e+00> : vector<16x8xf32>
    %422 = tpu.matmul %318, %421, %cst_280 {dimension_numbers = #tpu.dot_dimension_numbers<[1], [0], [0], [1], [0, 0, 1, 1], [], []>} : vector<16x32xbf16>, vector<32x8xbf16>, vector<16x8xf32> -> vector<16x8xf32>
    %c1_281 = arith.constant 1 : index
    %c2_282 = arith.constant 2 : index
    %c0_283 = arith.constant 0 : index
    %c0_284 = arith.constant 0 : index
    %423 = vector.load %arg6[%c1_281, %c2_282, %c0_283, %c0_284] : memref<2x4x1x8xf32, #tpu.memory_space<vmem>>, vector<1x1x1x8xf32>
    %424 = vector.shape_cast %423 : vector<1x1x1x8xf32> to vector<1x8xf32>
    %425 = vector.broadcast %424 : vector<1x8xf32> to vector<16x8xf32>
    %426 = arith.addf %422, %425 : vector<16x8xf32>
    %c1_285 = arith.constant 1 : index
    %c2_286 = arith.constant 2 : index
    %c0_287 = arith.constant 0 : index
    %c0_288 = arith.constant 0 : index
    %427 = vector.load %arg4[%c1_285, %c2_286, %c0_287, %c0_288] : memref<2x4x32x8xbf16, #tpu.memory_space<vmem>>, vector<1x1x32x8xbf16>
    %428 = vector.shape_cast %427 : vector<1x1x32x8xbf16> to vector<32x8xbf16>
    %cst_289 = arith.constant dense<0.000000e+00> : vector<16x8xf32>
    %429 = tpu.matmul %318, %428, %cst_289 {dimension_numbers = #tpu.dot_dimension_numbers<[1], [0], [0], [1], [0, 0, 1, 1], [], []>} : vector<16x32xbf16>, vector<32x8xbf16>, vector<16x8xf32> -> vector<16x8xf32>
    %c1_290 = arith.constant 1 : index
    %c2_291 = arith.constant 2 : index
    %c0_292 = arith.constant 0 : index
    %c0_293 = arith.constant 0 : index
    %430 = vector.load %arg7[%c1_290, %c2_291, %c0_292, %c0_293] : memref<2x4x1x8xf32, #tpu.memory_space<vmem>>, vector<1x1x1x8xf32>
    %431 = vector.shape_cast %430 : vector<1x1x1x8xf32> to vector<1x8xf32>
    %432 = vector.broadcast %431 : vector<1x8xf32> to vector<16x8xf32>
    %433 = arith.addf %429, %432 : vector<16x8xf32>
    %c1_294 = arith.constant 1 : index
    %c2_295 = arith.constant 2 : index
    %c0_296 = arith.constant 0 : index
    %c0_297 = arith.constant 0 : index
    %434 = vector.load %arg5[%c1_294, %c2_295, %c0_296, %c0_297] : memref<2x4x32x8xbf16, #tpu.memory_space<vmem>>, vector<1x1x32x8xbf16>
    %435 = vector.shape_cast %434 : vector<1x1x32x8xbf16> to vector<32x8xbf16>
    %cst_298 = arith.constant dense<0.000000e+00> : vector<16x8xf32>
    %436 = tpu.matmul %318, %435, %cst_298 {dimension_numbers = #tpu.dot_dimension_numbers<[1], [0], [0], [1], [0, 0, 1, 1], [], []>} : vector<16x32xbf16>, vector<32x8xbf16>, vector<16x8xf32> -> vector<16x8xf32>
    %c1_299 = arith.constant 1 : index
    %c2_300 = arith.constant 2 : index
    %c0_301 = arith.constant 0 : index
    %c0_302 = arith.constant 0 : index
    %437 = vector.load %arg8[%c1_299, %c2_300, %c0_301, %c0_302] : memref<2x4x1x8xf32, #tpu.memory_space<vmem>>, vector<1x1x1x8xf32>
    %438 = vector.shape_cast %437 : vector<1x1x1x8xf32> to vector<1x8xf32>
    %439 = vector.broadcast %438 : vector<1x8xf32> to vector<16x8xf32>
    %440 = arith.addf %436, %439 : vector<16x8xf32>
    %441 = vector.shape_cast %426 : vector<16x8xf32> to vector<2x8x8xf32>
    %442 = arith.truncf %441 : vector<2x8x8xf32> to vector<2x8x8xbf16>
    %443 = vector.shape_cast %433 : vector<16x8xf32> to vector<2x8x8xf32>
    %444 = arith.truncf %443 : vector<2x8x8xf32> to vector<2x8x8xbf16>
    %445 = vector.shape_cast %440 : vector<16x8xf32> to vector<2x8x8xf32>
    %446 = arith.truncf %445 : vector<2x8x8xf32> to vector<2x8x8xbf16>
    "tpu.trace_start"() <{level = 10 : i32, message = "bqd,bkd->bqk"}> : () -> ()
    %cst_303 = arith.constant dense<0.000000e+00> : vector<2x8x8xf32>
    %447 = tpu.matmul %442, %444, %cst_303 {dimension_numbers = #tpu.dot_dimension_numbers<[2], [2], [1], [1], [0, 0, 0, 1, 1, 1], [0], [0]>} : vector<2x8x8xbf16>, vector<2x8x8xbf16>, vector<2x8x8xf32> -> vector<2x8x8xf32>
    "tpu.trace_stop"() : () -> ()
    %cst_304 = arith.constant 0.353553385 : f32
    %448 = vector.broadcast %cst_304 : f32 to vector<2x8x8xf32>
    %449 = arith.mulf %447, %448 : vector<2x8x8xf32>
    %450 = vector.broadcast %7 : vector<1x8x8xf32> to vector<2x8x8xf32>
    %451 = arith.addf %449, %450 : vector<2x8x8xf32>
    %cst_305 = arith.constant dense<0xFF800000> : vector<2x8xf32>
    %452 = vector.multi_reduction <maximumf>, %451, %cst_305 [2] : vector<2x8x8xf32> to vector<2x8xf32>
    %453 = vector.shape_cast %452 : vector<2x8xf32> to vector<2x8x1xf32>
    %454 = vector.broadcast %453 : vector<2x8x1xf32> to vector<2x8x8xf32>
    %455 = arith.subf %451, %454 : vector<2x8x8xf32>
    %456 = math.exp %455 : vector<2x8x8xf32>
    %cst_306 = arith.constant dense<0.000000e+00> : vector<2x8xf32>
    %457 = vector.multi_reduction <add>, %456, %cst_306 [2] : vector<2x8x8xf32> to vector<2x8xf32>
    %458 = vector.shape_cast %457 : vector<2x8xf32> to vector<2x8x1xf32>
    %459 = tpu.reciprocal %458 {approx = true} : vector<2x8x1xf32> -> vector<2x8x1xf32>
    %460 = vector.broadcast %459 : vector<2x8x1xf32> to vector<2x8x8xf32>
    %461 = arith.mulf %456, %460 : vector<2x8x8xf32>
    %462 = arith.truncf %461 : vector<2x8x8xf32> to vector<2x8x8xbf16>
    "tpu.trace_start"() <{level = 10 : i32, message = "bqk,bkd->bqd"}> : () -> ()
    %cst_307 = arith.constant dense<0.000000e+00> : vector<2x8x8xf32>
    %463 = tpu.matmul %462, %446, %cst_307 {dimension_numbers = #tpu.dot_dimension_numbers<[2], [1], [1], [2], [0, 0, 0, 1, 1, 2], [0], [0]>} : vector<2x8x8xbf16>, vector<2x8x8xbf16>, vector<2x8x8xf32> -> vector<2x8x8xf32>
    "tpu.trace_stop"() : () -> ()
    %464 = vector.shape_cast %463 : vector<2x8x8xf32> to vector<16x8xf32>
    %465 = arith.truncf %464 : vector<16x8xf32> to vector<16x8xbf16>
    %c1_308 = arith.constant 1 : index
    %c2_309 = arith.constant 2 : index
    %c0_310 = arith.constant 0 : index
    %c0_311 = arith.constant 0 : index
    %466 = vector.load %arg9[%c1_308, %c2_309, %c0_310, %c0_311] : memref<2x4x8x32xbf16, #tpu.memory_space<vmem>>, vector<1x1x8x32xbf16>
    %467 = vector.shape_cast %466 : vector<1x1x8x32xbf16> to vector<8x32xbf16>
    %cst_312 = arith.constant dense<0.000000e+00> : vector<16x32xf32>
    %468 = tpu.matmul %465, %467, %cst_312 {dimension_numbers = #tpu.dot_dimension_numbers<[1], [0], [0], [1], [0, 0, 1, 1], [], []>} : vector<16x8xbf16>, vector<8x32xbf16>, vector<16x32xf32> -> vector<16x32xf32>
    %469 = arith.addf %419, %468 : vector<16x32xf32>
    %c1_313 = arith.constant 1 : index
    %c3_314 = arith.constant 3 : index
    %c0_315 = arith.constant 0 : index
    %c0_316 = arith.constant 0 : index
    %470 = vector.load %arg3[%c1_313, %c3_314, %c0_315, %c0_316] : memref<2x4x32x8xbf16, #tpu.memory_space<vmem>>, vector<1x1x32x8xbf16>
    %471 = vector.shape_cast %470 : vector<1x1x32x8xbf16> to vector<32x8xbf16>
    %cst_317 = arith.constant dense<0.000000e+00> : vector<16x8xf32>
    %472 = tpu.matmul %318, %471, %cst_317 {dimension_numbers = #tpu.dot_dimension_numbers<[1], [0], [0], [1], [0, 0, 1, 1], [], []>} : vector<16x32xbf16>, vector<32x8xbf16>, vector<16x8xf32> -> vector<16x8xf32>
    %c1_318 = arith.constant 1 : index
    %c3_319 = arith.constant 3 : index
    %c0_320 = arith.constant 0 : index
    %c0_321 = arith.constant 0 : index
    %473 = vector.load %arg6[%c1_318, %c3_319, %c0_320, %c0_321] : memref<2x4x1x8xf32, #tpu.memory_space<vmem>>, vector<1x1x1x8xf32>
    %474 = vector.shape_cast %473 : vector<1x1x1x8xf32> to vector<1x8xf32>
    %475 = vector.broadcast %474 : vector<1x8xf32> to vector<16x8xf32>
    %476 = arith.addf %472, %475 : vector<16x8xf32>
    %c1_322 = arith.constant 1 : index
    %c3_323 = arith.constant 3 : index
    %c0_324 = arith.constant 0 : index
    %c0_325 = arith.constant 0 : index
    %477 = vector.load %arg4[%c1_322, %c3_323, %c0_324, %c0_325] : memref<2x4x32x8xbf16, #tpu.memory_space<vmem>>, vector<1x1x32x8xbf16>
    %478 = vector.shape_cast %477 : vector<1x1x32x8xbf16> to vector<32x8xbf16>
    %cst_326 = arith.constant dense<0.000000e+00> : vector<16x8xf32>
    %479 = tpu.matmul %318, %478, %cst_326 {dimension_numbers = #tpu.dot_dimension_numbers<[1], [0], [0], [1], [0, 0, 1, 1], [], []>} : vector<16x32xbf16>, vector<32x8xbf16>, vector<16x8xf32> -> vector<16x8xf32>
    %c1_327 = arith.constant 1 : index
    %c3_328 = arith.constant 3 : index
    %c0_329 = arith.constant 0 : index
    %c0_330 = arith.constant 0 : index
    %480 = vector.load %arg7[%c1_327, %c3_328, %c0_329, %c0_330] : memref<2x4x1x8xf32, #tpu.memory_space<vmem>>, vector<1x1x1x8xf32>
    %481 = vector.shape_cast %480 : vector<1x1x1x8xf32> to vector<1x8xf32>
    %482 = vector.broadcast %481 : vector<1x8xf32> to vector<16x8xf32>
    %483 = arith.addf %479, %482 : vector<16x8xf32>
    %c1_331 = arith.constant 1 : index
    %c3_332 = arith.constant 3 : index
    %c0_333 = arith.constant 0 : index
    %c0_334 = arith.constant 0 : index
    %484 = vector.load %arg5[%c1_331, %c3_332, %c0_333, %c0_334] : memref<2x4x32x8xbf16, #tpu.memory_space<vmem>>, vector<1x1x32x8xbf16>
    %485 = vector.shape_cast %484 : vector<1x1x32x8xbf16> to vector<32x8xbf16>
    %cst_335 = arith.constant dense<0.000000e+00> : vector<16x8xf32>
    %486 = tpu.matmul %318, %485, %cst_335 {dimension_numbers = #tpu.dot_dimension_numbers<[1], [0], [0], [1], [0, 0, 1, 1], [], []>} : vector<16x32xbf16>, vector<32x8xbf16>, vector<16x8xf32> -> vector<16x8xf32>
    %c1_336 = arith.constant 1 : index
    %c3_337 = arith.constant 3 : index
    %c0_338 = arith.constant 0 : index
    %c0_339 = arith.constant 0 : index
    %487 = vector.load %arg8[%c1_336, %c3_337, %c0_338, %c0_339] : memref<2x4x1x8xf32, #tpu.memory_space<vmem>>, vector<1x1x1x8xf32>
    %488 = vector.shape_cast %487 : vector<1x1x1x8xf32> to vector<1x8xf32>
    %489 = vector.broadcast %488 : vector<1x8xf32> to vector<16x8xf32>
    %490 = arith.addf %486, %489 : vector<16x8xf32>
    %491 = vector.shape_cast %476 : vector<16x8xf32> to vector<2x8x8xf32>
    %492 = arith.truncf %491 : vector<2x8x8xf32> to vector<2x8x8xbf16>
    %493 = vector.shape_cast %483 : vector<16x8xf32> to vector<2x8x8xf32>
    %494 = arith.truncf %493 : vector<2x8x8xf32> to vector<2x8x8xbf16>
    %495 = vector.shape_cast %490 : vector<16x8xf32> to vector<2x8x8xf32>
    %496 = arith.truncf %495 : vector<2x8x8xf32> to vector<2x8x8xbf16>
    "tpu.trace_start"() <{level = 10 : i32, message = "bqd,bkd->bqk"}> : () -> ()
    %cst_340 = arith.constant dense<0.000000e+00> : vector<2x8x8xf32>
    %497 = tpu.matmul %492, %494, %cst_340 {dimension_numbers = #tpu.dot_dimension_numbers<[2], [2], [1], [1], [0, 0, 0, 1, 1, 1], [0], [0]>} : vector<2x8x8xbf16>, vector<2x8x8xbf16>, vector<2x8x8xf32> -> vector<2x8x8xf32>
    "tpu.trace_stop"() : () -> ()
    %cst_341 = arith.constant 0.353553385 : f32
    %498 = vector.broadcast %cst_341 : f32 to vector<2x8x8xf32>
    %499 = arith.mulf %497, %498 : vector<2x8x8xf32>
    %500 = vector.broadcast %7 : vector<1x8x8xf32> to vector<2x8x8xf32>
    %501 = arith.addf %499, %500 : vector<2x8x8xf32>
    %cst_342 = arith.constant dense<0xFF800000> : vector<2x8xf32>
    %502 = vector.multi_reduction <maximumf>, %501, %cst_342 [2] : vector<2x8x8xf32> to vector<2x8xf32>
    %503 = vector.shape_cast %502 : vector<2x8xf32> to vector<2x8x1xf32>
    %504 = vector.broadcast %503 : vector<2x8x1xf32> to vector<2x8x8xf32>
    %505 = arith.subf %501, %504 : vector<2x8x8xf32>
    %506 = math.exp %505 : vector<2x8x8xf32>
    %cst_343 = arith.constant dense<0.000000e+00> : vector<2x8xf32>
    %507 = vector.multi_reduction <add>, %506, %cst_343 [2] : vector<2x8x8xf32> to vector<2x8xf32>
    %508 = vector.shape_cast %507 : vector<2x8xf32> to vector<2x8x1xf32>
    %509 = tpu.reciprocal %508 {approx = true} : vector<2x8x1xf32> -> vector<2x8x1xf32>
    %510 = vector.broadcast %509 : vector<2x8x1xf32> to vector<2x8x8xf32>
    %511 = arith.mulf %506, %510 : vector<2x8x8xf32>
    %512 = arith.truncf %511 : vector<2x8x8xf32> to vector<2x8x8xbf16>
    "tpu.trace_start"() <{level = 10 : i32, message = "bqk,bkd->bqd"}> : () -> ()
    %cst_344 = arith.constant dense<0.000000e+00> : vector<2x8x8xf32>
    %513 = tpu.matmul %512, %496, %cst_344 {dimension_numbers = #tpu.dot_dimension_numbers<[2], [1], [1], [2], [0, 0, 0, 1, 1, 2], [0], [0]>} : vector<2x8x8xbf16>, vector<2x8x8xbf16>, vector<2x8x8xf32> -> vector<2x8x8xf32>
    "tpu.trace_stop"() : () -> ()
    %514 = vector.shape_cast %513 : vector<2x8x8xf32> to vector<16x8xf32>
    %515 = arith.truncf %514 : vector<16x8xf32> to vector<16x8xbf16>
    %c1_345 = arith.constant 1 : index
    %c3_346 = arith.constant 3 : index
    %c0_347 = arith.constant 0 : index
    %c0_348 = arith.constant 0 : index
    %516 = vector.load %arg9[%c1_345, %c3_346, %c0_347, %c0_348] : memref<2x4x8x32xbf16, #tpu.memory_space<vmem>>, vector<1x1x8x32xbf16>
    %517 = vector.shape_cast %516 : vector<1x1x8x32xbf16> to vector<8x32xbf16>
    %cst_349 = arith.constant dense<0.000000e+00> : vector<16x32xf32>
    %518 = tpu.matmul %515, %517, %cst_349 {dimension_numbers = #tpu.dot_dimension_numbers<[1], [0], [0], [1], [0, 0, 1, 1], [], []>} : vector<16x8xbf16>, vector<8x32xbf16>, vector<16x32xf32> -> vector<16x32xf32>
    %519 = arith.addf %469, %518 : vector<16x32xf32>
    %520 = arith.addf %291, %519 : vector<16x32xf32>
    %c1_350 = arith.constant 1 : index
    %c0_351 = arith.constant 0 : index
    %c0_352 = arith.constant 0 : index
    %521 = vector.load %arg10[%c1_350, %c0_351, %c0_352] : memref<2x1x32xf32, #tpu.memory_space<vmem>>, vector<1x1x32xf32>
    %522 = vector.shape_cast %521 : vector<1x1x32xf32> to vector<1x32xf32>
    %523 = vector.broadcast %522 : vector<1x32xf32> to vector<16x32xf32>
    %524 = arith.addf %520, %523 : vector<16x32xf32>
    %c1_353 = arith.constant 1 : index
    %c0_354 = arith.constant 0 : index
    %c0_355 = arith.constant 0 : index
    %525 = vector.load %arg11[%c1_353, %c0_354, %c0_355] : memref<2x1x32xf32, #tpu.memory_space<vmem>>, vector<1x1x32xf32>
    %526 = vector.shape_cast %525 : vector<1x1x32xf32> to vector<1x32xf32>
    %c1_356 = arith.constant 1 : index
    %c0_357 = arith.constant 0 : index
    %c0_358 = arith.constant 0 : index
    %527 = vector.load %arg12[%c1_356, %c0_357, %c0_358] : memref<2x1x32xf32, #tpu.memory_space<vmem>>, vector<1x1x32xf32>
    %528 = vector.shape_cast %527 : vector<1x1x32xf32> to vector<1x32xf32>
    %cst_359 = arith.constant dense<0.000000e+00> : vector<16xf32>
    %529 = vector.multi_reduction <add>, %524, %cst_359 [1] : vector<16x32xf32> to vector<16xf32>
    %530 = vector.shape_cast %529 : vector<16xf32> to vector<16x1xf32>
    %cst_360 = arith.constant 3.200000e+01 : f32
    %531 = vector.broadcast %cst_360 : f32 to vector<16x1xf32>
    %532 = arith.divf %530, %531 : vector<16x1xf32>
    %533 = vector.broadcast %532 : vector<16x1xf32> to vector<16x32xf32>
    %534 = arith.subf %524, %533 : vector<16x32xf32>
    %535 = arith.mulf %534, %534 : vector<16x32xf32>
    %cst_361 = arith.constant dense<0.000000e+00> : vector<16xf32>
    %536 = vector.multi_reduction <add>, %535, %cst_361 [1] : vector<16x32xf32> to vector<16xf32>
    %537 = vector.shape_cast %536 : vector<16xf32> to vector<16x1xf32>
    %cst_362 = arith.constant 3.200000e+01 : f32
    %538 = vector.broadcast %cst_362 : f32 to vector<16x1xf32>
    %539 = arith.divf %537, %538 : vector<16x1xf32>
    %540 = vector.broadcast %532 : vector<16x1xf32> to vector<16x32xf32>
    %541 = arith.subf %524, %540 : vector<16x32xf32>
    %cst_363 = arith.constant 9.99999974E-6 : f32
    %542 = vector.broadcast %cst_363 : f32 to vector<16x1xf32>
    %543 = arith.addf %539, %542 : vector<16x1xf32>
    %544 = math.rsqrt %543 : vector<16x1xf32>
    %545 = vector.broadcast %544 : vector<16x1xf32> to vector<16x32xf32>
    %546 = arith.mulf %541, %545 : vector<16x32xf32>
    %547 = vector.broadcast %526 : vector<1x32xf32> to vector<16x32xf32>
    %548 = arith.mulf %546, %547 : vector<16x32xf32>
    %549 = vector.broadcast %528 : vector<1x32xf32> to vector<16x32xf32>
    %550 = arith.addf %548, %549 : vector<16x32xf32>
    %551 = arith.truncf %550 : vector<16x32xf32> to vector<16x32xbf16>
    %c1_364 = arith.constant 1 : index
    %c0_365 = arith.constant 0 : index
    %c0_366 = arith.constant 0 : index
    %552 = vector.load %arg13[%c1_364, %c0_365, %c0_366] : memref<2x32x128xbf16, #tpu.memory_space<vmem>>, vector<1x32x128xbf16>
    %553 = vector.shape_cast %552 : vector<1x32x128xbf16> to vector<32x128xbf16>
    %cst_367 = arith.constant dense<0.000000e+00> : vector<16x128xf32>
    %554 = tpu.matmul %551, %553, %cst_367 {dimension_numbers = #tpu.dot_dimension_numbers<[1], [0], [0], [1], [0, 0, 1, 1], [], []>} : vector<16x32xbf16>, vector<32x128xbf16>, vector<16x128xf32> -> vector<16x128xf32>
    %c1_368 = arith.constant 1 : index
    %c0_369 = arith.constant 0 : index
    %c0_370 = arith.constant 0 : index
    %555 = vector.load %arg14[%c1_368, %c0_369, %c0_370] : memref<2x1x128xf32, #tpu.memory_space<vmem>>, vector<1x1x128xf32>
    %556 = vector.shape_cast %555 : vector<1x1x128xf32> to vector<1x128xf32>
    %557 = vector.broadcast %556 : vector<1x128xf32> to vector<16x128xf32>
    %558 = arith.addf %554, %557 : vector<16x128xf32>
    %cst_371 = arith.constant 5.000000e-01 : f32
    %559 = vector.broadcast %cst_371 : f32 to vector<16x128xf32>
    %560 = arith.mulf %559, %558 : vector<16x128xf32>
    %cst_372 = arith.constant 0.707106769 : f32
    %561 = vector.broadcast %cst_372 : f32 to vector<16x128xf32>
    %562 = arith.mulf %558, %561 : vector<16x128xf32>
    %563 = math.erf %562 : vector<16x128xf32>
    %cst_373 = arith.constant 1.000000e+00 : f32
    %564 = vector.broadcast %cst_373 : f32 to vector<16x128xf32>
    %565 = arith.addf %564, %563 : vector<16x128xf32>
    %566 = arith.mulf %560, %565 : vector<16x128xf32>
    %567 = arith.truncf %566 : vector<16x128xf32> to vector<16x128xbf16>
    %c1_374 = arith.constant 1 : index
    %c0_375 = arith.constant 0 : index
    %c0_376 = arith.constant 0 : index
    %568 = vector.load %arg15[%c1_374, %c0_375, %c0_376] : memref<2x128x32xbf16, #tpu.memory_space<vmem>>, vector<1x128x32xbf16>
    %569 = vector.shape_cast %568 : vector<1x128x32xbf16> to vector<128x32xbf16>
    %cst_377 = arith.constant dense<0.000000e+00> : vector<16x32xf32>
    %570 = tpu.matmul %567, %569, %cst_377 {dimension_numbers = #tpu.dot_dimension_numbers<[1], [0], [0], [1], [0, 0, 1, 1], [], []>} : vector<16x128xbf16>, vector<128x32xbf16>, vector<16x32xf32> -> vector<16x32xf32>
    %c1_378 = arith.constant 1 : index
    %c0_379 = arith.constant 0 : index
    %c0_380 = arith.constant 0 : index
    %571 = vector.load %arg16[%c1_378, %c0_379, %c0_380] : memref<2x1x32xf32, #tpu.memory_space<vmem>>, vector<1x1x32xf32>
    %572 = vector.shape_cast %571 : vector<1x1x32xf32> to vector<1x32xf32>
    %573 = vector.broadcast %572 : vector<1x32xf32> to vector<16x32xf32>
    %574 = arith.addf %570, %573 : vector<16x32xf32>
    %575 = arith.addf %524, %574 : vector<16x32xf32>
    %c0_381 = arith.constant 0 : index
    %c0_382 = arith.constant 0 : index
    %576 = vector.load %arg17[%c0_381, %c0_382] : memref<1x32xf32, #tpu.memory_space<vmem>>, vector<1x32xf32>
    %c0_383 = arith.constant 0 : index
    %c0_384 = arith.constant 0 : index
    %577 = vector.load %arg18[%c0_383, %c0_384] : memref<1x32xf32, #tpu.memory_space<vmem>>, vector<1x32xf32>
    %cst_385 = arith.constant dense<0.000000e+00> : vector<16xf32>
    %578 = vector.multi_reduction <add>, %575, %cst_385 [1] : vector<16x32xf32> to vector<16xf32>
    %579 = vector.shape_cast %578 : vector<16xf32> to vector<16x1xf32>
    %cst_386 = arith.constant 3.200000e+01 : f32
    %580 = vector.broadcast %cst_386 : f32 to vector<16x1xf32>
    %581 = arith.divf %579, %580 : vector<16x1xf32>
    %582 = vector.broadcast %581 : vector<16x1xf32> to vector<16x32xf32>
    %583 = arith.subf %575, %582 : vector<16x32xf32>
    %584 = arith.mulf %583, %583 : vector<16x32xf32>
    %cst_387 = arith.constant dense<0.000000e+00> : vector<16xf32>
    %585 = vector.multi_reduction <add>, %584, %cst_387 [1] : vector<16x32xf32> to vector<16xf32>
    %586 = vector.shape_cast %585 : vector<16xf32> to vector<16x1xf32>
    %cst_388 = arith.constant 3.200000e+01 : f32
    %587 = vector.broadcast %cst_388 : f32 to vector<16x1xf32>
    %588 = arith.divf %586, %587 : vector<16x1xf32>
    %589 = vector.broadcast %581 : vector<16x1xf32> to vector<16x32xf32>
    %590 = arith.subf %575, %589 : vector<16x32xf32>
    %cst_389 = arith.constant 9.99999974E-6 : f32
    %591 = vector.broadcast %cst_389 : f32 to vector<16x1xf32>
    %592 = arith.addf %588, %591 : vector<16x1xf32>
    %593 = math.rsqrt %592 : vector<16x1xf32>
    %594 = vector.broadcast %593 : vector<16x1xf32> to vector<16x32xf32>
    %595 = arith.mulf %590, %594 : vector<16x32xf32>
    %596 = vector.broadcast %576 : vector<1x32xf32> to vector<16x32xf32>
    %597 = arith.mulf %595, %596 : vector<16x32xf32>
    %598 = vector.broadcast %577 : vector<1x32xf32> to vector<16x32xf32>
    %599 = arith.addf %597, %598 : vector<16x32xf32>
    %600 = arith.truncf %599 : vector<16x32xf32> to vector<16x32xbf16>
    %c0_390 = arith.constant 0 : index
    %c0_391 = arith.constant 0 : index
    %601 = vector.load %arg19[%c0_390, %c0_391] : memref<32x128xbf16, #tpu.memory_space<vmem>>, vector<32x128xbf16>
    %cst_392 = arith.constant dense<0.000000e+00> : vector<16x128xf32>
    %602 = tpu.matmul %600, %601, %cst_392 {dimension_numbers = #tpu.dot_dimension_numbers<[1], [0], [0], [1], [0, 0, 1, 1], [], []>} : vector<16x32xbf16>, vector<32x128xbf16>, vector<16x128xf32> -> vector<16x128xf32>
    %c0_393 = arith.constant 0 : index
    %c0_394 = arith.constant 0 : index
    %603 = vector.load %arg20[%c0_393, %c0_394] : memref<1x128xf32, #tpu.memory_space<vmem>>, vector<1x128xf32>
    %604 = vector.broadcast %603 : vector<1x128xf32> to vector<16x128xf32>
    %605 = arith.addf %602, %604 : vector<16x128xf32>
    %c0_395 = arith.constant 0 : index
    %c0_396 = arith.constant 0 : index
    %606 = vector.load %arg21[%c0_395, %c0_396] : memref<16x128xf32, #tpu.memory_space<vmem>>, vector<16x128xf32>
    tpu.vector_store %arg21[%c0_395, %c0_396], %605 {strides = array<i32>} : memref<16x128xf32, #tpu.memory_space<vmem>>, vector<16x128xf32>,
    return
  }
}

</mosaic_0001>

<llo_original>
// kernel: tpu_custom_call.1
$region0: #{tpu_custom_call.1}
  #allocation0 [shape = 'u32[]', space=smem, size = 0x4, offset = 0x4, fixed_abs, tag = 'smem constant byte address 0x4 - core index']
  #allocation1 [shape = 'u32[144,128]{1,0:T(1,128)}', space=vmem, size = 0x12000, scoped, tag = 'internal scratch']
  %s0 = inlined_call_operand.vmem [shape: f32[16,32], index: 0, kind: input, shape index: {}]
  %s1 = inlined_call_operand.vmem [shape: f32[2,1,32], index: 1, kind: input, shape index: {}]
  %s2 = inlined_call_operand.vmem [shape: f32[2,1,32], index: 2, kind: input, shape index: {}]
  %s3 = inlined_call_operand.vmem [shape: bf16[2,4,32,8], index: 3, kind: input, shape index: {}]
  %s4 = inlined_call_operand.vmem [shape: bf16[2,4,32,8], index: 4, kind: input, shape index: {}]
  %s5 = inlined_call_operand.vmem [shape: bf16[2,4,32,8], index: 5, kind: input, shape index: {}]
  %s6 = inlined_call_operand.vmem [shape: f32[2,4,1,8], index: 6, kind: input, shape index: {}]
  %s7 = inlined_call_operand.vmem [shape: f32[2,4,1,8], index: 7, kind: input, shape index: {}]
  %s8 = inlined_call_operand.vmem [shape: f32[2,4,1,8], index: 8, kind: input, shape index: {}]
  %s9 = inlined_call_operand.vmem [shape: bf16[2,4,8,32], index: 9, kind: input, shape index: {}]
  %s10 = inlined_call_operand.vmem [shape: f32[2,1,32], index: 10, kind: input, shape index: {}]
  %s11 = inlined_call_operand.vmem [shape: f32[2,1,32], index: 11, kind: input, shape index: {}]
  %s12 = inlined_call_operand.vmem [shape: f32[2,1,32], index: 12, kind: input, shape index: {}]
  %s13 = inlined_call_operand.vmem [shape: bf16[2,32,128], index: 13, kind: input, shape index: {}]
  %s14 = inlined_call_operand.vmem [shape: f32[2,1,128], index: 14, kind: input, shape index: {}]
  %s15 = inlined_call_operand.vmem [shape: bf16[2,128,32], index: 15, kind: input, shape index: {}]
  %s16 = inlined_call_operand.vmem [shape: f32[2,1,32], index: 16, kind: input, shape index: {}]
  %s17 = inlined_call_operand.vmem [shape: f32[1,32], index: 17, kind: input, shape index: {}]
  %s18 = inlined_call_operand.vmem [shape: f32[1,32], index: 18, kind: input, shape index: {}]
  %s19 = inlined_call_operand.vmem [shape: bf16[32,128], index: 19, kind: input, shape index: {}]
  %s20 = inlined_call_operand.vmem [shape: f32[1,128], index: 20, kind: input, shape index: {}]
  %s21 = inlined_call_operand.hbm [shape: f32[16,128], index: 21, kind: output, shape index: {}]
  %s22 = sld [smem:[#allocation0]]
  $region94: #{tpu_custom_call.1} parent=0
    _
  %s24 = ssub.s32 1, %s22
  %s25 = scalar_select 0, %s24, %s22
  $region1: #{tpu_custom_call.1} parent=0
    #allocation2 [shape = 'u8[8192]{0}', space=vmem, size = 0x2000, scoped, tag = 'output window, operand 0, single buffered']
    #allocation3 [shape = 's32[1]{0}', space=sflag, size = 0x4, scoped, tag = 'scoped memory for tpu_custom_call.1']
    %26 = vsyncpa [#allocation3], 0
    // Predicated region
    $region2: #{tpu_custom_call.1} parent=1 // pred_check
      _
    $region3: #{tpu_custom_call.1} parent=1 // pred_check_branch
      %28 = sbr.rel (0) target = $region5
    $region4: #{tpu_custom_call.1} parent=1 // pred_region
      _
    $region5: #{tpu_custom_call.1} parent=1 // pred_fallthru
      _
    // Predicated region
    $region6: #{tpu_custom_call.1} parent=1 // pred_check
      _
    $region7: #{tpu_custom_call.1} parent=1 // pred_check_branch
      %30 = sbr.rel (0) target = $region9
    $region8: #{tpu_custom_call.1} parent=1 // pred_region
      _
    $region9: #{tpu_custom_call.1} parent=1 // pred_fallthru
      _
    // Predicated region
    $region10: #{tpu_custom_call.1} parent=1 // pred_check
      _
    $region11: #{tpu_custom_call.1} parent=1 // pred_check_branch
      %32 = sbr.rel (0) target = $region13
    $region12: #{tpu_custom_call.1} parent=1 // pred_region
      _
    $region13: #{tpu_custom_call.1} parent=1 // pred_fallthru
      _
    // Predicated region
    $region14: #{tpu_custom_call.1} parent=1 // pred_check
      _
    $region15: #{tpu_custom_call.1} parent=1 // pred_check_branch
      %34 = sbr.rel (0) target = $region17
    $region16: #{tpu_custom_call.1} parent=1 // pred_region
      _
    $region17: #{tpu_custom_call.1} parent=1 // pred_fallthru
      _
    // Predicated region
    $region18: #{tpu_custom_call.1} parent=1 // pred_check
      _
    $region19: #{tpu_custom_call.1} parent=1 // pred_check_branch
      %36 = sbr.rel (0) target = $region21
    $region20: #{tpu_custom_call.1} parent=1 // pred_region
      _
    $region21: #{tpu_custom_call.1} parent=1 // pred_fallthru
      _
    // Predicated region
    $region22: #{tpu_custom_call.1} parent=1 // pred_check
      _
    $region23: #{tpu_custom_call.1} parent=1 // pred_check_branch
      %38 = sbr.rel (0) target = $region25
    $region24: #{tpu_custom_call.1} parent=1 // pred_region
      _
    $region25: #{tpu_custom_call.1} parent=1 // pred_fallthru
      _
    // Predicated region
    $region26: #{tpu_custom_call.1} parent=1 // pred_check
      _
    $region27: #{tpu_custom_call.1} parent=1 // pred_check_branch
      %40 = sbr.rel (0) target = $region29
    $region28: #{tpu_custom_call.1} parent=1 // pred_region
      _
    $region29: #{tpu_custom_call.1} parent=1 // pred_fallthru
      _
    // Predicated region
    $region30: #{tpu_custom_call.1} parent=1 // pred_check
      _
    $region31: #{tpu_custom_call.1} parent=1 // pred_check_branch
      %42 = sbr.rel (0) target = $region33
    $region32: #{tpu_custom_call.1} parent=1 // pred_region
      _
    $region33: #{tpu_custom_call.1} parent=1 // pred_fallthru
      _
    // Predicated region
    $region34: #{tpu_custom_call.1} parent=1 // pred_check
      _
    $region35: #{tpu_custom_call.1} parent=1 // pred_check_branch
      %44 = sbr.rel (0) target = $region37
    $region36: #{tpu_custom_call.1} parent=1 // pred_region
      _
    $region37: #{tpu_custom_call.1} parent=1 // pred_fallthru
      _
    // Predicated region
    $region38: #{tpu_custom_call.1} parent=1 // pred_check
      _
    $region39: #{tpu_custom_call.1} parent=1 // pred_check_branch
      %46 = sbr.rel (0) target = $region41
    $region40: #{tpu_custom_call.1} parent=1 // pred_region
      _
    $region41: #{tpu_custom_call.1} parent=1 // pred_fallthru
      _
    // Predicated region
    $region42: #{tpu_custom_call.1} parent=1 // pred_check
      _
    $region43: #{tpu_custom_call.1} parent=1 // pred_check_branch
      %48 = sbr.rel (0) target = $region45
    $region44: #{tpu_custom_call.1} parent=1 // pred_region
      _
    $region45: #{tpu_custom_call.1} parent=1 // pred_fallthru
      _
    // Predicated region
    $region46: #{tpu_custom_call.1} parent=1 // pred_check
      _
    $region47: #{tpu_custom_call.1} parent=1 // pred_check_branch
      %50 = sbr.rel (0) target = $region49
    $region48: #{tpu_custom_call.1} parent=1 // pred_region
      _
    $region49: #{tpu_custom_call.1} parent=1 // pred_fallthru
      _
    // Predicated region
    $region50: #{tpu_custom_call.1} parent=1 // pred_check
      _
    $region51: #{tpu_custom_call.1} parent=1 // pred_check_branch
      %52 = sbr.rel (0) target = $region53
    $region52: #{tpu_custom_call.1} parent=1 // pred_region
      _
    $region53: #{tpu_custom_call.1} parent=1 // pred_fallthru
      _
    // Predicated region
    $region54: #{tpu_custom_call.1} parent=1 // pred_check
      _
    $region55: #{tpu_custom_call.1} parent=1 // pred_check_branch
      %54 = sbr.rel (0) target = $region57
    $region56: #{tpu_custom_call.1} parent=1 // pred_region
      _
    $region57: #{tpu_custom_call.1} parent=1 // pred_fallthru
      _
    // Predicated region
    $region58: #{tpu_custom_call.1} parent=1 // pred_check
      _
    $region59: #{tpu_custom_call.1} parent=1 // pred_check_branch
      %56 = sbr.rel (0) target = $region61
    $region60: #{tpu_custom_call.1} parent=1 // pred_region
      _
    $region61: #{tpu_custom_call.1} parent=1 // pred_fallthru
      _
    // Predicated region
    $region62: #{tpu_custom_call.1} parent=1 // pred_check
      _
    $region63: #{tpu_custom_call.1} parent=1 // pred_check_branch
      %58 = sbr.rel (0) target = $region65
    $region64: #{tpu_custom_call.1} parent=1 // pred_region
      _
    $region65: #{tpu_custom_call.1} parent=1 // pred_fallthru
      _
    // Predicated region
    $region66: #{tpu_custom_call.1} parent=1 // pred_check
      _
    $region67: #{tpu_custom_call.1} parent=1 // pred_check_branch
      %60 = sbr.rel (0) target = $region69
    $region68: #{tpu_custom_call.1} parent=1 // pred_region
      _
    $region69: #{tpu_custom_call.1} parent=1 // pred_fallthru
      _
    // Predicated region
    $region70: #{tpu_custom_call.1} parent=1 // pred_check
      _
    $region71: #{tpu_custom_call.1} parent=1 // pred_check_branch
      %62 = sbr.rel (0) target = $region73
    $region72: #{tpu_custom_call.1} parent=1 // pred_region
      _
    $region73: #{tpu_custom_call.1} parent=1 // pred_fallthru
      _
    // Predicated region
    $region74: #{tpu_custom_call.1} parent=1 // pred_check
      _
    $region75: #{tpu_custom_call.1} parent=1 // pred_check_branch
      %64 = sbr.rel (0) target = $region77
    $region76: #{tpu_custom_call.1} parent=1 // pred_region
      _
    $region77: #{tpu_custom_call.1} parent=1 // pred_fallthru
      _
    // Predicated region
    $region78: #{tpu_custom_call.1} parent=1 // pred_check
      _
    $region79: #{tpu_custom_call.1} parent=1 // pred_check_branch
      %66 = sbr.rel (0) target = $region81
    $region80: #{tpu_custom_call.1} parent=1 // pred_region
      _
    $region81: #{tpu_custom_call.1} parent=1 // pred_fallthru
      _
    // Predicated region
    $region82: #{tpu_custom_call.1} parent=1 // pred_check
      _
    $region83: #{tpu_custom_call.1} parent=1 // pred_check_branch
      %68 = sbr.rel (0) target = $region85
    $region84: #{tpu_custom_call.1} parent=1 // pred_region
      _
    $region85: #{tpu_custom_call.1} parent=1 // pred_fallthru
      _
    %v70 = vld [vmem:[%s0] sm:$0xff]
    %v71 = vld [vmem:[%s0 + $0x8] sm:$0xff]
    %v72 = vlaneseq
    %v73 = vshrl.u32 %v72, 7
    %v74 = vlaneseq
    %v75 = vand.u32 %v74, 127
    %vm76 = vcmp.le.s32.totalorder %v75, %v73
    %v77 = vsel %vm76, 0.0, -1e+30
    %v78 = vld [vmem:[%s1] sm:$0x1]
    %v79 = vld [vmem:[%s2] sm:$0x1]
    %vm80 = vcmask 261120
    %v81 = vsel %vm80, %v70, 0.0
    %82 = vadd.xlane.f32.xlu0 %v81
    %v83 = vpop.xlane.xlu0 %82
    %v84 = vsel %vm80, %v71, 0.0
    %85 = vadd.xlane.f32.xlu0 %v84
    %v86 = vpop.xlane.xlu0 %85
    %v87 = vrcp.pop 32.0
    %v88 = vmul.f32 %v83, %v87
    %v89 = vmul.f32 %v86, %v87
    %v90 = vsub.f32 %v70, %v88
    %v91 = vsub.f32 %v71, %v89
    %v92 = vmul.f32 %v90, %v90
    %v93 = vmul.f32 %v91, %v91
    %v94 = vsel %vm80, %v92, 0.0
    %95 = vadd.xlane.f32.xlu0 %v94
    %v96 = vpop.xlane.xlu0 %95
    %v97 = vsel %vm80, %v93, 0.0
    %98 = vadd.xlane.f32.xlu0 %v97
    %v99 = vpop.xlane.xlu0 %98
    %v100 = vmul.f32 %v96, %v87
    %v101 = vmul.f32 %v99, %v87
    %v102 = vadd.f32 %v100, 1e-05
    %v103 = vadd.f32 %v101, 1e-05
    %v104 = vrsqrt.pop %v102
    %v105 = vrsqrt.pop %v103
    %v106 = vmul.f32 %v90, %v104
    %v107 = vmul.f32 %v91, %v105
    %v109 = vlaneseq
    %v110 = vshrl.u32 %v109, 7
    %v111 = vsub.s32 0, %v110
    %v112 = vrot.slane %v78, %v111
    %v114 = vmul.f32 %v106, %v112
    %v115 = vmul.f32 %v107, %v112
    %v117 = vlaneseq
    %v118 = vshrl.u32 %v117, 7
    %v119 = vsub.s32 0, %v118
    %v120 = vrot.slane %v79, %v119
    %v122 = vadd.f32 %v114, %v120
    %v123 = vadd.f32 %v115, %v120
    %v124 = vpack.c.bf16 %v123, %v122
    %v125 = vld [vmem:[%s3] sm:$0xf]
    %v126 = vld [vmem:[%s3 + $0x4] sm:$0xf]
    %v127 = vld [vmem:[%s3 + $0x8] sm:$0xf]
    %v128 = vld [vmem:[%s3 + $0xc] sm:$0xf]
    %v129 = vld [vmem:[%s6] sm:$0x1]
    %v131 = vlaneseq
    %v132 = vshrl.u32 %v131, 7
    %v133 = vsub.s32 0, %v132
    %v134 = vrot.slane %v129, %v133
    %v140 = vunpack.c.l.b16 %v125
    %v141 = vunpack.c.l.b16 %v126
    %v142 = vunpack.c.l.b16 %v127
    %v143 = vunpack.c.l.b16 %v128
    %v144 = vpack.c.b16 %v141, %v140
    %v145 = vpack.c.b16 %v143, %v142
    %v149 = vsel %vm80, %v124, 0
    %151 = vmatprep.subr.bf16.mxu0 0
    %152 = vmatpush1.bf16.msra.mxu0 0
    %153 = vmatprep.subr.bf16.mxu0 0
    %154 = vmatpush1.bf16.msra.mxu0 0
    %155 = vmatprep.subr.bf16.mxu0 0
    %156 = vmatpush1.bf16.msra.mxu0 0
    %157 = vmatprep.subr.bf16.mxu0 0
    %158 = vmatpush1.bf16.msra.mxu0 0
    %159 = vmatprep.subr.bf16.mxu0 0
    %160 = vmatpush1.bf16.msra.mxu0 0
    %161 = vmatprep.subr.bf16.mxu0 0
    %162 = vmatpush1.bf16.msra.mxu0 0
    %163 = vmatprep.subr.bf16.mxu0 0
    %164 = vmatpush1.bf16.msra.mxu0 %v145
    %165 = vmatprep.subr.bf16.mxu0 0
    %166 = vmatpush1.bf16.msra.mxu0 %v144
    %167 = vmatprep.subr.bf16.mxu0 0
    %168 = vmatpush2.bf16.msra.mxu0 0
    %169 = vmatprep.subr.bf16.mxu0 0
    %170 = vmatpush2.bf16.msra.mxu0 0
    %171 = vmatprep.subr.bf16.mxu0 0
    %172 = vmatpush2.bf16.msra.mxu0 0
    %173 = vmatprep.subr.bf16.mxu0 0
    %174 = vmatpush2.bf16.msra.mxu0 0
    %175 = vmatprep.subr.bf16.mxu0 0
    %176 = vmatpush2.bf16.msra.mxu0 0
    %177 = vmatprep.subr.bf16.mxu0 0
    %178 = vmatpush2.bf16.msra.mxu0 0
    %179 = vmatprep.subr.bf16.mxu0 0
    %180 = vmatpush2.bf16.msra.mxu0 0
    %181 = vmatprep.subr.bf16.mxu0 0
    %182 = vmatpush2.bf16.msra.mxu0 0
    %183 = vmatprep.mubr.bf16.mxu0 0
    %184 = vmatmul.mubr.bf16.gmra.mxu0 %v149
    %v185 = vpop.f32.mrf.mxu0
    %v186 = vadd.f32 %v134, %v185
    %v187 = vpop.f32.mrf.mxu0
    %v188 = vpop.f32.mrf.mxu0
    %v189 = vadd.f32 %v134, %v188
    %v190 = vpop.f32.mrf.mxu0
    %191 = vdwg.mxu0
    %v192 = vld [vmem:[%s4] sm:$0xf]
    %v193 = vld [vmem:[%s4 + $0x4] sm:$0xf]
    %v194 = vld [vmem:[%s4 + $0x8] sm:$0xf]
    %v195 = vld [vmem:[%s4 + $0xc] sm:$0xf]
    %v196 = vld [vmem:[%s7] sm:$0x1]
    %v198 = vlaneseq
    %v199 = vshrl.u32 %v198, 7
    %v200 = vsub.s32 0, %v199
    %v201 = vrot.slane %v196, %v200
    %v207 = vunpack.c.l.b16 %v192
    %v208 = vunpack.c.l.b16 %v193
    %v209 = vunpack.c.l.b16 %v194
    %v210 = vunpack.c.l.b16 %v195
    %v211 = vpack.c.b16 %v208, %v207
    %v212 = vpack.c.b16 %v210, %v209
    %215 = vmatprep.subr.bf16.mxu0 0
    %216 = vmatpush1.bf16.msra.mxu0 0
    %217 = vmatprep.subr.bf16.mxu0 0
    %218 = vmatpush1.bf16.msra.mxu0 0
    %219 = vmatprep.subr.bf16.mxu0 0
    %220 = vmatpush1.bf16.msra.mxu0 0
    %221 = vmatprep.subr.bf16.mxu0 0
    %222 = vmatpush1.bf16.msra.mxu0 0
    %223 = vmatprep.subr.bf16.mxu0 0
    %224 = vmatpush1.bf16.msra.mxu0 0
    %225 = vmatprep.subr.bf16.mxu0 0
    %226 = vmatpush1.bf16.msra.mxu0 0
    %227 = vmatprep.subr.bf16.mxu0 0
    %228 = vmatpush1.bf16.msra.mxu0 %v212
    %229 = vmatprep.subr.bf16.mxu0 0
    %230 = vmatpush1.bf16.msra.mxu0 %v211
    %231 = vmatprep.subr.bf16.mxu0 0
    %232 = vmatpush2.bf16.msra.mxu0 0
    %233 = vmatprep.subr.bf16.mxu0 0
    %234 = vmatpush2.bf16.msra.mxu0 0
    %235 = vmatprep.subr.bf16.mxu0 0
    %236 = vmatpush2.bf16.msra.mxu0 0
    %237 = vmatprep.subr.bf16.mxu0 0
    %238 = vmatpush2.bf16.msra.mxu0 0
    %239 = vmatprep.subr.bf16.mxu0 0
    %240 = vmatpush2.bf16.msra.mxu0 0
    %241 = vmatprep.subr.bf16.mxu0 0
    %242 = vmatpush2.bf16.msra.mxu0 0
    %243 = vmatprep.subr.bf16.mxu0 0
    %244 = vmatpush2.bf16.msra.mxu0 0
    %245 = vmatprep.subr.bf16.mxu0 0
    %246 = vmatpush2.bf16.msra.mxu0 0
    %247 = vmatprep.mubr.bf16.mxu0 0
    %248 = vmatmul.mubr.bf16.gmra.mxu0 %v149
    %v249 = vpop.f32.mrf.mxu0
    %v250 = vadd.f32 %v201, %v249
    %v251 = vpop.f32.mrf.mxu0
    %v252 = vpop.f32.mrf.mxu0
    %v253 = vadd.f32 %v201, %v252
    %v254 = vpop.f32.mrf.mxu0
    %255 = vdwg.mxu0
    %v256 = vld [vmem:[%s5] sm:$0xf]
    %v257 = vld [vmem:[%s5 + $0x4] sm:$0xf]
    %v258 = vld [vmem:[%s5 + $0x8] sm:$0xf]
    %v259 = vld [vmem:[%s5 + $0xc] sm:$0xf]
    %v260 = vld [vmem:[%s8] sm:$0x1]
    %v262 = vlaneseq
    %v263 = vshrl.u32 %v262, 7
    %v264 = vsub.s32 0, %v263
    %v265 = vrot.slane %v260, %v264
    %v271 = vunpack.c.l.b16 %v256
    %v272 = vunpack.c.l.b16 %v257
    %v273 = vunpack.c.l.b16 %v258
    %v274 = vunpack.c.l.b16 %v259
    %v275 = vpack.c.b16 %v272, %v271
    %v276 = vpack.c.b16 %v274, %v273
    %279 = vmatprep.subr.bf16.mxu0 0
    %280 = vmatpush1.bf16.msra.mxu0 0
    %281 = vmatprep.subr.bf16.mxu0 0
    %282 = vmatpush1.bf16.msra.mxu0 0
    %283 = vmatprep.subr.bf16.mxu0 0
    %284 = vmatpush1.bf16.msra.mxu0 0
    %285 = vmatprep.subr.bf16.mxu0 0
    %286 = vmatpush1.bf16.msra.mxu0 0
    %287 = vmatprep.subr.bf16.mxu0 0
    %288 = vmatpush1.bf16.msra.mxu0 0
    %289 = vmatprep.subr.bf16.mxu0 0
    %290 = vmatpush1.bf16.msra.mxu0 0
    %291 = vmatprep.subr.bf16.mxu0 0
    %292 = vmatpush1.bf16.msra.mxu0 %v276
    %293 = vmatprep.subr.bf16.mxu0 0
    %294 = vmatpush1.bf16.msra.mxu0 %v275
    %295 = vmatprep.subr.bf16.mxu0 0
    %296 = vmatpush2.bf16.msra.mxu0 0
    %297 = vmatprep.subr.bf16.mxu0 0
    %298 = vmatpush2.bf16.msra.mxu0 0
    %299 = vmatprep.subr.bf16.mxu0 0
    %300 = vmatpush2.bf16.msra.mxu0 0
    %301 = vmatprep.subr.bf16.mxu0 0
    %302 = vmatpush2.bf16.msra.mxu0 0
    %303 = vmatprep.subr.bf16.mxu0 0
    %304 = vmatpush2.bf16.msra.mxu0 0
    %305 = vmatprep.subr.bf16.mxu0 0
    %306 = vmatpush2.bf16.msra.mxu0 0
    %307 = vmatprep.subr.bf16.mxu0 0
    %308 = vmatpush2.bf16.msra.mxu0 0
    %309 = vmatprep.subr.bf16.mxu0 0
    %310 = vmatpush2.bf16.msra.mxu0 0
    %311 = vmatprep.mubr.bf16.mxu0 0
    %312 = vmatmul.mubr.bf16.gmra.mxu0 %v149
    %v313 = vpop.f32.mrf.mxu0
    %v314 = vadd.f32 %v265, %v313
    %v315 = vpop.f32.mrf.mxu0
    %v316 = vpop.f32.mrf.mxu0
    %v317 = vadd.f32 %v265, %v316
    %v318 = vpop.f32.mrf.mxu0
    %319 = vdwg.mxu0
    %v320 = vpack.c.bf16 %v186, %v186
    %v321 = vpack.c.bf16 %v189, %v189
    %v322 = vpack.c.bf16 %v250, %v250
    %v323 = vpack.c.bf16 %v253, %v253
    %v324 = vpack.c.bf16 %v314, %v314
    %v325 = vpack.c.bf16 %v317, %v317
    %vm326 = vcmask 64512
    %v328 = vsel %vm326, %v320, 0
    %v331 = vsel %vm326, %v322, 0
    %333 = vmatprep.subr.bf16.mxu0 0
    %334 = vmatpush1.bf16.xpose.msra.mxu0 0
    %335 = vmatprep.subr.bf16.mxu0 0
    %336 = vmatpush1.bf16.xpose.msra.mxu0 0
    %337 = vmatprep.subr.bf16.mxu0 0
    %338 = vmatpush1.bf16.xpose.msra.mxu0 0
    %339 = vmatprep.subr.bf16.mxu0 0
    %340 = vmatpush1.bf16.xpose.msra.mxu0 0
    %341 = vmatprep.subr.bf16.mxu0 0
    %342 = vmatpush1.bf16.xpose.msra.mxu0 0
    %343 = vmatprep.subr.bf16.mxu0 0
    %344 = vmatpush1.bf16.xpose.msra.mxu0 0
    %345 = vmatprep.subr.bf16.mxu0 0
    %346 = vmatpush1.bf16.xpose.msra.mxu0 0
    %347 = vmatprep.subr.bf16.mxu0 0
    %348 = vmatpush1.bf16.xpose.msra.mxu0 %v331
    %349 = vmatprep.subr.bf16.mxu0 0
    %350 = vmatpush2.bf16.xpose.msra.mxu0 0
    %351 = vmatprep.subr.bf16.mxu0 0
    %352 = vmatpush2.bf16.xpose.msra.mxu0 0
    %353 = vmatprep.subr.bf16.mxu0 0
    %354 = vmatpush2.bf16.xpose.msra.mxu0 0
    %355 = vmatprep.subr.bf16.mxu0 0
    %356 = vmatpush2.bf16.xpose.msra.mxu0 0
    %357 = vmatprep.subr.bf16.mxu0 0
    %358 = vmatpush2.bf16.xpose.msra.mxu0 0
    %359 = vmatprep.subr.bf16.mxu0 0
    %360 = vmatpush2.bf16.xpose.msra.mxu0 0
    %361 = vmatprep.subr.bf16.mxu0 0
    %362 = vmatpush2.bf16.xpose.msra.mxu0 0
    %363 = vmatprep.subr.bf16.mxu0 0
    %364 = vmatpush2.bf16.xpose.msra.mxu0 0
    %365 = vmatprep.mubr.bf16.mxu0 0
    %366 = vmatmul.mubr.bf16.gmra.mxu0 %v328
    %v367 = vpop.f32.mrf.mxu0
    %v368 = vadd.f32 0.0, %v367
    %v369 = vpop.f32.mrf.mxu0
    %v370 = vpop.f32.mrf.mxu0
    %v371 = vpop.f32.mrf.mxu0
    %372 = vdwg.mxu0
    %v374 = vsel %vm326, %v321, 0
    %v377 = vsel %vm326, %v323, 0
    %379 = vmatprep.subr.bf16.mxu0 0
    %380 = vmatpush1.bf16.xpose.msra.mxu0 0
    %381 = vmatprep.subr.bf16.mxu0 0
    %382 = vmatpush1.bf16.xpose.msra.mxu0 0
    %383 = vmatprep.subr.bf16.mxu0 0
    %384 = vmatpush1.bf16.xpose.msra.mxu0 0
    %385 = vmatprep.subr.bf16.mxu0 0
    %386 = vmatpush1.bf16.xpose.msra.mxu0 0
    %387 = vmatprep.subr.bf16.mxu0 0
    %388 = vmatpush1.bf16.xpose.msra.mxu0 0
    %389 = vmatprep.subr.bf16.mxu0 0
    %390 = vmatpush1.bf16.xpose.msra.mxu0 0
    %391 = vmatprep.subr.bf16.mxu0 0
    %392 = vmatpush1.bf16.xpose.msra.mxu0 0
    %393 = vmatprep.subr.bf16.mxu0 0
    %394 = vmatpush1.bf16.xpose.msra.mxu0 %v377
    %395 = vmatprep.subr.bf16.mxu0 0
    %396 = vmatpush2.bf16.xpose.msra.mxu0 0
    %397 = vmatprep.subr.bf16.mxu0 0
    %398 = vmatpush2.bf16.xpose.msra.mxu0 0
    %399 = vmatprep.subr.bf16.mxu0 0
    %400 = vmatpush2.bf16.xpose.msra.mxu0 0
    %401 = vmatprep.subr.bf16.mxu0 0
    %402 = vmatpush2.bf16.xpose.msra.mxu0 0
    %403 = vmatprep.subr.bf16.mxu0 0
    %404 = vmatpush2.bf16.xpose.msra.mxu0 0
    %405 = vmatprep.subr.bf16.mxu0 0
    %406 = vmatpush2.bf16.xpose.msra.mxu0 0
    %407 = vmatprep.subr.bf16.mxu0 0
    %408 = vmatpush2.bf16.xpose.msra.mxu0 0
    %409 = vmatprep.subr.bf16.mxu0 0
    %410 = vmatpush2.bf16.xpose.msra.mxu0 0
    %411 = vmatprep.mubr.bf16.mxu0 0
    %412 = vmatmul.mubr.bf16.gmra.mxu0 %v374
    %v413 = vpop.f32.mrf.mxu0
    %v414 = vadd.f32 0.0, %v413
    %v415 = vpop.f32.mrf.mxu0
    %v416 = vpop.f32.mrf.mxu0
    %v417 = vpop.f32.mrf.mxu0
    %418 = vdwg.mxu0
    %v419 = vmul.f32 %v368, 0.35355338
    %v420 = vmul.f32 %v414, 0.35355338
    %v421 = vadd.f32 %v419, %v77
    %v422 = vadd.f32 %v420, %v77
    %v423 = vsel %vm326, %v421, -inf
    %424 = vmax.xlane.f32.xlu0 %v423
    %v425 = vpop.xlane.xlu0 %424
    %v426 = vsel %vm326, %v422, -inf
    %427 = vmax.xlane.f32.xlu0 %v426
    %v428 = vpop.xlane.xlu0 %427
    %v429 = vsub.f32 %v421, %v425
    %v430 = vsub.f32 %v422, %v428
    %v431 = vmul.f32 %v429, 1.442695
    %v432 = vpow.pop %v431
    %v433 = vmul.f32 %v430, 1.442695
    %v434 = vpow.pop %v433
    %v435 = vsel %vm326, %v432, 0.0
    %436 = vadd.xlane.f32.xlu0 %v435
    %v437 = vpop.xlane.xlu0 %436
    %v438 = vsel %vm326, %v434, 0.0
    %439 = vadd.xlane.f32.xlu0 %v438
    %v440 = vpop.xlane.xlu0 %439
    %v441 = vrcp.pop %v437
    %v442 = vrcp.pop %v440
    %v443 = vmul.f32 %v432, %v441
    %v444 = vmul.f32 %v434, %v442
    %v445 = vpack.c.bf16 %v443, %v443
    %v446 = vpack.c.bf16 %v444, %v444
    %v448 = vsel %vm326, %v445, 0
    %vm450 = vcmask 1043456
    %v452 = vsel %vm450, %v324, 0
    %454 = vmatprep.subr.bf16.mxu0 0
    %455 = vmatpush1.bf16.msra.mxu0 0
    %456 = vmatprep.subr.bf16.mxu0 0
    %457 = vmatpush1.bf16.msra.mxu0 0
    %458 = vmatprep.subr.bf16.mxu0 0
    %459 = vmatpush1.bf16.msra.mxu0 0
    %460 = vmatprep.subr.bf16.mxu0 0
    %461 = vmatpush1.bf16.msra.mxu0 0
    %462 = vmatprep.subr.bf16.mxu0 0
    %463 = vmatpush1.bf16.msra.mxu0 0
    %464 = vmatprep.subr.bf16.mxu0 0
    %465 = vmatpush1.bf16.msra.mxu0 0
    %466 = vmatprep.subr.bf16.mxu0 0
    %467 = vmatpush1.bf16.msra.mxu0 0
    %468 = vmatprep.subr.bf16.mxu0 0
    %469 = vmatpush1.bf16.msra.mxu0 %v452
    %470 = vmatprep.subr.bf16.mxu0 0
    %471 = vmatpush2.bf16.msra.mxu0 0
    %472 = vmatprep.subr.bf16.mxu0 0
    %473 = vmatpush2.bf16.msra.mxu0 0
    %474 = vmatprep.subr.bf16.mxu0 0
    %475 = vmatpush2.bf16.msra.mxu0 0
    %476 = vmatprep.subr.bf16.mxu0 0
    %477 = vmatpush2.bf16.msra.mxu0 0
    %478 = vmatprep.subr.bf16.mxu0 0
    %479 = vmatpush2.bf16.msra.mxu0 0
    %480 = vmatprep.subr.bf16.mxu0 0
    %481 = vmatpush2.bf16.msra.mxu0 0
    %482 = vmatprep.subr.bf16.mxu0 0
    %483 = vmatpush2.bf16.msra.mxu0 0
    %484 = vmatprep.subr.bf16.mxu0 0
    %485 = vmatpush2.bf16.msra.mxu0 0
    %486 = vmatprep.mubr.bf16.mxu0 0
    %487 = vmatmul.mubr.bf16.gmra.mxu0 %v448
    %v488 = vpop.f32.mrf.mxu0
    %v489 = vadd.f32 0.0, %v488
    %v490 = vpop.f32.mrf.mxu0
    %v491 = vpop.f32.mrf.mxu0
    %v492 = vpop.f32.mrf.mxu0
    %493 = vdwg.mxu0
    %v495 = vsel %vm326, %v446, 0
    %v498 = vsel %vm450, %v325, 0
    %500 = vmatprep.subr.bf16.mxu0 0
    %501 = vmatpush1.bf16.msra.mxu0 0
    %502 = vmatprep.subr.bf16.mxu0 0
    %503 = vmatpush1.bf16.msra.mxu0 0
    %504 = vmatprep.subr.bf16.mxu0 0
    %505 = vmatpush1.bf16.msra.mxu0 0
    %506 = vmatprep.subr.bf16.mxu0 0
    %507 = vmatpush1.bf16.msra.mxu0 0
    %508 = vmatprep.subr.bf16.mxu0 0
    %509 = vmatpush1.bf16.msra.mxu0 0
    %510 = vmatprep.subr.bf16.mxu0 0
    %511 = vmatpush1.bf16.msra.mxu0 0
    %512 = vmatprep.subr.bf16.mxu0 0
    %513 = vmatpush1.bf16.msra.mxu0 0
    %514 = vmatprep.subr.bf16.mxu0 0
    %515 = vmatpush1.bf16.msra.mxu0 %v498
    %516 = vmatprep.subr.bf16.mxu0 0
    %517 = vmatpush2.bf16.msra.mxu0 0
    %518 = vmatprep.subr.bf16.mxu0 0
    %519 = vmatpush2.bf16.msra.mxu0 0
    %520 = vmatprep.subr.bf16.mxu0 0
    %521 = vmatpush2.bf16.msra.mxu0 0
    %522 = vmatprep.subr.bf16.mxu0 0
    %523 = vmatpush2.bf16.msra.mxu0 0
    %524 = vmatprep.subr.bf16.mxu0 0
    %525 = vmatpush2.bf16.msra.mxu0 0
    %526 = vmatprep.subr.bf16.mxu0 0
    %527 = vmatpush2.bf16.msra.mxu0 0
    %528 = vmatprep.subr.bf16.mxu0 0
    %529 = vmatpush2.bf16.msra.mxu0 0
    %530 = vmatprep.subr.bf16.mxu0 0
    %531 = vmatpush2.bf16.msra.mxu0 0
    %532 = vmatprep.mubr.bf16.mxu0 0
    %533 = vmatmul.mubr.bf16.gmra.mxu0 %v495
    %v534 = vpop.f32.mrf.mxu0
    %v535 = vadd.f32 0.0, %v534
    %v536 = vpop.f32.mrf.mxu0
    %v537 = vpop.f32.mrf.mxu0
    %v538 = vpop.f32.mrf.mxu0
    %539 = vdwg.mxu0
    %v540 = vpack.c.bf16 %v535, %v489
    %v541 = vld [vmem:[%s9] sm:$0xf]
    %s542 = scalar_lea.vmem %s3, 16
    %v543 = vld [vmem:[%s542] sm:$0xf]
    %v544 = vld [vmem:[%s542 + $0x4] sm:$0xf]
    %v545 = vld [vmem:[%s542 + $0x8] sm:$0xf]
    %v546 = vld [vmem:[%s542 + $0xc] sm:$0xf]
    %s547 = scalar_lea.vmem %s6, 1
    %v548 = vld [vmem:[%s547] sm:$0x1]
    %v550 = vlaneseq
    %v551 = vshrl.u32 %v550, 7
    %v552 = vsub.s32 0, %v551
    %v553 = vrot.slane %v548, %v552
    %v559 = vunpack.c.l.b16 %v543
    %v560 = vunpack.c.l.b16 %v544
    %v561 = vunpack.c.l.b16 %v545
    %v562 = vunpack.c.l.b16 %v546
    %v563 = vpack.c.b16 %v560, %v559
    %v564 = vpack.c.b16 %v562, %v561
    %567 = vmatprep.subr.bf16.mxu0 0
    %568 = vmatpush1.bf16.msra.mxu0 0
    %569 = vmatprep.subr.bf16.mxu0 0
    %570 = vmatpush1.bf16.msra.mxu0 0
    %571 = vmatprep.subr.bf16.mxu0 0
    %572 = vmatpush1.bf16.msra.mxu0 0
    %573 = vmatprep.subr.bf16.mxu0 0
    %574 = vmatpush1.bf16.msra.mxu0 0
    %575 = vmatprep.subr.bf16.mxu0 0
    %576 = vmatpush1.bf16.msra.mxu0 0
    %577 = vmatprep.subr.bf16.mxu0 0
    %578 = vmatpush1.bf16.msra.mxu0 0
    %579 = vmatprep.subr.bf16.mxu0 0
    %580 = vmatpush1.bf16.msra.mxu0 %v564
    %581 = vmatprep.subr.bf16.mxu0 0
    %582 = vmatpush1.bf16.msra.mxu0 %v563
    %583 = vmatprep.subr.bf16.mxu0 0
    %584 = vmatpush2.bf16.msra.mxu0 0
    %585 = vmatprep.subr.bf16.mxu0 0
    %586 = vmatpush2.bf16.msra.mxu0 0
    %587 = vmatprep.subr.bf16.mxu0 0
    %588 = vmatpush2.bf16.msra.mxu0 0
    %589 = vmatprep.subr.bf16.mxu0 0
    %590 = vmatpush2.bf16.msra.mxu0 0
    %591 = vmatprep.subr.bf16.mxu0 0
    %592 = vmatpush2.bf16.msra.mxu0 0
    %593 = vmatprep.subr.bf16.mxu0 0
    %594 = vmatpush2.bf16.msra.mxu0 0
    %595 = vmatprep.subr.bf16.mxu0 0
    %596 = vmatpush2.bf16.msra.mxu0 0
    %597 = vmatprep.subr.bf16.mxu0 0
    %598 = vmatpush2.bf16.msra.mxu0 0
    %599 = vmatprep.mubr.bf16.mxu0 0
    %600 = vmatmul.mubr.bf16.gmra.mxu0 %v149
    %v601 = vpop.f32.mrf.mxu0
    %v602 = vadd.f32 %v553, %v601
    %v603 = vpop.f32.mrf.mxu0
    %v604 = vpop.f32.mrf.mxu0
    %v605 = vadd.f32 %v553, %v604
    %v606 = vpop.f32.mrf.mxu0
    %607 = vdwg.mxu0
    %s608 = scalar_lea.vmem %s4, 16
    %v609 = vld [vmem:[%s608] sm:$0xf]
    %v610 = vld [vmem:[%s608 + $0x4] sm:$0xf]
    %v611 = vld [vmem:[%s608 + $0x8] sm:$0xf]
    %v612 = vld [vmem:[%s608 + $0xc] sm:$0xf]
    %s613 = scalar_lea.vmem %s7, 1
    %v614 = vld [vmem:[%s613] sm:$0x1]
    %v616 = vlaneseq
    %v617 = vshrl.u32 %v616, 7
    %v618 = vsub.s32 0, %v617
    %v619 = vrot.slane %v614, %v618
    %v625 = vunpack.c.l.b16 %v609
    %v626 = vunpack.c.l.b16 %v610
    %v627 = vunpack.c.l.b16 %v611
    %v628 = vunpack.c.l.b16 %v612
    %v629 = vpack.c.b16 %v626, %v625
    %v630 = vpack.c.b16 %v628, %v627
    %633 = vmatprep.subr.bf16.mxu0 0
    %634 = vmatpush1.bf16.msra.mxu0 0
    %635 = vmatprep.subr.bf16.mxu0 0
    %636 = vmatpush1.bf16.msra.mxu0 0
    %637 = vmatprep.subr.bf16.mxu0 0
    %638 = vmatpush1.bf16.msra.mxu0 0
    %639 = vmatprep.subr.bf16.mxu0 0
    %640 = vmatpush1.bf16.msra.mxu0 0
    %641 = vmatprep.subr.bf16.mxu0 0
    %642 = vmatpush1.bf16.msra.mxu0 0
    %643 = vmatprep.subr.bf16.mxu0 0
    %644 = vmatpush1.bf16.msra.mxu0 0
    %645 = vmatprep.subr.bf16.mxu0 0
    %646 = vmatpush1.bf16.msra.mxu0 %v630
    %647 = vmatprep.subr.bf16.mxu0 0
    %648 = vmatpush1.bf16.msra.mxu0 %v629
    %649 = vmatprep.subr.bf16.mxu0 0
    %650 = vmatpush2.bf16.msra.mxu0 0
    %651 = vmatprep.subr.bf16.mxu0 0
    %652 = vmatpush2.bf16.msra.mxu0 0
    %653 = vmatprep.subr.bf16.mxu0 0
    %654 = vmatpush2.bf16.msra.mxu0 0
    %655 = vmatprep.subr.bf16.mxu0 0
    %656 = vmatpush2.bf16.msra.mxu0 0
    %657 = vmatprep.subr.bf16.mxu0 0
    %658 = vmatpush2.bf16.msra.mxu0 0
    %659 = vmatprep.subr.bf16.mxu0 0
    %660 = vmatpush2.bf16.msra.mxu0 0
    %661 = vmatprep.subr.bf16.mxu0 0
    %662 = vmatpush2.bf16.msra.mxu0 0
    %663 = vmatprep.subr.bf16.mxu0 0
    %664 = vmatpush2.bf16.msra.mxu0 0
    %665 = vmatprep.mubr.bf16.mxu0 0
    %666 = vmatmul.mubr.bf16.gmra.mxu0 %v149
    %v667 = vpop.f32.mrf.mxu0
    %v668 = vadd.f32 %v619, %v667
    %v669 = vpop.f32.mrf.mxu0
    %v670 = vpop.f32.mrf.mxu0
    %v671 = vadd.f32 %v619, %v670
    %v672 = vpop.f32.mrf.mxu0
    %673 = vdwg.mxu0
    %s674 = scalar_lea.vmem %s5, 16
    %v675 = vld [vmem:[%s674] sm:$0xf]
    %v676 = vld [vmem:[%s674 + $0x4] sm:$0xf]
    %v677 = vld [vmem:[%s674 + $0x8] sm:$0xf]
    %v678 = vld [vmem:[%s674 + $0xc] sm:$0xf]
    %s679 = scalar_lea.vmem %s8, 1
    %v680 = vld [vmem:[%s679] sm:$0x1]
    %v682 = vlaneseq
    %v683 = vshrl.u32 %v682, 7
    %v684 = vsub.s32 0, %v683
    %v685 = vrot.slane %v680, %v684
    %v691 = vunpack.c.l.b16 %v675
    %v692 = vunpack.c.l.b16 %v676
    %v693 = vunpack.c.l.b16 %v677
    %v694 = vunpack.c.l.b16 %v678
    %v695 = vpack.c.b16 %v692, %v691
    %v696 = vpack.c.b16 %v694, %v693
    %699 = vmatprep.subr.bf16.mxu0 0
    %700 = vmatpush1.bf16.msra.mxu0 0
    %701 = vmatprep.subr.bf16.mxu0 0
    %702 = vmatpush1.bf16.msra.mxu0 0
    %703 = vmatprep.subr.bf16.mxu0 0
    %704 = vmatpush1.bf16.msra.mxu0 0
    %705 = vmatprep.subr.bf16.mxu0 0
    %706 = vmatpush1.bf16.msra.mxu0 0
    %707 = vmatprep.subr.bf16.mxu0 0
    %708 = vmatpush1.bf16.msra.mxu0 0
    %709 = vmatprep.subr.bf16.mxu0 0
    %710 = vmatpush1.bf16.msra.mxu0 0
    %711 = vmatprep.subr.bf16.mxu0 0
    %712 = vmatpush1.bf16.msra.mxu0 %v696
    %713 = vmatprep.subr.bf16.mxu0 0
    %714 = vmatpush1.bf16.msra.mxu0 %v695
    %715 = vmatprep.subr.bf16.mxu0 0
    %716 = vmatpush2.bf16.msra.mxu0 0
    %717 = vmatprep.subr.bf16.mxu0 0
    %718 = vmatpush2.bf16.msra.mxu0 0
    %719 = vmatprep.subr.bf16.mxu0 0
    %720 = vmatpush2.bf16.msra.mxu0 0
    %721 = vmatprep.subr.bf16.mxu0 0
    %722 = vmatpush2.bf16.msra.mxu0 0
    %723 = vmatprep.subr.bf16.mxu0 0
    %724 = vmatpush2.bf16.msra.mxu0 0
    %725 = vmatprep.subr.bf16.mxu0 0
    %726 = vmatpush2.bf16.msra.mxu0 0
    %727 = vmatprep.subr.bf16.mxu0 0
    %728 = vmatpush2.bf16.msra.mxu0 0
    %729 = vmatprep.subr.bf16.mxu0 0
    %730 = vmatpush2.bf16.msra.mxu0 0
    %731 = vmatprep.mubr.bf16.mxu0 0
    %732 = vmatmul.mubr.bf16.gmra.mxu0 %v149
    %v733 = vpop.f32.mrf.mxu0
    %v734 = vadd.f32 %v685, %v733
    %v735 = vpop.f32.mrf.mxu0
    %v736 = vpop.f32.mrf.mxu0
    %v737 = vadd.f32 %v685, %v736
    %v738 = vpop.f32.mrf.mxu0
    %739 = vdwg.mxu0
    %v740 = vpack.c.bf16 %v602, %v602
    %v741 = vpack.c.bf16 %v605, %v605
    %v742 = vpack.c.bf16 %v668, %v668
    %v743 = vpack.c.bf16 %v671, %v671
    %v744 = vpack.c.bf16 %v734, %v734
    %v745 = vpack.c.bf16 %v737, %v737
    %v747 = vsel %vm326, %v740, 0
    %v750 = vsel %vm326, %v742, 0
    %752 = vmatprep.subr.bf16.mxu0 0
    %753 = vmatpush1.bf16.xpose.msra.mxu0 0
    %754 = vmatprep.subr.bf16.mxu0 0
    %755 = vmatpush1.bf16.xpose.msra.mxu0 0
    %756 = vmatprep.subr.bf16.mxu0 0
    %757 = vmatpush1.bf16.xpose.msra.mxu0 0
    %758 = vmatprep.subr.bf16.mxu0 0
    %759 = vmatpush1.bf16.xpose.msra.mxu0 0
    %760 = vmatprep.subr.bf16.mxu0 0
    %761 = vmatpush1.bf16.xpose.msra.mxu0 0
    %762 = vmatprep.subr.bf16.mxu0 0
    %763 = vmatpush1.bf16.xpose.msra.mxu0 0
    %764 = vmatprep.subr.bf16.mxu0 0
    %765 = vmatpush1.bf16.xpose.msra.mxu0 0
    %766 = vmatprep.subr.bf16.mxu0 0
    %767 = vmatpush1.bf16.xpose.msra.mxu0 %v750
    %768 = vmatprep.subr.bf16.mxu0 0
    %769 = vmatpush2.bf16.xpose.msra.mxu0 0
    %770 = vmatprep.subr.bf16.mxu0 0
    %771 = vmatpush2.bf16.xpose.msra.mxu0 0
    %772 = vmatprep.subr.bf16.mxu0 0
    %773 = vmatpush2.bf16.xpose.msra.mxu0 0
    %774 = vmatprep.subr.bf16.mxu0 0
    %775 = vmatpush2.bf16.xpose.msra.mxu0 0
    %776 = vmatprep.subr.bf16.mxu0 0
    %777 = vmatpush2.bf16.xpose.msra.mxu0 0
    %778 = vmatprep.subr.bf16.mxu0 0
    %779 = vmatpush2.bf16.xpose.msra.mxu0 0
    %780 = vmatprep.subr.bf16.mxu0 0
    %781 = vmatpush2.bf16.xpose.msra.mxu0 0
    %782 = vmatprep.subr.bf16.mxu0 0
    %783 = vmatpush2.bf16.xpose.msra.mxu0 0
    %784 = vmatprep.mubr.bf16.mxu0 0
    %785 = vmatmul.mubr.bf16.gmra.mxu0 %v747
    %v786 = vpop.f32.mrf.mxu0
    %v787 = vadd.f32 0.0, %v786
    %v788 = vpop.f32.mrf.mxu0
    %v789 = vpop.f32.mrf.mxu0
    %v790 = vpop.f32.mrf.mxu0
    %791 = vdwg.mxu0
    %v793 = vsel %vm326, %v741, 0
    %v796 = vsel %vm326, %v743, 0
    %798 = vmatprep.subr.bf16.mxu0 0
    %799 = vmatpush1.bf16.xpose.msra.mxu0 0
    %800 = vmatprep.subr.bf16.mxu0 0
    %801 = vmatpush1.bf16.xpose.msra.mxu0 0
    %802 = vmatprep.subr.bf16.mxu0 0
    %803 = vmatpush1.bf16.xpose.msra.mxu0 0
    %804 = vmatprep.subr.bf16.mxu0 0
    %805 = vmatpush1.bf16.xpose.msra.mxu0 0
    %806 = vmatprep.subr.bf16.mxu0 0
    %807 = vmatpush1.bf16.xpose.msra.mxu0 0
    %808 = vmatprep.subr.bf16.mxu0 0
    %809 = vmatpush1.bf16.xpose.msra.mxu0 0
    %810 = vmatprep.subr.bf16.mxu0 0
    %811 = vmatpush1.bf16.xpose.msra.mxu0 0
    %812 = vmatprep.subr.bf16.mxu0 0
    %813 = vmatpush1.bf16.xpose.msra.mxu0 %v796
    %814 = vmatprep.subr.bf16.mxu0 0
    %815 = vmatpush2.bf16.xpose.msra.mxu0 0
    %816 = vmatprep.subr.bf16.mxu0 0
    %817 = vmatpush2.bf16.xpose.msra.mxu0 0
    %818 = vmatprep.subr.bf16.mxu0 0
    %819 = vmatpush2.bf16.xpose.msra.mxu0 0
    %820 = vmatprep.subr.bf16.mxu0 0
    %821 = vmatpush2.bf16.xpose.msra.mxu0 0
    %822 = vmatprep.subr.bf16.mxu0 0
    %823 = vmatpush2.bf16.xpose.msra.mxu0 0
    %824 = vmatprep.subr.bf16.mxu0 0
    %825 = vmatpush2.bf16.xpose.msra.mxu0 0
    %826 = vmatprep.subr.bf16.mxu0 0
    %827 = vmatpush2.bf16.xpose.msra.mxu0 0
    %828 = vmatprep.subr.bf16.mxu0 0
    %829 = vmatpush2.bf16.xpose.msra.mxu0 0
    %830 = vmatprep.mubr.bf16.mxu0 0
    %831 = vmatmul.mubr.bf16.gmra.mxu0 %v793
    %v832 = vpop.f32.mrf.mxu0
    %v833 = vadd.f32 0.0, %v832
    %v834 = vpop.f32.mrf.mxu0
    %v835 = vpop.f32.mrf.mxu0
    %v836 = vpop.f32.mrf.mxu0
    %837 = vdwg.mxu0
    %v838 = vmul.f32 %v787, 0.35355338
    %v839 = vmul.f32 %v833, 0.35355338
    %v840 = vadd.f32 %v838, %v77
    %v841 = vadd.f32 %v839, %v77
    %v842 = vsel %vm326, %v840, -inf
    %843 = vmax.xlane.f32.xlu0 %v842
    %v844 = vpop.xlane.xlu0 %843
    %v845 = vsel %vm326, %v841, -inf
    %846 = vmax.xlane.f32.xlu0 %v845
    %v847 = vpop.xlane.xlu0 %846
    %v848 = vsub.f32 %v840, %v844
    %v849 = vsub.f32 %v841, %v847
    %v850 = vmul.f32 %v848, 1.442695
    %v851 = vpow.pop %v850
    %v852 = vmul.f32 %v849, 1.442695
    %v853 = vpow.pop %v852
    %v854 = vsel %vm326, %v851, 0.0
    %855 = vadd.xlane.f32.xlu0 %v854
    %v856 = vpop.xlane.xlu0 %855
    %v857 = vsel %vm326, %v853, 0.0
    %858 = vadd.xlane.f32.xlu0 %v857
    %v859 = vpop.xlane.xlu0 %858
    %v860 = vrcp.pop %v856
    %v861 = vrcp.pop %v859
    %v862 = vmul.f32 %v851, %v860
    %v863 = vmul.f32 %v853, %v861
    %v864 = vpack.c.bf16 %v862, %v862
    %v865 = vpack.c.bf16 %v863, %v863
    %v867 = vsel %vm326, %v864, 0
    %v870 = vsel %vm450, %v744, 0
    %872 = vmatprep.subr.bf16.mxu0 0
    %873 = vmatpush1.bf16.msra.mxu0 0
    %874 = vmatprep.subr.bf16.mxu0 0
    %875 = vmatpush1.bf16.msra.mxu0 0
    %876 = vmatprep.subr.bf16.mxu0 0
    %877 = vmatpush1.bf16.msra.mxu0 0
    %878 = vmatprep.subr.bf16.mxu0 0
    %879 = vmatpush1.bf16.msra.mxu0 0
    %880 = vmatprep.subr.bf16.mxu0 0
    %881 = vmatpush1.bf16.msra.mxu0 0
    %882 = vmatprep.subr.bf16.mxu0 0
    %883 = vmatpush1.bf16.msra.mxu0 0
    %884 = vmatprep.subr.bf16.mxu0 0
    %885 = vmatpush1.bf16.msra.mxu0 0
    %886 = vmatprep.subr.bf16.mxu0 0
    %887 = vmatpush1.bf16.msra.mxu0 %v870
    %888 = vmatprep.subr.bf16.mxu0 0
    %889 = vmatpush2.bf16.msra.mxu0 0
    %890 = vmatprep.subr.bf16.mxu0 0
    %891 = vmatpush2.bf16.msra.mxu0 0
    %892 = vmatprep.subr.bf16.mxu0 0
    %893 = vmatpush2.bf16.msra.mxu0 0
    %894 = vmatprep.subr.bf16.mxu0 0
    %895 = vmatpush2.bf16.msra.mxu0 0
    %896 = vmatprep.subr.bf16.mxu0 0
    %897 = vmatpush2.bf16.msra.mxu0 0
    %898 = vmatprep.subr.bf16.mxu0 0
    %899 = vmatpush2.bf16.msra.mxu0 0
    %900 = vmatprep.subr.bf16.mxu0 0
    %901 = vmatpush2.bf16.msra.mxu0 0
    %902 = vmatprep.subr.bf16.mxu0 0
    %903 = vmatpush2.bf16.msra.mxu0 0
    %904 = vmatprep.mubr.bf16.mxu0 0
    %905 = vmatmul.mubr.bf16.gmra.mxu0 %v867
    %v906 = vpop.f32.mrf.mxu0
    %v907 = vadd.f32 0.0, %v906
    %v908 = vpop.f32.mrf.mxu0
    %v909 = vpop.f32.mrf.mxu0
    %v910 = vpop.f32.mrf.mxu0
    %911 = vdwg.mxu0
    %v913 = vsel %vm326, %v865, 0
    %v916 = vsel %vm450, %v745, 0
    %918 = vmatprep.subr.bf16.mxu0 0
    %919 = vmatpush1.bf16.msra.mxu0 0
    %920 = vmatprep.subr.bf16.mxu0 0
    %921 = vmatpush1.bf16.msra.mxu0 0
    %922 = vmatprep.subr.bf16.mxu0 0
    %923 = vmatpush1.bf16.msra.mxu0 0
    %924 = vmatprep.subr.bf16.mxu0 0
    %925 = vmatpush1.bf16.msra.mxu0 0
    %926 = vmatprep.subr.bf16.mxu0 0
    %927 = vmatpush1.bf16.msra.mxu0 0
    %928 = vmatprep.subr.bf16.mxu0 0
    %929 = vmatpush1.bf16.msra.mxu0 0
    %930 = vmatprep.subr.bf16.mxu0 0
    %931 = vmatpush1.bf16.msra.mxu0 0
    %932 = vmatprep.subr.bf16.mxu0 0
    %933 = vmatpush1.bf16.msra.mxu0 %v916
    %934 = vmatprep.subr.bf16.mxu0 0
    %935 = vmatpush2.bf16.msra.mxu0 0
    %936 = vmatprep.subr.bf16.mxu0 0
    %937 = vmatpush2.bf16.msra.mxu0 0
    %938 = vmatprep.subr.bf16.mxu0 0
    %939 = vmatpush2.bf16.msra.mxu0 0
    %940 = vmatprep.subr.bf16.mxu0 0
    %941 = vmatpush2.bf16.msra.mxu0 0
    %942 = vmatprep.subr.bf16.mxu0 0
    %943 = vmatpush2.bf16.msra.mxu0 0
    %944 = vmatprep.subr.bf16.mxu0 0
    %945 = vmatpush2.bf16.msra.mxu0 0
    %946 = vmatprep.subr.bf16.mxu0 0
    %947 = vmatpush2.bf16.msra.mxu0 0
    %948 = vmatprep.subr.bf16.mxu0 0
    %949 = vmatpush2.bf16.msra.mxu0 0
    %950 = vmatprep.mubr.bf16.mxu0 0
    %951 = vmatmul.mubr.bf16.gmra.mxu0 %v913
    %v952 = vpop.f32.mrf.mxu0
    %v953 = vadd.f32 0.0, %v952
    %v954 = vpop.f32.mrf.mxu0
    %v955 = vpop.f32.mrf.mxu0
    %v956 = vpop.f32.mrf.mxu0
    %957 = vdwg.mxu0
    %v958 = vpack.c.bf16 %v953, %v907
    %s959 = scalar_lea.vmem %s9, 4
    %v960 = vld [vmem:[%s959] sm:$0xf]
    %v962 = vsel %vm326, %v958, 0
    %v965 = vsel %vm450, %v960, 0
    %967 = vmatprep.subr.bf16.mxu0 0
    %968 = vmatpush1.bf16.msra.mxu0 0
    %969 = vmatprep.subr.bf16.mxu0 0
    %970 = vmatpush1.bf16.msra.mxu0 0
    %971 = vmatprep.subr.bf16.mxu0 0
    %972 = vmatpush1.bf16.msra.mxu0 0
    %973 = vmatprep.subr.bf16.mxu0 0
    %974 = vmatpush1.bf16.msra.mxu0 0
    %975 = vmatprep.subr.bf16.mxu0 0
    %976 = vmatpush1.bf16.msra.mxu0 0
    %977 = vmatprep.subr.bf16.mxu0 0
    %978 = vmatpush1.bf16.msra.mxu0 0
    %979 = vmatprep.subr.bf16.mxu0 0
    %980 = vmatpush1.bf16.msra.mxu0 0
    %981 = vmatprep.subr.bf16.mxu0 0
    %982 = vmatpush1.bf16.msra.mxu0 %v965
    %983 = vmatprep.subr.bf16.mxu0 0
    %984 = vmatpush2.bf16.msra.mxu0 0
    %985 = vmatprep.subr.bf16.mxu0 0
    %986 = vmatpush2.bf16.msra.mxu0 0
    %987 = vmatprep.subr.bf16.mxu0 0
    %988 = vmatpush2.bf16.msra.mxu0 0
    %989 = vmatprep.subr.bf16.mxu0 0
    %990 = vmatpush2.bf16.msra.mxu0 0
    %991 = vmatprep.subr.bf16.mxu0 0
    %992 = vmatpush2.bf16.msra.mxu0 0
    %993 = vmatprep.subr.bf16.mxu0 0
    %994 = vmatpush2.bf16.msra.mxu0 0
    %995 = vmatprep.subr.bf16.mxu0 0
    %996 = vmatpush2.bf16.msra.mxu0 0
    %997 = vmatprep.subr.bf16.mxu0 0
    %998 = vmatpush2.bf16.msra.mxu0 0
    %999 = vmatprep.mubr.bf16.mxu0 0
    %1000 = vmatmul.mubr.bf16.gmra.mxu0 %v962
    %v1001 = vpop.f32.mrf.mxu0
    %v1002 = vadd.f32 0.0, %v1001
    %v1003 = vpop.f32.mrf.mxu0
    %v1004 = vpop.f32.mrf.mxu0
    %v1005 = vadd.f32 0.0, %v1004
    %v1006 = vpop.f32.mrf.mxu0
    %1007 = vdwg.mxu0
    %v1009 = vsel %vm326, %v540, 0
    %v1012 = vsel %vm450, %v541, 0
    %1014 = vmatprep.subr.bf16.mxu0 0
    %1015 = vmatpush1.bf16.msra.mxu0 0
    %1016 = vmatprep.subr.bf16.mxu0 0
    %1017 = vmatpush1.bf16.msra.mxu0 0
    %1018 = vmatprep.subr.bf16.mxu0 0
    %1019 = vmatpush1.bf16.msra.mxu0 0
    %1020 = vmatprep.subr.bf16.mxu0 0
    %1021 = vmatpush1.bf16.msra.mxu0 0
    %1022 = vmatprep.subr.bf16.mxu0 0
    %1023 = vmatpush1.bf16.msra.mxu0 0
    %1024 = vmatprep.subr.bf16.mxu0 0
    %1025 = vmatpush1.bf16.msra.mxu0 0
    %1026 = vmatprep.subr.bf16.mxu0 0
    %1027 = vmatpush1.bf16.msra.mxu0 0
    %1028 = vmatprep.subr.bf16.mxu0 0
    %1029 = vmatpush1.bf16.msra.mxu0 %v1012
    %1030 = vmatprep.subr.bf16.mxu0 0
    %1031 = vmatpush2.bf16.msra.mxu0 0
    %1032 = vmatprep.subr.bf16.mxu0 0
    %1033 = vmatpush2.bf16.msra.mxu0 0
    %1034 = vmatprep.subr.bf16.mxu0 0
    %1035 = vmatpush2.bf16.msra.mxu0 0
    %1036 = vmatprep.subr.bf16.mxu0 0
    %1037 = vmatpush2.bf16.msra.mxu0 0
    %1038 = vmatprep.subr.bf16.mxu0 0
    %1039 = vmatpush2.bf16.msra.mxu0 0
    %1040 = vmatprep.subr.bf16.mxu0 0
    %1041 = vmatpush2.bf16.msra.mxu0 0
    %1042 = vmatprep.subr.bf16.mxu0 0
    %1043 = vmatpush2.bf16.msra.mxu0 0
    %1044 = vmatprep.subr.bf16.mxu0 0
    %1045 = vmatpush2.bf16.msra.mxu0 0
    %1046 = vmatprep.mubr.bf16.mxu0 0
    %1047 = vmatmul.mubr.bf16.gmra.mxu0 %v1009
    %v1048 = vpop.f32.mrf.mxu0
    %v1049 = vadd.f32 %v1002, %v1048
    %v1050 = vpop.f32.mrf.mxu0
    %v1051 = vpop.f32.mrf.mxu0
    %v1052 = vadd.f32 %v1005, %v1051
    %v1053 = vpop.f32.mrf.mxu0
    %1054 = vdwg.mxu0
    %s1055 = scalar_lea.vmem %s3, 32
    %v1056 = vld [vmem:[%s1055] sm:$0xf]
    %v1057 = vld [vmem:[%s1055 + $0x4] sm:$0xf]
    %v1058 = vld [vmem:[%s1055 + $0x8] sm:$0xf]
    %v1059 = vld [vmem:[%s1055 + $0xc] sm:$0xf]
    %s1060 = scalar_lea.vmem %s6, 2
    %v1061 = vld [vmem:[%s1060] sm:$0x1]
    %v1063 = vlaneseq
    %v1064 = vshrl.u32 %v1063, 7
    %v1065 = vsub.s32 0, %v1064
    %v1066 = vrot.slane %v1061, %v1065
    %v1072 = vunpack.c.l.b16 %v1056
    %v1073 = vunpack.c.l.b16 %v1057
    %v1074 = vunpack.c.l.b16 %v1058
    %v1075 = vunpack.c.l.b16 %v1059
    %v1076 = vpack.c.b16 %v1073, %v1072
    %v1077 = vpack.c.b16 %v1075, %v1074
    %1080 = vmatprep.subr.bf16.mxu0 0
    %1081 = vmatpush1.bf16.msra.mxu0 0
    %1082 = vmatprep.subr.bf16.mxu0 0
    %1083 = vmatpush1.bf16.msra.mxu0 0
    %1084 = vmatprep.subr.bf16.mxu0 0
    %1085 = vmatpush1.bf16.msra.mxu0 0
    %1086 = vmatprep.subr.bf16.mxu0 0
    %1087 = vmatpush1.bf16.msra.mxu0 0
    %1088 = vmatprep.subr.bf16.mxu0 0
    %1089 = vmatpush1.bf16.msra.mxu0 0
    %1090 = vmatprep.subr.bf16.mxu0 0
    %1091 = vmatpush1.bf16.msra.mxu0 0
    %1092 = vmatprep.subr.bf16.mxu0 0
    %1093 = vmatpush1.bf16.msra.mxu0 %v1077
    %1094 = vmatprep.subr.bf16.mxu0 0
    %1095 = vmatpush1.bf16.msra.mxu0 %v1076
    %1096 = vmatprep.subr.bf16.mxu0 0
    %1097 = vmatpush2.bf16.msra.mxu0 0
    %1098 = vmatprep.subr.bf16.mxu0 0
    %1099 = vmatpush2.bf16.msra.mxu0 0
    %1100 = vmatprep.subr.bf16.mxu0 0
    %1101 = vmatpush2.bf16.msra.mxu0 0
    %1102 = vmatprep.subr.bf16.mxu0 0
    %1103 = vmatpush2.bf16.msra.mxu0 0
    %1104 = vmatprep.subr.bf16.mxu0 0
    %1105 = vmatpush2.bf16.msra.mxu0 0
    %1106 = vmatprep.subr.bf16.mxu0 0
    %1107 = vmatpush2.bf16.msra.mxu0 0
    %1108 = vmatprep.subr.bf16.mxu0 0
    %1109 = vmatpush2.bf16.msra.mxu0 0
    %1110 = vmatprep.subr.bf16.mxu0 0
    %1111 = vmatpush2.bf16.msra.mxu0 0
    %1112 = vmatprep.mubr.bf16.mxu0 0
    %1113 = vmatmul.mubr.bf16.gmra.mxu0 %v149
    %v1114 = vpop.f32.mrf.mxu0
    %v1115 = vadd.f32 %v1066, %v1114
    %v1116 = vpop.f32.mrf.mxu0
    %v1117 = vpop.f32.mrf.mxu0
    %v1118 = vadd.f32 %v1066, %v1117
    %v1119 = vpop.f32.mrf.mxu0
    %1120 = vdwg.mxu0
    %s1121 = scalar_lea.vmem %s4, 32
    %v1122 = vld [vmem:[%s1121] sm:$0xf]
    %v1123 = vld [vmem:[%s1121 + $0x4] sm:$0xf]
    %v1124 = vld [vmem:[%s1121 + $0x8] sm:$0xf]
    %v1125 = vld [vmem:[%s1121 + $0xc] sm:$0xf]
    %s1126 = scalar_lea.vmem %s7, 2
    %v1127 = vld [vmem:[%s1126] sm:$0x1]
    %v1129 = vlaneseq
    %v1130 = vshrl.u32 %v1129, 7
    %v1131 = vsub.s32 0, %v1130
    %v1132 = vrot.slane %v1127, %v1131
    %v1138 = vunpack.c.l.b16 %v1122
    %v1139 = vunpack.c.l.b16 %v1123
    %v1140 = vunpack.c.l.b16 %v1124
    %v1141 = vunpack.c.l.b16 %v1125
    %v1142 = vpack.c.b16 %v1139, %v1138
    %v1143 = vpack.c.b16 %v1141, %v1140
    %1146 = vmatprep.subr.bf16.mxu0 0
    %1147 = vmatpush1.bf16.msra.mxu0 0
    %1148 = vmatprep.subr.bf16.mxu0 0
    %1149 = vmatpush1.bf16.msra.mxu0 0
    %1150 = vmatprep.subr.bf16.mxu0 0
    %1151 = vmatpush1.bf16.msra.mxu0 0
    %1152 = vmatprep.subr.bf16.mxu0 0
    %1153 = vmatpush1.bf16.msra.mxu0 0
    %1154 = vmatprep.subr.bf16.mxu0 0
    %1155 = vmatpush1.bf16.msra.mxu0 0
    %1156 = vmatprep.subr.bf16.mxu0 0
    %1157 = vmatpush1.bf16.msra.mxu0 0
    %1158 = vmatprep.subr.bf16.mxu0 0
    %1159 = vmatpush1.bf16.msra.mxu0 %v1143
    %1160 = vmatprep.subr.bf16.mxu0 0
    %1161 = vmatpush1.bf16.msra.mxu0 %v1142
    %1162 = vmatprep.subr.bf16.mxu0 0
    %1163 = vmatpush2.bf16.msra.mxu0 0
    %1164 = vmatprep.subr.bf16.mxu0 0
    %1165 = vmatpush2.bf16.msra.mxu0 0
    %1166 = vmatprep.subr.bf16.mxu0 0
    %1167 = vmatpush2.bf16.msra.mxu0 0
    %1168 = vmatprep.subr.bf16.mxu0 0
    %1169 = vmatpush2.bf16.msra.mxu0 0
    %1170 = vmatprep.subr.bf16.mxu0 0
    %1171 = vmatpush2.bf16.msra.mxu0 0
    %1172 = vmatprep.subr.bf16.mxu0 0
    %1173 = vmatpush2.bf16.msra.mxu0 0
    %1174 = vmatprep.subr.bf16.mxu0 0
    %1175 = vmatpush2.bf16.msra.mxu0 0
    %1176 = vmatprep.subr.bf16.mxu0 0
    %1177 = vmatpush2.bf16.msra.mxu0 0
    %1178 = vmatprep.mubr.bf16.mxu0 0
    %1179 = vmatmul.mubr.bf16.gmra.mxu0 %v149
    %v1180 = vpop.f32.mrf.mxu0
    %v1181 = vadd.f32 %v1132, %v1180
    %v1182 = vpop.f32.mrf.mxu0
    %v1183 = vpop.f32.mrf.mxu0
    %v1184 = vadd.f32 %v1132, %v1183
    %v1185 = vpop.f32.mrf.mxu0
    %1186 = vdwg.mxu0
    %s1187 = scalar_lea.vmem %s5, 32
    %v1188 = vld [vmem:[%s1187] sm:$0xf]
    %v1189 = vld [vmem:[%s1187 + $0x4] sm:$0xf]
    %v1190 = vld [vmem:[%s1187 + $0x8] sm:$0xf]
    %v1191 = vld [vmem:[%s1187 + $0xc] sm:$0xf]
    %s1192 = scalar_lea.vmem %s8, 2
    %v1193 = vld [vmem:[%s1192] sm:$0x1]
    %v1195 = vlaneseq
    %v1196 = vshrl.u32 %v1195, 7
    %v1197 = vsub.s32 0, %v1196
    %v1198 = vrot.slane %v1193, %v1197
    %v1204 = vunpack.c.l.b16 %v1188
    %v1205 = vunpack.c.l.b16 %v1189
    %v1206 = vunpack.c.l.b16 %v1190
    %v1207 = vunpack.c.l.b16 %v1191
    %v1208 = vpack.c.b16 %v1205, %v1204
    %v1209 = vpack.c.b16 %v1207, %v1206
    %1212 = vmatprep.subr.bf16.mxu0 0
    %1213 = vmatpush1.bf16.msra.mxu0 0
    %1214 = vmatprep.subr.bf16.mxu0 0
    %1215 = vmatpush1.bf16.msra.mxu0 0
    %1216 = vmatprep.subr.bf16.mxu0 0
    %1217 = vmatpush1.bf16.msra.mxu0 0
    %1218 = vmatprep.subr.bf16.mxu0 0
    %1219 = vmatpush1.bf16.msra.mxu0 0
    %1220 = vmatprep.subr.bf16.mxu0 0
    %1221 = vmatpush1.bf16.msra.mxu0 0
    %1222 = vmatprep.subr.bf16.mxu0 0
    %1223 = vmatpush1.bf16.msra.mxu0 0
    %1224 = vmatprep.subr.bf16.mxu0 0
    %1225 = vmatpush1.bf16.msra.mxu0 %v1209
    %1226 = vmatprep.subr.bf16.mxu0 0
    %1227 = vmatpush1.bf16.msra.mxu0 %v1208
    %1228 = vmatprep.subr.bf16.mxu0 0
    %1229 = vmatpush2.bf16.msra.mxu0 0
    %1230 = vmatprep.subr.bf16.mxu0 0
    %1231 = vmatpush2.bf16.msra.mxu0 0
    %1232 = vmatprep.subr.bf16.mxu0 0
    %1233 = vmatpush2.bf16.msra.mxu0 0
    %1234 = vmatprep.subr.bf16.mxu0 0
    %1235 = vmatpush2.bf16.msra.mxu0 0
    %1236 = vmatprep.subr.bf16.mxu0 0
    %1237 = vmatpush2.bf16.msra.mxu0 0
    %1238 = vmatprep.subr.bf16.mxu0 0
    %1239 = vmatpush2.bf16.msra.mxu0 0
    %1240 = vmatprep.subr.bf16.mxu0 0
    %1241 = vmatpush2.bf16.msra.mxu0 0
    %1242 = vmatprep.subr.bf16.mxu0 0
    %1243 = vmatpush2.bf16.msra.mxu0 0
    %1244 = vmatprep.mubr.bf16.mxu0 0
    %1245 = vmatmul.mubr.bf16.gmra.mxu0 %v149
    %v1246 = vpop.f32.mrf.mxu0
    %v1247 = vadd.f32 %v1198, %v1246
    %v1248 = vpop.f32.mrf.mxu0
    %v1249 = vpop.f32.mrf.mxu0
    %v1250 = vadd.f32 %v1198, %v1249
    %v1251 = vpop.f32.mrf.mxu0
    %1252 = vdwg.mxu0
    %v1253 = vpack.c.bf16 %v1115, %v1115
    %v1254 = vpack.c.bf16 %v1118, %v1118
    %v1255 = vpack.c.bf16 %v1181, %v1181
    %v1256 = vpack.c.bf16 %v1184, %v1184
    %v1257 = vpack.c.bf16 %v1247, %v1247
    %v1258 = vpack.c.bf16 %v1250, %v1250
    %v1260 = vsel %vm326, %v1253, 0
    %v1263 = vsel %vm326, %v1255, 0
    %1265 = vmatprep.subr.bf16.mxu0 0
    %1266 = vmatpush1.bf16.xpose.msra.mxu0 0
    %1267 = vmatprep.subr.bf16.mxu0 0
    %1268 = vmatpush1.bf16.xpose.msra.mxu0 0
    %1269 = vmatprep.subr.bf16.mxu0 0
    %1270 = vmatpush1.bf16.xpose.msra.mxu0 0
    %1271 = vmatprep.subr.bf16.mxu0 0
    %1272 = vmatpush1.bf16.xpose.msra.mxu0 0
    %1273 = vmatprep.subr.bf16.mxu0 0
    %1274 = vmatpush1.bf16.xpose.msra.mxu0 0
    %1275 = vmatprep.subr.bf16.mxu0 0
    %1276 = vmatpush1.bf16.xpose.msra.mxu0 0
    %1277 = vmatprep.subr.bf16.mxu0 0
    %1278 = vmatpush1.bf16.xpose.msra.mxu0 0
    %1279 = vmatprep.subr.bf16.mxu0 0
    %1280 = vmatpush1.bf16.xpose.msra.mxu0 %v1263
    %1281 = vmatprep.subr.bf16.mxu0 0
    %1282 = vmatpush2.bf16.xpose.msra.mxu0 0
    %1283 = vmatprep.subr.bf16.mxu0 0
    %1284 = vmatpush2.bf16.xpose.msra.mxu0 0
    %1285 = vmatprep.subr.bf16.mxu0 0
    %1286 = vmatpush2.bf16.xpose.msra.mxu0 0
    %1287 = vmatprep.subr.bf16.mxu0 0
    %1288 = vmatpush2.bf16.xpose.msra.mxu0 0
    %1289 = vmatprep.subr.bf16.mxu0 0
    %1290 = vmatpush2.bf16.xpose.msra.mxu0 0
    %1291 = vmatprep.subr.bf16.mxu0 0
    %1292 = vmatpush2.bf16.xpose.msra.mxu0 0
    %1293 = vmatprep.subr.bf16.mxu0 0
    %1294 = vmatpush2.bf16.xpose.msra.mxu0 0
    %1295 = vmatprep.subr.bf16.mxu0 0
    %1296 = vmatpush2.bf16.xpose.msra.mxu0 0
    %1297 = vmatprep.mubr.bf16.mxu0 0
    %1298 = vmatmul.mubr.bf16.gmra.mxu0 %v1260
    %v1299 = vpop.f32.mrf.mxu0
    %v1300 = vadd.f32 0.0, %v1299
    %v1301 = vpop.f32.mrf.mxu0
    %v1302 = vpop.f32.mrf.mxu0
    %v1303 = vpop.f32.mrf.mxu0
    %1304 = vdwg.mxu0
    %v1306 = vsel %vm326, %v1254, 0
    %v1309 = vsel %vm326, %v1256, 0
    %1311 = vmatprep.subr.bf16.mxu0 0
    %1312 = vmatpush1.bf16.xpose.msra.mxu0 0
    %1313 = vmatprep.subr.bf16.mxu0 0
    %1314 = vmatpush1.bf16.xpose.msra.mxu0 0
    %1315 = vmatprep.subr.bf16.mxu0 0
    %1316 = vmatpush1.bf16.xpose.msra.mxu0 0
    %1317 = vmatprep.subr.bf16.mxu0 0
    %1318 = vmatpush1.bf16.xpose.msra.mxu0 0
    %1319 = vmatprep.subr.bf16.mxu0 0
    %1320 = vmatpush1.bf16.xpose.msra.mxu0 0
    %1321 = vmatprep.subr.bf16.mxu0 0
    %1322 = vmatpush1.bf16.xpose.msra.mxu0 0
    %1323 = vmatprep.subr.bf16.mxu0 0
    %1324 = vmatpush1.bf16.xpose.msra.mxu0 0
    %1325 = vmatprep.subr.bf16.mxu0 0
    %1326 = vmatpush1.bf16.xpose.msra.mxu0 %v1309
    %1327 = vmatprep.subr.bf16.mxu0 0
    %1328 = vmatpush2.bf16.xpose.msra.mxu0 0
    %1329 = vmatprep.subr.bf16.mxu0 0
    %1330 = vmatpush2.bf16.xpose.msra.mxu0 0
    %1331 = vmatprep.subr.bf16.mxu0 0
    %1332 = vmatpush2.bf16.xpose.msra.mxu0 0
    %1333 = vmatprep.subr.bf16.mxu0 0
    %1334 = vmatpush2.bf16.xpose.msra.mxu0 0
    %1335 = vmatprep.subr.bf16.mxu0 0
    %1336 = vmatpush2.bf16.xpose.msra.mxu0 0
    %1337 = vmatprep.subr.bf16.mxu0 0
    %1338 = vmatpush2.bf16.xpose.msra.mxu0 0
    %1339 = vmatprep.subr.bf16.mxu0 0
    %1340 = vmatpush2.bf16.xpose.msra.mxu0 0
    %1341 = vmatprep.subr.bf16.mxu0 0
    %1342 = vmatpush2.bf16.xpose.msra.mxu0 0
    %1343 = vmatprep.mubr.bf16.mxu0 0
    %1344 = vmatmul.mubr.bf16.gmra.mxu0 %v1306
    %v1345 = vpop.f32.mrf.mxu0
    %v1346 = vadd.f32 0.0, %v1345
    %v1347 = vpop.f32.mrf.mxu0
    %v1348 = vpop.f32.mrf.mxu0
    %v1349 = vpop.f32.mrf.mxu0
    %1350 = vdwg.mxu0
    %v1351 = vmul.f32 %v1300, 0.35355338
    %v1352 = vmul.f32 %v1346, 0.35355338
    %v1353 = vadd.f32 %v1351, %v77
    %v1354 = vadd.f32 %v1352, %v77
    %v1355 = vsel %vm326, %v1353, -inf
    %1356 = vmax.xlane.f32.xlu0 %v1355
    %v1357 = vpop.xlane.xlu0 %1356
    %v1358 = vsel %vm326, %v1354, -inf
    %1359 = vmax.xlane.f32.xlu0 %v1358
    %v1360 = vpop.xlane.xlu0 %1359
    %v1361 = vsub.f32 %v1353, %v1357
    %v1362 = vsub.f32 %v1354, %v1360
    %v1363 = vmul.f32 %v1361, 1.442695
    %v1364 = vpow.pop %v1363
    %v1365 = vmul.f32 %v1362, 1.442695
    %v1366 = vpow.pop %v1365
    %v1367 = vsel %vm326, %v1364, 0.0
    %1368 = vadd.xlane.f32.xlu0 %v1367
    %v1369 = vpop.xlane.xlu0 %1368
    %v1370 = vsel %vm326, %v1366, 0.0
    %1371 = vadd.xlane.f32.xlu0 %v1370
    %v1372 = vpop.xlane.xlu0 %1371
    %v1373 = vrcp.pop %v1369
    %v1374 = vrcp.pop %v1372
    %v1375 = vmul.f32 %v1364, %v1373
    %v1376 = vmul.f32 %v1366, %v1374
    %v1377 = vpack.c.bf16 %v1375, %v1375
    %v1378 = vpack.c.bf16 %v1376, %v1376
    %v1380 = vsel %vm326, %v1377, 0
    %v1383 = vsel %vm450, %v1257, 0
    %1385 = vmatprep.subr.bf16.mxu0 0
    %1386 = vmatpush1.bf16.msra.mxu0 0
    %1387 = vmatprep.subr.bf16.mxu0 0
    %1388 = vmatpush1.bf16.msra.mxu0 0
    %1389 = vmatprep.subr.bf16.mxu0 0
    %1390 = vmatpush1.bf16.msra.mxu0 0
    %1391 = vmatprep.subr.bf16.mxu0 0
    %1392 = vmatpush1.bf16.msra.mxu0 0
    %1393 = vmatprep.subr.bf16.mxu0 0
    %1394 = vmatpush1.bf16.msra.mxu0 0
    %1395 = vmatprep.subr.bf16.mxu0 0
    %1396 = vmatpush1.bf16.msra.mxu0 0
    %1397 = vmatprep.subr.bf16.mxu0 0
    %1398 = vmatpush1.bf16.msra.mxu0 0
    %1399 = vmatprep.subr.bf16.mxu0 0
    %1400 = vmatpush1.bf16.msra.mxu0 %v1383
    %1401 = vmatprep.subr.bf16.mxu0 0
    %1402 = vmatpush2.bf16.msra.mxu0 0
    %1403 = vmatprep.subr.bf16.mxu0 0
    %1404 = vmatpush2.bf16.msra.mxu0 0
    %1405 = vmatprep.subr.bf16.mxu0 0
    %1406 = vmatpush2.bf16.msra.mxu0 0
    %1407 = vmatprep.subr.bf16.mxu0 0
    %1408 = vmatpush2.bf16.msra.mxu0 0
    %1409 = vmatprep.subr.bf16.mxu0 0
    %1410 = vmatpush2.bf16.msra.mxu0 0
    %1411 = vmatprep.subr.bf16.mxu0 0
    %1412 = vmatpush2.bf16.msra.mxu0 0
    %1413 = vmatprep.subr.bf16.mxu0 0
    %1414 = vmatpush2.bf16.msra.mxu0 0
    %1415 = vmatprep.subr.bf16.mxu0 0
    %1416 = vmatpush2.bf16.msra.mxu0 0
    %1417 = vmatprep.mubr.bf16.mxu0 0
    %1418 = vmatmul.mubr.bf16.gmra.mxu0 %v1380
    %v1419 = vpop.f32.mrf.mxu0
    %v1420 = vadd.f32 0.0, %v1419
    %v1421 = vpop.f32.mrf.mxu0
    %v1422 = vpop.f32.mrf.mxu0
    %v1423 = vpop.f32.mrf.mxu0
    %1424 = vdwg.mxu0
    %v1426 = vsel %vm326, %v1378, 0
    %v1429 = vsel %vm450, %v1258, 0
    %1431 = vmatprep.subr.bf16.mxu0 0
    %1432 = vmatpush1.bf16.msra.mxu0 0
    %1433 = vmatprep.subr.bf16.mxu0 0
    %1434 = vmatpush1.bf16.msra.mxu0 0
    %1435 = vmatprep.subr.bf16.mxu0 0
    %1436 = vmatpush1.bf16.msra.mxu0 0
    %1437 = vmatprep.subr.bf16.mxu0 0
    %1438 = vmatpush1.bf16.msra.mxu0 0
    %1439 = vmatprep.subr.bf16.mxu0 0
    %1440 = vmatpush1.bf16.msra.mxu0 0
    %1441 = vmatprep.subr.bf16.mxu0 0
    %1442 = vmatpush1.bf16.msra.mxu0 0
    %1443 = vmatprep.subr.bf16.mxu0 0
    %1444 = vmatpush1.bf16.msra.mxu0 0
    %1445 = vmatprep.subr.bf16.mxu0 0
    %1446 = vmatpush1.bf16.msra.mxu0 %v1429
    %1447 = vmatprep.subr.bf16.mxu0 0
    %1448 = vmatpush2.bf16.msra.mxu0 0
    %1449 = vmatprep.subr.bf16.mxu0 0
    %1450 = vmatpush2.bf16.msra.mxu0 0
    %1451 = vmatprep.subr.bf16.mxu0 0
    %1452 = vmatpush2.bf16.msra.mxu0 0
    %1453 = vmatprep.subr.bf16.mxu0 0
    %1454 = vmatpush2.bf16.msra.mxu0 0
    %1455 = vmatprep.subr.bf16.mxu0 0
    %1456 = vmatpush2.bf16.msra.mxu0 0
    %1457 = vmatprep.subr.bf16.mxu0 0
    %1458 = vmatpush2.bf16.msra.mxu0 0
    %1459 = vmatprep.subr.bf16.mxu0 0
    %1460 = vmatpush2.bf16.msra.mxu0 0
    %1461 = vmatprep.subr.bf16.mxu0 0
    %1462 = vmatpush2.bf16.msra.mxu0 0
    %1463 = vmatprep.mubr.bf16.mxu0 0
    %1464 = vmatmul.mubr.bf16.gmra.mxu0 %v1426
    %v1465 = vpop.f32.mrf.mxu0
    %v1466 = vadd.f32 0.0, %v1465
    %v1467 = vpop.f32.mrf.mxu0
    %v1468 = vpop.f32.mrf.mxu0
    %v1469 = vpop.f32.mrf.mxu0
    %1470 = vdwg.mxu0
    %v1471 = vpack.c.bf16 %v1466, %v1420
    %s1472 = scalar_lea.vmem %s9, 8
    %v1473 = vld [vmem:[%s1472] sm:$0xf]
    %v1475 = vsel %vm326, %v1471, 0
    %v1478 = vsel %vm450, %v1473, 0
    %1480 = vmatprep.subr.bf16.mxu0 0
    %1481 = vmatpush1.bf16.msra.mxu0 0
    %1482 = vmatprep.subr.bf16.mxu0 0
    %1483 = vmatpush1.bf16.msra.mxu0 0
    %1484 = vmatprep.subr.bf16.mxu0 0
    %1485 = vmatpush1.bf16.msra.mxu0 0
    %1486 = vmatprep.subr.bf16.mxu0 0
    %1487 = vmatpush1.bf16.msra.mxu0 0
    %1488 = vmatprep.subr.bf16.mxu0 0
    %1489 = vmatpush1.bf16.msra.mxu0 0
    %1490 = vmatprep.subr.bf16.mxu0 0
    %1491 = vmatpush1.bf16.msra.mxu0 0
    %1492 = vmatprep.subr.bf16.mxu0 0
    %1493 = vmatpush1.bf16.msra.mxu0 0
    %1494 = vmatprep.subr.bf16.mxu0 0
    %1495 = vmatpush1.bf16.msra.mxu0 %v1478
    %1496 = vmatprep.subr.bf16.mxu0 0
    %1497 = vmatpush2.bf16.msra.mxu0 0
    %1498 = vmatprep.subr.bf16.mxu0 0
    %1499 = vmatpush2.bf16.msra.mxu0 0
    %1500 = vmatprep.subr.bf16.mxu0 0
    %1501 = vmatpush2.bf16.msra.mxu0 0
    %1502 = vmatprep.subr.bf16.mxu0 0
    %1503 = vmatpush2.bf16.msra.mxu0 0
    %1504 = vmatprep.subr.bf16.mxu0 0
    %1505 = vmatpush2.bf16.msra.mxu0 0
    %1506 = vmatprep.subr.bf16.mxu0 0
    %1507 = vmatpush2.bf16.msra.mxu0 0
    %1508 = vmatprep.subr.bf16.mxu0 0
    %1509 = vmatpush2.bf16.msra.mxu0 0
    %1510 = vmatprep.subr.bf16.mxu0 0
    %1511 = vmatpush2.bf16.msra.mxu0 0
    %1512 = vmatprep.mubr.bf16.mxu0 0
    %1513 = vmatmul.mubr.bf16.gmra.mxu0 %v1475
    %v1514 = vpop.f32.mrf.mxu0
    %v1515 = vadd.f32 0.0, %v1514
    %v1516 = vpop.f32.mrf.mxu0
    %v1517 = vpop.f32.mrf.mxu0
    %v1518 = vadd.f32 0.0, %v1517
    %v1519 = vpop.f32.mrf.mxu0
    %1520 = vdwg.mxu0
    %v1521 = vadd.f32 %v1049, %v1515
    %v1522 = vadd.f32 %v1052, %v1518
    %s1523 = scalar_lea.vmem %s3, 48
    %v1524 = vld [vmem:[%s1523] sm:$0xf]
    %v1525 = vld [vmem:[%s1523 + $0x4] sm:$0xf]
    %v1526 = vld [vmem:[%s1523 + $0x8] sm:$0xf]
    %v1527 = vld [vmem:[%s1523 + $0xc] sm:$0xf]
    %s1528 = scalar_lea.vmem %s6, 3
    %v1529 = vld [vmem:[%s1528] sm:$0x1]
    %v1531 = vlaneseq
    %v1532 = vshrl.u32 %v1531, 7
    %v1533 = vsub.s32 0, %v1532
    %v1534 = vrot.slane %v1529, %v1533
    %v1540 = vunpack.c.l.b16 %v1524
    %v1541 = vunpack.c.l.b16 %v1525
    %v1542 = vunpack.c.l.b16 %v1526
    %v1543 = vunpack.c.l.b16 %v1527
    %v1544 = vpack.c.b16 %v1541, %v1540
    %v1545 = vpack.c.b16 %v1543, %v1542
    %1548 = vmatprep.subr.bf16.mxu0 0
    %1549 = vmatpush1.bf16.msra.mxu0 0
    %1550 = vmatprep.subr.bf16.mxu0 0
    %1551 = vmatpush1.bf16.msra.mxu0 0
    %1552 = vmatprep.subr.bf16.mxu0 0
    %1553 = vmatpush1.bf16.msra.mxu0 0
    %1554 = vmatprep.subr.bf16.mxu0 0
    %1555 = vmatpush1.bf16.msra.mxu0 0
    %1556 = vmatprep.subr.bf16.mxu0 0
    %1557 = vmatpush1.bf16.msra.mxu0 0
    %1558 = vmatprep.subr.bf16.mxu0 0
    %1559 = vmatpush1.bf16.msra.mxu0 0
    %1560 = vmatprep.subr.bf16.mxu0 0
    %1561 = vmatpush1.bf16.msra.mxu0 %v1545
    %1562 = vmatprep.subr.bf16.mxu0 0
    %1563 = vmatpush1.bf16.msra.mxu0 %v1544
    %1564 = vmatprep.subr.bf16.mxu0 0
    %1565 = vmatpush2.bf16.msra.mxu0 0
    %1566 = vmatprep.subr.bf16.mxu0 0
    %1567 = vmatpush2.bf16.msra.mxu0 0
    %1568 = vmatprep.subr.bf16.mxu0 0
    %1569 = vmatpush2.bf16.msra.mxu0 0
    %1570 = vmatprep.subr.bf16.mxu0 0
    %1571 = vmatpush2.bf16.msra.mxu0 0
    %1572 = vmatprep.subr.bf16.mxu0 0
    %1573 = vmatpush2.bf16.msra.mxu0 0
    %1574 = vmatprep.subr.bf16.mxu0 0
    %1575 = vmatpush2.bf16.msra.mxu0 0
    %1576 = vmatprep.subr.bf16.mxu0 0
    %1577 = vmatpush2.bf16.msra.mxu0 0
    %1578 = vmatprep.subr.bf16.mxu0 0
    %1579 = vmatpush2.bf16.msra.mxu0 0
    %1580 = vmatprep.mubr.bf16.mxu0 0
    %1581 = vmatmul.mubr.bf16.gmra.mxu0 %v149
    %v1582 = vpop.f32.mrf.mxu0
    %v1583 = vadd.f32 %v1534, %v1582
    %v1584 = vpop.f32.mrf.mxu0
    %v1585 = vpop.f32.mrf.mxu0
    %v1586 = vadd.f32 %v1534, %v1585
    %v1587 = vpop.f32.mrf.mxu0
    %1588 = vdwg.mxu0
    %s1589 = scalar_lea.vmem %s4, 48
    %v1590 = vld [vmem:[%s1589] sm:$0xf]
    %v1591 = vld [vmem:[%s1589 + $0x4] sm:$0xf]
    %v1592 = vld [vmem:[%s1589 + $0x8] sm:$0xf]
    %v1593 = vld [vmem:[%s1589 + $0xc] sm:$0xf]
    %s1594 = scalar_lea.vmem %s7, 3
    %v1595 = vld [vmem:[%s1594] sm:$0x1]
    %v1597 = vlaneseq
    %v1598 = vshrl.u32 %v1597, 7
    %v1599 = vsub.s32 0, %v1598
    %v1600 = vrot.slane %v1595, %v1599
    %v1606 = vunpack.c.l.b16 %v1590
    %v1607 = vunpack.c.l.b16 %v1591
    %v1608 = vunpack.c.l.b16 %v1592
    %v1609 = vunpack.c.l.b16 %v1593
    %v1610 = vpack.c.b16 %v1607, %v1606
    %v1611 = vpack.c.b16 %v1609, %v1608
    %1614 = vmatprep.subr.bf16.mxu0 0
    %1615 = vmatpush1.bf16.msra.mxu0 0
    %1616 = vmatprep.subr.bf16.mxu0 0
    %1617 = vmatpush1.bf16.msra.mxu0 0
    %1618 = vmatprep.subr.bf16.mxu0 0
    %1619 = vmatpush1.bf16.msra.mxu0 0
    %1620 = vmatprep.subr.bf16.mxu0 0
    %1621 = vmatpush1.bf16.msra.mxu0 0
    %1622 = vmatprep.subr.bf16.mxu0 0
    %1623 = vmatpush1.bf16.msra.mxu0 0
    %1624 = vmatprep.subr.bf16.mxu0 0
    %1625 = vmatpush1.bf16.msra.mxu0 0
    %1626 = vmatprep.subr.bf16.mxu0 0
    %1627 = vmatpush1.bf16.msra.mxu0 %v1611
    %1628 = vmatprep.subr.bf16.mxu0 0
    %1629 = vmatpush1.bf16.msra.mxu0 %v1610
    %1630 = vmatprep.subr.bf16.mxu0 0
    %1631 = vmatpush2.bf16.msra.mxu0 0
    %1632 = vmatprep.subr.bf16.mxu0 0
    %1633 = vmatpush2.bf16.msra.mxu0 0
    %1634 = vmatprep.subr.bf16.mxu0 0
    %1635 = vmatpush2.bf16.msra.mxu0 0
    %1636 = vmatprep.subr.bf16.mxu0 0
    %1637 = vmatpush2.bf16.msra.mxu0 0
    %1638 = vmatprep.subr.bf16.mxu0 0
    %1639 = vmatpush2.bf16.msra.mxu0 0
    %1640 = vmatprep.subr.bf16.mxu0 0
    %1641 = vmatpush2.bf16.msra.mxu0 0
    %1642 = vmatprep.subr.bf16.mxu0 0
    %1643 = vmatpush2.bf16.msra.mxu0 0
    %1644 = vmatprep.subr.bf16.mxu0 0
    %1645 = vmatpush2.bf16.msra.mxu0 0
    %1646 = vmatprep.mubr.bf16.mxu0 0
    %1647 = vmatmul.mubr.bf16.gmra.mxu0 %v149
    %v1648 = vpop.f32.mrf.mxu0
    %v1649 = vadd.f32 %v1600, %v1648
    %v1650 = vpop.f32.mrf.mxu0
    %v1651 = vpop.f32.mrf.mxu0
    %v1652 = vadd.f32 %v1600, %v1651
    %v1653 = vpop.f32.mrf.mxu0
    %1654 = vdwg.mxu0
    %s1655 = scalar_lea.vmem %s5, 48
    %v1656 = vld [vmem:[%s1655] sm:$0xf]
    %v1657 = vld [vmem:[%s1655 + $0x4] sm:$0xf]
    %v1658 = vld [vmem:[%s1655 + $0x8] sm:$0xf]
    %v1659 = vld [vmem:[%s1655 + $0xc] sm:$0xf]
    %s1660 = scalar_lea.vmem %s8, 3
    %v1661 = vld [vmem:[%s1660] sm:$0x1]
    %v1663 = vlaneseq
    %v1664 = vshrl.u32 %v1663, 7
    %v1665 = vsub.s32 0, %v1664
    %v1666 = vrot.slane %v1661, %v1665
    %v1672 = vunpack.c.l.b16 %v1656
    %v1673 = vunpack.c.l.b16 %v1657
    %v1674 = vunpack.c.l.b16 %v1658
    %v1675 = vunpack.c.l.b16 %v1659
    %v1676 = vpack.c.b16 %v1673, %v1672
    %v1677 = vpack.c.b16 %v1675, %v1674
    %1680 = vmatprep.subr.bf16.mxu0 0
    %1681 = vmatpush1.bf16.msra.mxu0 0
    %1682 = vmatprep.subr.bf16.mxu0 0
    %1683 = vmatpush1.bf16.msra.mxu0 0
    %1684 = vmatprep.subr.bf16.mxu0 0
    %1685 = vmatpush1.bf16.msra.mxu0 0
    %1686 = vmatprep.subr.bf16.mxu0 0
    %1687 = vmatpush1.bf16.msra.mxu0 0
    %1688 = vmatprep.subr.bf16.mxu0 0
    %1689 = vmatpush1.bf16.msra.mxu0 0
    %1690 = vmatprep.subr.bf16.mxu0 0
    %1691 = vmatpush1.bf16.msra.mxu0 0
    %1692 = vmatprep.subr.bf16.mxu0 0
    %1693 = vmatpush1.bf16.msra.mxu0 %v1677
    %1694 = vmatprep.subr.bf16.mxu0 0
    %1695 = vmatpush1.bf16.msra.mxu0 %v1676
    %1696 = vmatprep.subr.bf16.mxu0 0
    %1697 = vmatpush2.bf16.msra.mxu0 0
    %1698 = vmatprep.subr.bf16.mxu0 0
    %1699 = vmatpush2.bf16.msra.mxu0 0
    %1700 = vmatprep.subr.bf16.mxu0 0
    %1701 = vmatpush2.bf16.msra.mxu0 0
    %1702 = vmatprep.subr.bf16.mxu0 0
    %1703 = vmatpush2.bf16.msra.mxu0 0
    %1704 = vmatprep.subr.bf16.mxu0 0
    %1705 = vmatpush2.bf16.msra.mxu0 0
    %1706 = vmatprep.subr.bf16.mxu0 0
    %1707 = vmatpush2.bf16.msra.mxu0 0
    %1708 = vmatprep.subr.bf16.mxu0 0
    %1709 = vmatpush2.bf16.msra.mxu0 0
    %1710 = vmatprep.subr.bf16.mxu0 0
    %1711 = vmatpush2.bf16.msra.mxu0 0
    %1712 = vmatprep.mubr.bf16.mxu0 0
    %1713 = vmatmul.mubr.bf16.gmra.mxu0 %v149
    %v1714 = vpop.f32.mrf.mxu0
    %v1715 = vadd.f32 %v1666, %v1714
    %v1716 = vpop.f32.mrf.mxu0
    %v1717 = vpop.f32.mrf.mxu0
    %v1718 = vadd.f32 %v1666, %v1717
    %v1719 = vpop.f32.mrf.mxu0
    %1720 = vdwg.mxu0
    %v1721 = vpack.c.bf16 %v1583, %v1583
    %v1722 = vpack.c.bf16 %v1586, %v1586
    %v1723 = vpack.c.bf16 %v1649, %v1649
    %v1724 = vpack.c.bf16 %v1652, %v1652
    %v1725 = vpack.c.bf16 %v1715, %v1715
    %v1726 = vpack.c.bf16 %v1718, %v1718
    %v1728 = vsel %vm326, %v1721, 0
    %v1731 = vsel %vm326, %v1723, 0
    %1733 = vmatprep.subr.bf16.mxu0 0
    %1734 = vmatpush1.bf16.xpose.msra.mxu0 0
    %1735 = vmatprep.subr.bf16.mxu0 0
    %1736 = vmatpush1.bf16.xpose.msra.mxu0 0
    %1737 = vmatprep.subr.bf16.mxu0 0
    %1738 = vmatpush1.bf16.xpose.msra.mxu0 0
    %1739 = vmatprep.subr.bf16.mxu0 0
    %1740 = vmatpush1.bf16.xpose.msra.mxu0 0
    %1741 = vmatprep.subr.bf16.mxu0 0
    %1742 = vmatpush1.bf16.xpose.msra.mxu0 0
    %1743 = vmatprep.subr.bf16.mxu0 0
    %1744 = vmatpush1.bf16.xpose.msra.mxu0 0
    %1745 = vmatprep.subr.bf16.mxu0 0
    %1746 = vmatpush1.bf16.xpose.msra.mxu0 0
    %1747 = vmatprep.subr.bf16.mxu0 0
    %1748 = vmatpush1.bf16.xpose.msra.mxu0 %v1731
    %1749 = vmatprep.subr.bf16.mxu0 0
    %1750 = vmatpush2.bf16.xpose.msra.mxu0 0
    %1751 = vmatprep.subr.bf16.mxu0 0
    %1752 = vmatpush2.bf16.xpose.msra.mxu0 0
    %1753 = vmatprep.subr.bf16.mxu0 0
    %1754 = vmatpush2.bf16.xpose.msra.mxu0 0
    %1755 = vmatprep.subr.bf16.mxu0 0
    %1756 = vmatpush2.bf16.xpose.msra.mxu0 0
    %1757 = vmatprep.subr.bf16.mxu0 0
    %1758 = vmatpush2.bf16.xpose.msra.mxu0 0
    %1759 = vmatprep.subr.bf16.mxu0 0
    %1760 = vmatpush2.bf16.xpose.msra.mxu0 0
    %1761 = vmatprep.subr.bf16.mxu0 0
    %1762 = vmatpush2.bf16.xpose.msra.mxu0 0
    %1763 = vmatprep.subr.bf16.mxu0 0
    %1764 = vmatpush2.bf16.xpose.msra.mxu0 0
    %1765 = vmatprep.mubr.bf16.mxu0 0
    %1766 = vmatmul.mubr.bf16.gmra.mxu0 %v1728
    %v1767 = vpop.f32.mrf.mxu0
    %v1768 = vadd.f32 0.0, %v1767
    %v1769 = vpop.f32.mrf.mxu0
    %v1770 = vpop.f32.mrf.mxu0
    %v1771 = vpop.f32.mrf.mxu0
    %1772 = vdwg.mxu0
    %v1774 = vsel %vm326, %v1722, 0
    %v1777 = vsel %vm326, %v1724, 0
    %1779 = vmatprep.subr.bf16.mxu0 0
    %1780 = vmatpush1.bf16.xpose.msra.mxu0 0
    %1781 = vmatprep.subr.bf16.mxu0 0
    %1782 = vmatpush1.bf16.xpose.msra.mxu0 0
    %1783 = vmatprep.subr.bf16.mxu0 0
    %1784 = vmatpush1.bf16.xpose.msra.mxu0 0
    %1785 = vmatprep.subr.bf16.mxu0 0
    %1786 = vmatpush1.bf16.xpose.msra.mxu0 0
    %1787 = vmatprep.subr.bf16.mxu0 0
    %1788 = vmatpush1.bf16.xpose.msra.mxu0 0
    %1789 = vmatprep.subr.bf16.mxu0 0
    %1790 = vmatpush1.bf16.xpose.msra.mxu0 0
    %1791 = vmatprep.subr.bf16.mxu0 0
    %1792 = vmatpush1.bf16.xpose.msra.mxu0 0
    %1793 = vmatprep.subr.bf16.mxu0 0
    %1794 = vmatpush1.bf16.xpose.msra.mxu0 %v1777
    %1795 = vmatprep.subr.bf16.mxu0 0
    %1796 = vmatpush2.bf16.xpose.msra.mxu0 0
    %1797 = vmatprep.subr.bf16.mxu0 0
    %1798 = vmatpush2.bf16.xpose.msra.mxu0 0
    %1799 = vmatprep.subr.bf16.mxu0 0
    %1800 = vmatpush2.bf16.xpose.msra.mxu0 0
    %1801 = vmatprep.subr.bf16.mxu0 0
    %1802 = vmatpush2.bf16.xpose.msra.mxu0 0
    %1803 = vmatprep.subr.bf16.mxu0 0
    %1804 = vmatpush2.bf16.xpose.msra.mxu0 0
    %1805 = vmatprep.subr.bf16.mxu0 0
    %1806 = vmatpush2.bf16.xpose.msra.mxu0 0
    %1807 = vmatprep.subr.bf16.mxu0 0
    %1808 = vmatpush2.bf16.xpose.msra.mxu0 0
    %1809 = vmatprep.subr.bf16.mxu0 0
    %1810 = vmatpush2.bf16.xpose.msra.mxu0 0
    %1811 = vmatprep.mubr.bf16.mxu0 0
    %1812 = vmatmul.mubr.bf16.gmra.mxu0 %v1774
    %v1813 = vpop.f32.mrf.mxu0
    %v1814 = vadd.f32 0.0, %v1813
    %v1815 = vpop.f32.mrf.mxu0
    %v1816 = vpop.f32.mrf.mxu0
    %v1817 = vpop.f32.mrf.mxu0
    %1818 = vdwg.mxu0
    %v1819 = vmul.f32 %v1768, 0.35355338
    %v1820 = vmul.f32 %v1814, 0.35355338
    %v1821 = vadd.f32 %v1819, %v77
    %v1822 = vadd.f32 %v1820, %v77
    %v1823 = vsel %vm326, %v1821, -inf
    %1824 = vmax.xlane.f32.xlu0 %v1823
    %v1825 = vpop.xlane.xlu0 %1824
    %v1826 = vsel %vm326, %v1822, -inf
    %1827 = vmax.xlane.f32.xlu0 %v1826
    %v1828 = vpop.xlane.xlu0 %1827
    %v1829 = vsub.f32 %v1821, %v1825
    %v1830 = vsub.f32 %v1822, %v1828
    %v1831 = vmul.f32 %v1829, 1.442695
    %v1832 = vpow.pop %v1831
    %v1833 = vmul.f32 %v1830, 1.442695
    %v1834 = vpow.pop %v1833
    %v1835 = vsel %vm326, %v1832, 0.0
    %1836 = vadd.xlane.f32.xlu0 %v1835
    %v1837 = vpop.xlane.xlu0 %1836
    %v1838 = vsel %vm326, %v1834, 0.0
    %1839 = vadd.xlane.f32.xlu0 %v1838
    %v1840 = vpop.xlane.xlu0 %1839
    %v1841 = vrcp.pop %v1837
    %v1842 = vrcp.pop %v1840
    %v1843 = vmul.f32 %v1832, %v1841
    %v1844 = vmul.f32 %v1834, %v1842
    %v1845 = vpack.c.bf16 %v1843, %v1843
    %v1846 = vpack.c.bf16 %v1844, %v1844
    %v1848 = vsel %vm326, %v1845, 0
    %v1851 = vsel %vm450, %v1725, 0
    %1853 = vmatprep.subr.bf16.mxu0 0
    %1854 = vmatpush1.bf16.msra.mxu0 0
    %1855 = vmatprep.subr.bf16.mxu0 0
    %1856 = vmatpush1.bf16.msra.mxu0 0
    %1857 = vmatprep.subr.bf16.mxu0 0
    %1858 = vmatpush1.bf16.msra.mxu0 0
    %1859 = vmatprep.subr.bf16.mxu0 0
    %1860 = vmatpush1.bf16.msra.mxu0 0
    %1861 = vmatprep.subr.bf16.mxu0 0
    %1862 = vmatpush1.bf16.msra.mxu0 0
    %1863 = vmatprep.subr.bf16.mxu0 0
    %1864 = vmatpush1.bf16.msra.mxu0 0
    %1865 = vmatprep.subr.bf16.mxu0 0
    %1866 = vmatpush1.bf16.msra.mxu0 0
    %1867 = vmatprep.subr.bf16.mxu0 0
    %1868 = vmatpush1.bf16.msra.mxu0 %v1851
    %1869 = vmatprep.subr.bf16.mxu0 0
    %1870 = vmatpush2.bf16.msra.mxu0 0
    %1871 = vmatprep.subr.bf16.mxu0 0
    %1872 = vmatpush2.bf16.msra.mxu0 0
    %1873 = vmatprep.subr.bf16.mxu0 0
    %1874 = vmatpush2.bf16.msra.mxu0 0
    %1875 = vmatprep.subr.bf16.mxu0 0
    %1876 = vmatpush2.bf16.msra.mxu0 0
    %1877 = vmatprep.subr.bf16.mxu0 0
    %1878 = vmatpush2.bf16.msra.mxu0 0
    %1879 = vmatprep.subr.bf16.mxu0 0
    %1880 = vmatpush2.bf16.msra.mxu0 0
    %1881 = vmatprep.subr.bf16.mxu0 0
    %1882 = vmatpush2.bf16.msra.mxu0 0
    %1883 = vmatprep.subr.bf16.mxu0 0
    %1884 = vmatpush2.bf16.msra.mxu0 0
    %1885 = vmatprep.mubr.bf16.mxu0 0
    %1886 = vmatmul.mubr.bf16.gmra.mxu0 %v1848
    %v1887 = vpop.f32.mrf.mxu0
    %v1888 = vadd.f32 0.0, %v1887
    %v1889 = vpop.f32.mrf.mxu0
    %v1890 = vpop.f32.mrf.mxu0
    %v1891 = vpop.f32.mrf.mxu0
    %1892 = vdwg.mxu0
    %v1894 = vsel %vm326, %v1846, 0
    %v1897 = vsel %vm450, %v1726, 0
    %1899 = vmatprep.subr.bf16.mxu0 0
    %1900 = vmatpush1.bf16.msra.mxu0 0
    %1901 = vmatprep.subr.bf16.mxu0 0
    %1902 = vmatpush1.bf16.msra.mxu0 0
    %1903 = vmatprep.subr.bf16.mxu0 0
    %1904 = vmatpush1.bf16.msra.mxu0 0
    %1905 = vmatprep.subr.bf16.mxu0 0
    %1906 = vmatpush1.bf16.msra.mxu0 0
    %1907 = vmatprep.subr.bf16.mxu0 0
    %1908 = vmatpush1.bf16.msra.mxu0 0
    %1909 = vmatprep.subr.bf16.mxu0 0
    %1910 = vmatpush1.bf16.msra.mxu0 0
    %1911 = vmatprep.subr.bf16.mxu0 0
    %1912 = vmatpush1.bf16.msra.mxu0 0
    %1913 = vmatprep.subr.bf16.mxu0 0
    %1914 = vmatpush1.bf16.msra.mxu0 %v1897
    %1915 = vmatprep.subr.bf16.mxu0 0
    %1916 = vmatpush2.bf16.msra.mxu0 0
    %1917 = vmatprep.subr.bf16.mxu0 0
    %1918 = vmatpush2.bf16.msra.mxu0 0
    %1919 = vmatprep.subr.bf16.mxu0 0
    %1920 = vmatpush2.bf16.msra.mxu0 0
    %1921 = vmatprep.subr.bf16.mxu0 0
    %1922 = vmatpush2.bf16.msra.mxu0 0
    %1923 = vmatprep.subr.bf16.mxu0 0
    %1924 = vmatpush2.bf16.msra.mxu0 0
    %1925 = vmatprep.subr.bf16.mxu0 0
    %1926 = vmatpush2.bf16.msra.mxu0 0
    %1927 = vmatprep.subr.bf16.mxu0 0
    %1928 = vmatpush2.bf16.msra.mxu0 0
    %1929 = vmatprep.subr.bf16.mxu0 0
    %1930 = vmatpush2.bf16.msra.mxu0 0
    %1931 = vmatprep.mubr.bf16.mxu0 0
    %1932 = vmatmul.mubr.bf16.gmra.mxu0 %v1894
    %v1933 = vpop.f32.mrf.mxu0
    %v1934 = vadd.f32 0.0, %v1933
    %v1935 = vpop.f32.mrf.mxu0
    %v1936 = vpop.f32.mrf.mxu0
    %v1937 = vpop.f32.mrf.mxu0
    %1938 = vdwg.mxu0
    %v1939 = vpack.c.bf16 %v1934, %v1888
    %s1940 = scalar_lea.vmem %s9, 12
    %v1941 = vld [vmem:[%s1940] sm:$0xf]
    %v1943 = vsel %vm326, %v1939, 0
    %v1946 = vsel %vm450, %v1941, 0
    %1948 = vmatprep.subr.bf16.mxu0 0
    %1949 = vmatpush1.bf16.msra.mxu0 0
    %1950 = vmatprep.subr.bf16.mxu0 0
    %1951 = vmatpush1.bf16.msra.mxu0 0
    %1952 = vmatprep.subr.bf16.mxu0 0
    %1953 = vmatpush1.bf16.msra.mxu0 0
    %1954 = vmatprep.subr.bf16.mxu0 0
    %1955 = vmatpush1.bf16.msra.mxu0 0
    %1956 = vmatprep.subr.bf16.mxu0 0
    %1957 = vmatpush1.bf16.msra.mxu0 0
    %1958 = vmatprep.subr.bf16.mxu0 0
    %1959 = vmatpush1.bf16.msra.mxu0 0
    %1960 = vmatprep.subr.bf16.mxu0 0
    %1961 = vmatpush1.bf16.msra.mxu0 0
    %1962 = vmatprep.subr.bf16.mxu0 0
    %1963 = vmatpush1.bf16.msra.mxu0 %v1946
    %1964 = vmatprep.subr.bf16.mxu0 0
    %1965 = vmatpush2.bf16.msra.mxu0 0
    %1966 = vmatprep.subr.bf16.mxu0 0
    %1967 = vmatpush2.bf16.msra.mxu0 0
    %1968 = vmatprep.subr.bf16.mxu0 0
    %1969 = vmatpush2.bf16.msra.mxu0 0
    %1970 = vmatprep.subr.bf16.mxu0 0
    %1971 = vmatpush2.bf16.msra.mxu0 0
    %1972 = vmatprep.subr.bf16.mxu0 0
    %1973 = vmatpush2.bf16.msra.mxu0 0
    %1974 = vmatprep.subr.bf16.mxu0 0
    %1975 = vmatpush2.bf16.msra.mxu0 0
    %1976 = vmatprep.subr.bf16.mxu0 0
    %1977 = vmatpush2.bf16.msra.mxu0 0
    %1978 = vmatprep.subr.bf16.mxu0 0
    %1979 = vmatpush2.bf16.msra.mxu0 0
    %1980 = vmatprep.mubr.bf16.mxu0 0
    %1981 = vmatmul.mubr.bf16.gmra.mxu0 %v1943
    %v1982 = vpop.f32.mrf.mxu0
    %v1983 = vadd.f32 0.0, %v1982
    %v1984 = vpop.f32.mrf.mxu0
    %v1985 = vpop.f32.mrf.mxu0
    %v1986 = vadd.f32 0.0, %v1985
    %v1987 = vpop.f32.mrf.mxu0
    %1988 = vdwg.mxu0
    %v1989 = vadd.f32 %v1521, %v1983
    %v1990 = vadd.f32 %v1522, %v1986
    %v1991 = vadd.f32 %v70, %v1989
    %v1992 = vadd.f32 %v71, %v1990
    %v1993 = vld [vmem:[%s10] sm:$0x1]
    %v1995 = vlaneseq
    %v1996 = vshrl.u32 %v1995, 7
    %v1997 = vsub.s32 0, %v1996
    %v1998 = vrot.slane %v1993, %v1997
    %v2000 = vadd.f32 %v1991, %v1998
    %v2001 = vadd.f32 %v1992, %v1998
    %v2002 = vld [vmem:[%s11] sm:$0x1]
    %v2003 = vld [vmem:[%s12] sm:$0x1]
    %v2004 = vsel %vm80, %v2000, 0.0
    %2005 = vadd.xlane.f32.xlu0 %v2004
    %v2006 = vpop.xlane.xlu0 %2005
    %v2007 = vsel %vm80, %v2001, 0.0
    %2008 = vadd.xlane.f32.xlu0 %v2007
    %v2009 = vpop.xlane.xlu0 %2008
    %v2010 = vmul.f32 %v2006, %v87
    %v2011 = vmul.f32 %v2009, %v87
    %v2012 = vsub.f32 %v2000, %v2010
    %v2013 = vsub.f32 %v2001, %v2011
    %v2014 = vmul.f32 %v2012, %v2012
    %v2015 = vmul.f32 %v2013, %v2013
    %v2016 = vsel %vm80, %v2014, 0.0
    %2017 = vadd.xlane.f32.xlu0 %v2016
    %v2018 = vpop.xlane.xlu0 %2017
    %v2019 = vsel %vm80, %v2015, 0.0
    %2020 = vadd.xlane.f32.xlu0 %v2019
    %v2021 = vpop.xlane.xlu0 %2020
    %v2022 = vmul.f32 %v2018, %v87
    %v2023 = vmul.f32 %v2021, %v87
    %v2024 = vadd.f32 %v2022, 1e-05
    %v2025 = vadd.f32 %v2023, 1e-05
    %v2026 = vrsqrt.pop %v2024
    %v2027 = vrsqrt.pop %v2025
    %v2028 = vmul.f32 %v2012, %v2026
    %v2029 = vmul.f32 %v2013, %v2027
    %v2031 = vlaneseq
    %v2032 = vshrl.u32 %v2031, 7
    %v2033 = vsub.s32 0, %v2032
    %v2034 = vrot.slane %v2002, %v2033
    %v2036 = vmul.f32 %v2028, %v2034
    %v2037 = vmul.f32 %v2029, %v2034
    %v2039 = vlaneseq
    %v2040 = vshrl.u32 %v2039, 7
    %v2041 = vsub.s32 0, %v2040
    %v2042 = vrot.slane %v2003, %v2041
    %v2044 = vadd.f32 %v2036, %v2042
    %v2045 = vadd.f32 %v2037, %v2042
    %v2046 = vpack.c.bf16 %v2045, %v2044
    %v2047 = vld [vmem:[%s13] sm:$0xf]
    %v2048 = vld [vmem:[%s13 + $0x4] sm:$0xf]
    %v2049 = vld [vmem:[%s13 + $0x8] sm:$0xf]
    %v2050 = vld [vmem:[%s13 + $0xc] sm:$0xf]
    %v2051 = vld [vmem:[%s14] sm:$0x1]
    %v2053 = vlaneseq
    %v2054 = vshrl.u32 %v2053, 7
    %v2055 = vsub.s32 0, %v2054
    %v2056 = vrot.slane %v2051, %v2055
    %v2062 = vunpack.c.l.b16 %v2047
    %v2063 = vunpack.c.l.b16 %v2048
    %v2064 = vunpack.c.l.b16 %v2049
    %v2065 = vunpack.c.l.b16 %v2050
    %v2066 = vpack.c.b16 %v2063, %v2062
    %v2067 = vpack.c.b16 %v2065, %v2064
    %v2071 = vsel %vm80, %v2046, 0
    %2073 = vmatprep.subr.bf16.mxu0 0
    %2074 = vmatpush1.bf16.msra.mxu0 0
    %2075 = vmatprep.subr.bf16.mxu0 0
    %2076 = vmatpush1.bf16.msra.mxu0 0
    %2077 = vmatprep.subr.bf16.mxu0 0
    %2078 = vmatpush1.bf16.msra.mxu0 0
    %2079 = vmatprep.subr.bf16.mxu0 0
    %2080 = vmatpush1.bf16.msra.mxu0 0
    %2081 = vmatprep.subr.bf16.mxu0 0
    %2082 = vmatpush1.bf16.msra.mxu0 0
    %2083 = vmatprep.subr.bf16.mxu0 0
    %2084 = vmatpush1.bf16.msra.mxu0 0
    %2085 = vmatprep.subr.bf16.mxu0 0
    %2086 = vmatpush1.bf16.msra.mxu0 %v2067
    %2087 = vmatprep.subr.bf16.mxu0 0
    %2088 = vmatpush1.bf16.msra.mxu0 %v2066
    %2089 = vmatprep.subr.bf16.mxu0 0
    %2090 = vmatpush2.bf16.msra.mxu0 0
    %2091 = vmatprep.subr.bf16.mxu0 0
    %2092 = vmatpush2.bf16.msra.mxu0 0
    %2093 = vmatprep.subr.bf16.mxu0 0
    %2094 = vmatpush2.bf16.msra.mxu0 0
    %2095 = vmatprep.subr.bf16.mxu0 0
    %2096 = vmatpush2.bf16.msra.mxu0 0
    %2097 = vmatprep.subr.bf16.mxu0 0
    %2098 = vmatpush2.bf16.msra.mxu0 0
    %2099 = vmatprep.subr.bf16.mxu0 0
    %2100 = vmatpush2.bf16.msra.mxu0 0
    %2101 = vmatprep.subr.bf16.mxu0 0
    %2102 = vmatpush2.bf16.msra.mxu0 0
    %2103 = vmatprep.subr.bf16.mxu0 0
    %2104 = vmatpush2.bf16.msra.mxu0 0
    %2105 = vmatprep.mubr.bf16.mxu0 0
    %2106 = vmatmul.mubr.bf16.gmra.mxu0 %v2071
    %v2107 = vpop.f32.mrf.mxu0
    %v2108 = vadd.f32 %v2056, %v2107
    %v2109 = vpop.f32.mrf.mxu0
    %v2110 = vpop.f32.mrf.mxu0
    %v2111 = vadd.f32 %v2056, %v2110
    %v2112 = vpop.f32.mrf.mxu0
    %2113 = vdwg.mxu0
    %v2114 = vmul.f32 %v2108, 0.5
    %v2115 = vmul.f32 %v2111, 0.5
    %v2116 = vmul.f32 %v2108, 0.70710677
    %v2117 = vmul.f32 %v2111, 0.70710677
    %v2118 = verf.f32.pop %v2116
    %v2119 = verf.f32.pop %v2117
    %v2120 = vadd.f32 %v2118, 1.0
    %v2121 = vadd.f32 %v2119, 1.0
    %v2122 = vmul.f32 %v2114, %v2120
    %v2123 = vmul.f32 %v2115, %v2121
    %v2124 = vpack.c.bf16 %v2123, %v2122
    %v2125 = vld [vmem:[%s15] sm:$0xf]
    %v2126 = vld [vmem:[%s15 + $0x4] sm:$0xf]
    %v2127 = vld [vmem:[%s15 + $0x8] sm:$0xf]
    %v2128 = vld [vmem:[%s15 + $0xc] sm:$0xf]
    %v2129 = vld [vmem:[%s15 + $0x10] sm:$0xf]
    %v2130 = vld [vmem:[%s15 + $0x14] sm:$0xf]
    %v2131 = vld [vmem:[%s15 + $0x18] sm:$0xf]
    %v2132 = vld [vmem:[%s15 + $0x1c] sm:$0xf]
    %v2133 = vld [vmem:[%s15 + $0x20] sm:$0xf]
    %v2134 = vld [vmem:[%s15 + $0x24] sm:$0xf]
    %v2135 = vld [vmem:[%s15 + $0x28] sm:$0xf]
    %v2136 = vld [vmem:[%s15 + $0x2c] sm:$0xf]
    %v2137 = vld [vmem:[%s15 + $0x30] sm:$0xf]
    %v2138 = vld [vmem:[%s15 + $0x34] sm:$0xf]
    %v2139 = vld [vmem:[%s15 + $0x38] sm:$0xf]
    %v2140 = vld [vmem:[%s15 + $0x3c] sm:$0xf]
    %v2141 = vld [vmem:[%s16] sm:$0x1]
    %v2143 = vlaneseq
    %v2144 = vshrl.u32 %v2143, 7
    %v2145 = vsub.s32 0, %v2144
    %v2146 = vrot.slane %v2141, %v2145
    %v2164 = vunpack.c.l.b16 %v2125
    %v2165 = vunpack.c.l.b16 %v2126
    %v2166 = vunpack.c.l.b16 %v2127
    %v2167 = vunpack.c.l.b16 %v2128
    %v2168 = vunpack.c.l.b16 %v2129
    %v2169 = vunpack.c.l.b16 %v2130
    %v2170 = vunpack.c.l.b16 %v2131
    %v2171 = vunpack.c.l.b16 %v2132
    %v2172 = vunpack.c.l.b16 %v2133
    %v2173 = vunpack.c.l.b16 %v2134
    %v2174 = vunpack.c.l.b16 %v2135
    %v2175 = vunpack.c.l.b16 %v2136
    %v2176 = vunpack.c.l.b16 %v2137
    %v2177 = vunpack.c.l.b16 %v2138
    %v2178 = vunpack.c.l.b16 %v2139
    %v2179 = vunpack.c.l.b16 %v2140
    %v2180 = vpack.c.b16 %v2165, %v2164
    %v2181 = vpack.c.b16 %v2167, %v2166
    %v2182 = vpack.c.b16 %v2169, %v2168
    %v2183 = vpack.c.b16 %v2171, %v2170
    %v2184 = vpack.c.b16 %v2173, %v2172
    %v2185 = vpack.c.b16 %v2175, %v2174
    %v2186 = vpack.c.b16 %v2177, %v2176
    %v2187 = vpack.c.b16 %v2179, %v2178
    %2196 = vmatprep.subr.bf16.mxu0 0
    %2197 = vmatpush1.bf16.msra.mxu0 %v2187
    %2198 = vmatprep.subr.bf16.mxu0 0
    %2199 = vmatpush1.bf16.msra.mxu0 %v2186
    %2200 = vmatprep.subr.bf16.mxu0 0
    %2201 = vmatpush1.bf16.msra.mxu0 %v2185
    %2202 = vmatprep.subr.bf16.mxu0 0
    %2203 = vmatpush1.bf16.msra.mxu0 %v2184
    %2204 = vmatprep.subr.bf16.mxu0 0
    %2205 = vmatpush1.bf16.msra.mxu0 %v2183
    %2206 = vmatprep.subr.bf16.mxu0 0
    %2207 = vmatpush1.bf16.msra.mxu0 %v2182
    %2208 = vmatprep.subr.bf16.mxu0 0
    %2209 = vmatpush1.bf16.msra.mxu0 %v2181
    %2210 = vmatprep.subr.bf16.mxu0 0
    %2211 = vmatpush1.bf16.msra.mxu0 %v2180
    %2212 = vmatprep.subr.bf16.mxu0 0
    %2213 = vmatpush2.bf16.msra.mxu0 0
    %2214 = vmatprep.subr.bf16.mxu0 0
    %2215 = vmatpush2.bf16.msra.mxu0 0
    %2216 = vmatprep.subr.bf16.mxu0 0
    %2217 = vmatpush2.bf16.msra.mxu0 0
    %2218 = vmatprep.subr.bf16.mxu0 0
    %2219 = vmatpush2.bf16.msra.mxu0 0
    %2220 = vmatprep.subr.bf16.mxu0 0
    %2221 = vmatpush2.bf16.msra.mxu0 0
    %2222 = vmatprep.subr.bf16.mxu0 0
    %2223 = vmatpush2.bf16.msra.mxu0 0
    %2224 = vmatprep.subr.bf16.mxu0 0
    %2225 = vmatpush2.bf16.msra.mxu0 0
    %2226 = vmatprep.subr.bf16.mxu0 0
    %2227 = vmatpush2.bf16.msra.mxu0 0
    %2228 = vmatprep.mubr.bf16.mxu0 0
    %2229 = vmatmul.mubr.bf16.gmra.mxu0 %v2124
    %v2230 = vpop.f32.mrf.mxu0
    %v2231 = vadd.f32 %v2146, %v2230
    %v2232 = vpop.f32.mrf.mxu0
    %v2233 = vpop.f32.mrf.mxu0
    %v2234 = vadd.f32 %v2146, %v2233
    %v2235 = vpop.f32.mrf.mxu0
    %2236 = vdwg.mxu0
    %v2237 = vadd.f32 %v2000, %v2231
    %v2238 = vadd.f32 %v2001, %v2234
    %s2239 = scalar_lea.vmem %s1, 1
    %v2240 = vld [vmem:[%s2239] sm:$0x1]
    %s2241 = scalar_lea.vmem %s2, 1
    %v2242 = vld [vmem:[%s2241] sm:$0x1]
    %v2243 = vsel %vm80, %v2237, 0.0
    %2244 = vadd.xlane.f32.xlu0 %v2243
    %v2245 = vpop.xlane.xlu0 %2244
    %v2246 = vsel %vm80, %v2238, 0.0
    %2247 = vadd.xlane.f32.xlu0 %v2246
    %v2248 = vpop.xlane.xlu0 %2247
    %v2249 = vmul.f32 %v2245, %v87
    %v2250 = vmul.f32 %v2248, %v87
    %v2251 = vsub.f32 %v2237, %v2249
    %v2252 = vsub.f32 %v2238, %v2250
    %v2253 = vmul.f32 %v2251, %v2251
    %v2254 = vmul.f32 %v2252, %v2252
    %v2255 = vsel %vm80, %v2253, 0.0
    %2256 = vadd.xlane.f32.xlu0 %v2255
    %v2257 = vpop.xlane.xlu0 %2256
    %v2258 = vsel %vm80, %v2254, 0.0
    %2259 = vadd.xlane.f32.xlu0 %v2258
    %v2260 = vpop.xlane.xlu0 %2259
    %v2261 = vmul.f32 %v2257, %v87
    %v2262 = vmul.f32 %v2260, %v87
    %v2263 = vadd.f32 %v2261, 1e-05
    %v2264 = vadd.f32 %v2262, 1e-05
    %v2265 = vrsqrt.pop %v2263
    %v2266 = vrsqrt.pop %v2264
    %v2267 = vmul.f32 %v2251, %v2265
    %v2268 = vmul.f32 %v2252, %v2266
    %v2270 = vlaneseq
    %v2271 = vshrl.u32 %v2270, 7
    %v2272 = vsub.s32 0, %v2271
    %v2273 = vrot.slane %v2240, %v2272
    %v2275 = vmul.f32 %v2267, %v2273
    %v2276 = vmul.f32 %v2268, %v2273
    %v2278 = vlaneseq
    %v2279 = vshrl.u32 %v2278, 7
    %v2280 = vsub.s32 0, %v2279
    %v2281 = vrot.slane %v2242, %v2280
    %v2283 = vadd.f32 %v2275, %v2281
    %v2284 = vadd.f32 %v2276, %v2281
    %v2285 = vpack.c.bf16 %v2284, %v2283
    %s2286 = scalar_lea.vmem %s3, 64
    %v2287 = vld [vmem:[%s2286] sm:$0xf]
    %v2288 = vld [vmem:[%s2286 + $0x4] sm:$0xf]
    %v2289 = vld [vmem:[%s2286 + $0x8] sm:$0xf]
    %v2290 = vld [vmem:[%s2286 + $0xc] sm:$0xf]
    %s2291 = scalar_lea.vmem %s6, 4
    %v2292 = vld [vmem:[%s2291] sm:$0x1]
    %v2294 = vlaneseq
    %v2295 = vshrl.u32 %v2294, 7
    %v2296 = vsub.s32 0, %v2295
    %v2297 = vrot.slane %v2292, %v2296
    %v2303 = vunpack.c.l.b16 %v2287
    %v2304 = vunpack.c.l.b16 %v2288
    %v2305 = vunpack.c.l.b16 %v2289
    %v2306 = vunpack.c.l.b16 %v2290
    %v2307 = vpack.c.b16 %v2304, %v2303
    %v2308 = vpack.c.b16 %v2306, %v2305
    %v2312 = vsel %vm80, %v2285, 0
    %2314 = vmatprep.subr.bf16.mxu0 0
    %2315 = vmatpush1.bf16.msra.mxu0 0
    %2316 = vmatprep.subr.bf16.mxu0 0
    %2317 = vmatpush1.bf16.msra.mxu0 0
    %2318 = vmatprep.subr.bf16.mxu0 0
    %2319 = vmatpush1.bf16.msra.mxu0 0
    %2320 = vmatprep.subr.bf16.mxu0 0
    %2321 = vmatpush1.bf16.msra.mxu0 0
    %2322 = vmatprep.subr.bf16.mxu0 0
    %2323 = vmatpush1.bf16.msra.mxu0 0
    %2324 = vmatprep.subr.bf16.mxu0 0
    %2325 = vmatpush1.bf16.msra.mxu0 0
    %2326 = vmatprep.subr.bf16.mxu0 0
    %2327 = vmatpush1.bf16.msra.mxu0 %v2308
    %2328 = vmatprep.subr.bf16.mxu0 0
    %2329 = vmatpush1.bf16.msra.mxu0 %v2307
    %2330 = vmatprep.subr.bf16.mxu0 0
    %2331 = vmatpush2.bf16.msra.mxu0 0
    %2332 = vmatprep.subr.bf16.mxu0 0
    %2333 = vmatpush2.bf16.msra.mxu0 0
    %2334 = vmatprep.subr.bf16.mxu0 0
    %2335 = vmatpush2.bf16.msra.mxu0 0
    %2336 = vmatprep.subr.bf16.mxu0 0
    %2337 = vmatpush2.bf16.msra.mxu0 0
    %2338 = vmatprep.subr.bf16.mxu0 0
    %2339 = vmatpush2.bf16.msra.mxu0 0
    %2340 = vmatprep.subr.bf16.mxu0 0
    %2341 = vmatpush2.bf16.msra.mxu0 0
    %2342 = vmatprep.subr.bf16.mxu0 0
    %2343 = vmatpush2.bf16.msra.mxu0 0
    %2344 = vmatprep.subr.bf16.mxu0 0
    %2345 = vmatpush2.bf16.msra.mxu0 0
    %2346 = vmatprep.mubr.bf16.mxu0 0
    %2347 = vmatmul.mubr.bf16.gmra.mxu0 %v2312
    %v2348 = vpop.f32.mrf.mxu0
    %v2349 = vadd.f32 %v2297, %v2348
    %v2350 = vpop.f32.mrf.mxu0
    %v2351 = vpop.f32.mrf.mxu0
    %v2352 = vadd.f32 %v2297, %v2351
    %v2353 = vpop.f32.mrf.mxu0
    %2354 = vdwg.mxu0
    %s2355 = scalar_lea.vmem %s4, 64
    %v2356 = vld [vmem:[%s2355] sm:$0xf]
    %v2357 = vld [vmem:[%s2355 + $0x4] sm:$0xf]
    %v2358 = vld [vmem:[%s2355 + $0x8] sm:$0xf]
    %v2359 = vld [vmem:[%s2355 + $0xc] sm:$0xf]
    %s2360 = scalar_lea.vmem %s7, 4
    %v2361 = vld [vmem:[%s2360] sm:$0x1]
    %v2363 = vlaneseq
    %v2364 = vshrl.u32 %v2363, 7
    %v2365 = vsub.s32 0, %v2364
    %v2366 = vrot.slane %v2361, %v2365
    %v2372 = vunpack.c.l.b16 %v2356
    %v2373 = vunpack.c.l.b16 %v2357
    %v2374 = vunpack.c.l.b16 %v2358
    %v2375 = vunpack.c.l.b16 %v2359
    %v2376 = vpack.c.b16 %v2373, %v2372
    %v2377 = vpack.c.b16 %v2375, %v2374
    %2380 = vmatprep.subr.bf16.mxu0 0
    %2381 = vmatpush1.bf16.msra.mxu0 0
    %2382 = vmatprep.subr.bf16.mxu0 0
    %2383 = vmatpush1.bf16.msra.mxu0 0
    %2384 = vmatprep.subr.bf16.mxu0 0
    %2385 = vmatpush1.bf16.msra.mxu0 0
    %2386 = vmatprep.subr.bf16.mxu0 0
    %2387 = vmatpush1.bf16.msra.mxu0 0
    %2388 = vmatprep.subr.bf16.mxu0 0
    %2389 = vmatpush1.bf16.msra.mxu0 0
    %2390 = vmatprep.subr.bf16.mxu0 0
    %2391 = vmatpush1.bf16.msra.mxu0 0
    %2392 = vmatprep.subr.bf16.mxu0 0
    %2393 = vmatpush1.bf16.msra.mxu0 %v2377
    %2394 = vmatprep.subr.bf16.mxu0 0
    %2395 = vmatpush1.bf16.msra.mxu0 %v2376
    %2396 = vmatprep.subr.bf16.mxu0 0
    %2397 = vmatpush2.bf16.msra.mxu0 0
    %2398 = vmatprep.subr.bf16.mxu0 0
    %2399 = vmatpush2.bf16.msra.mxu0 0
    %2400 = vmatprep.subr.bf16.mxu0 0
    %2401 = vmatpush2.bf16.msra.mxu0 0
    %2402 = vmatprep.subr.bf16.mxu0 0
    %2403 = vmatpush2.bf16.msra.mxu0 0
    %2404 = vmatprep.subr.bf16.mxu0 0
    %2405 = vmatpush2.bf16.msra.mxu0 0
    %2406 = vmatprep.subr.bf16.mxu0 0
    %2407 = vmatpush2.bf16.msra.mxu0 0
    %2408 = vmatprep.subr.bf16.mxu0 0
    %2409 = vmatpush2.bf16.msra.mxu0 0
    %2410 = vmatprep.subr.bf16.mxu0 0
    %2411 = vmatpush2.bf16.msra.mxu0 0
    %2412 = vmatprep.mubr.bf16.mxu0 0
    %2413 = vmatmul.mubr.bf16.gmra.mxu0 %v2312
    %v2414 = vpop.f32.mrf.mxu0
    %v2415 = vadd.f32 %v2366, %v2414
    %v2416 = vpop.f32.mrf.mxu0
    %v2417 = vpop.f32.mrf.mxu0
    %v2418 = vadd.f32 %v2366, %v2417
    %v2419 = vpop.f32.mrf.mxu0
    %2420 = vdwg.mxu0
    %s2421 = scalar_lea.vmem %s5, 64
    %v2422 = vld [vmem:[%s2421] sm:$0xf]
    %v2423 = vld [vmem:[%s2421 + $0x4] sm:$0xf]
    %v2424 = vld [vmem:[%s2421 + $0x8] sm:$0xf]
    %v2425 = vld [vmem:[%s2421 + $0xc] sm:$0xf]
    %s2426 = scalar_lea.vmem %s8, 4
    %v2427 = vld [vmem:[%s2426] sm:$0x1]
    %v2429 = vlaneseq
    %v2430 = vshrl.u32 %v2429, 7
    %v2431 = vsub.s32 0, %v2430
    %v2432 = vrot.slane %v2427, %v2431
    %v2438 = vunpack.c.l.b16 %v2422
    %v2439 = vunpack.c.l.b16 %v2423
    %v2440 = vunpack.c.l.b16 %v2424
    %v2441 = vunpack.c.l.b16 %v2425
    %v2442 = vpack.c.b16 %v2439, %v2438
    %v2443 = vpack.c.b16 %v2441, %v2440
    %2446 = vmatprep.subr.bf16.mxu0 0
    %2447 = vmatpush1.bf16.msra.mxu0 0
    %2448 = vmatprep.subr.bf16.mxu0 0
    %2449 = vmatpush1.bf16.msra.mxu0 0
    %2450 = vmatprep.subr.bf16.mxu0 0
    %2451 = vmatpush1.bf16.msra.mxu0 0
    %2452 = vmatprep.subr.bf16.mxu0 0
    %2453 = vmatpush1.bf16.msra.mxu0 0
    %2454 = vmatprep.subr.bf16.mxu0 0
    %2455 = vmatpush1.bf16.msra.mxu0 0
    %2456 = vmatprep.subr.bf16.mxu0 0
    %2457 = vmatpush1.bf16.msra.mxu0 0
    %2458 = vmatprep.subr.bf16.mxu0 0
    %2459 = vmatpush1.bf16.msra.mxu0 %v2443
    %2460 = vmatprep.subr.bf16.mxu0 0
    %2461 = vmatpush1.bf16.msra.mxu0 %v2442
    %2462 = vmatprep.subr.bf16.mxu0 0
    %2463 = vmatpush2.bf16.msra.mxu0 0
    %2464 = vmatprep.subr.bf16.mxu0 0
    %2465 = vmatpush2.bf16.msra.mxu0 0
    %2466 = vmatprep.subr.bf16.mxu0 0
    %2467 = vmatpush2.bf16.msra.mxu0 0
    %2468 = vmatprep.subr.bf16.mxu0 0
    %2469 = vmatpush2.bf16.msra.mxu0 0
    %2470 = vmatprep.subr.bf16.mxu0 0
    %2471 = vmatpush2.bf16.msra.mxu0 0
    %2472 = vmatprep.subr.bf16.mxu0 0
    %2473 = vmatpush2.bf16.msra.mxu0 0
    %2474 = vmatprep.subr.bf16.mxu0 0
    %2475 = vmatpush2.bf16.msra.mxu0 0
    %2476 = vmatprep.subr.bf16.mxu0 0
    %2477 = vmatpush2.bf16.msra.mxu0 0
    %2478 = vmatprep.mubr.bf16.mxu0 0
    %2479 = vmatmul.mubr.bf16.gmra.mxu0 %v2312
    %v2480 = vpop.f32.mrf.mxu0
    %v2481 = vadd.f32 %v2432, %v2480
    %v2482 = vpop.f32.mrf.mxu0
    %v2483 = vpop.f32.mrf.mxu0
    %v2484 = vadd.f32 %v2432, %v2483
    %v2485 = vpop.f32.mrf.mxu0
    %2486 = vdwg.mxu0
    %v2487 = vpack.c.bf16 %v2349, %v2349
    %v2488 = vpack.c.bf16 %v2352, %v2352
    %v2489 = vpack.c.bf16 %v2415, %v2415
    %v2490 = vpack.c.bf16 %v2418, %v2418
    %v2491 = vpack.c.bf16 %v2481, %v2481
    %v2492 = vpack.c.bf16 %v2484, %v2484
    %v2494 = vsel %vm326, %v2487, 0
    %v2497 = vsel %vm326, %v2489, 0
    %2499 = vmatprep.subr.bf16.mxu0 0
    %2500 = vmatpush1.bf16.xpose.msra.mxu0 0
    %2501 = vmatprep.subr.bf16.mxu0 0
    %2502 = vmatpush1.bf16.xpose.msra.mxu0 0
    %2503 = vmatprep.subr.bf16.mxu0 0
    %2504 = vmatpush1.bf16.xpose.msra.mxu0 0
    %2505 = vmatprep.subr.bf16.mxu0 0
    %2506 = vmatpush1.bf16.xpose.msra.mxu0 0
    %2507 = vmatprep.subr.bf16.mxu0 0
    %2508 = vmatpush1.bf16.xpose.msra.mxu0 0
    %2509 = vmatprep.subr.bf16.mxu0 0
    %2510 = vmatpush1.bf16.xpose.msra.mxu0 0
    %2511 = vmatprep.subr.bf16.mxu0 0
    %2512 = vmatpush1.bf16.xpose.msra.mxu0 0
    %2513 = vmatprep.subr.bf16.mxu0 0
    %2514 = vmatpush1.bf16.xpose.msra.mxu0 %v2497
    %2515 = vmatprep.subr.bf16.mxu0 0
    %2516 = vmatpush2.bf16.xpose.msra.mxu0 0
    %2517 = vmatprep.subr.bf16.mxu0 0
    %2518 = vmatpush2.bf16.xpose.msra.mxu0 0
    %2519 = vmatprep.subr.bf16.mxu0 0
    %2520 = vmatpush2.bf16.xpose.msra.mxu0 0
    %2521 = vmatprep.subr.bf16.mxu0 0
    %2522 = vmatpush2.bf16.xpose.msra.mxu0 0
    %2523 = vmatprep.subr.bf16.mxu0 0
    %2524 = vmatpush2.bf16.xpose.msra.mxu0 0
    %2525 = vmatprep.subr.bf16.mxu0 0
    %2526 = vmatpush2.bf16.xpose.msra.mxu0 0
    %2527 = vmatprep.subr.bf16.mxu0 0
    %2528 = vmatpush2.bf16.xpose.msra.mxu0 0
    %2529 = vmatprep.subr.bf16.mxu0 0
    %2530 = vmatpush2.bf16.xpose.msra.mxu0 0
    %2531 = vmatprep.mubr.bf16.mxu0 0
    %2532 = vmatmul.mubr.bf16.gmra.mxu0 %v2494
    %v2533 = vpop.f32.mrf.mxu0
    %v2534 = vadd.f32 0.0, %v2533
    %v2535 = vpop.f32.mrf.mxu0
    %v2536 = vpop.f32.mrf.mxu0
    %v2537 = vpop.f32.mrf.mxu0
    %2538 = vdwg.mxu0
    %v2540 = vsel %vm326, %v2488, 0
    %v2543 = vsel %vm326, %v2490, 0
    %2545 = vmatprep.subr.bf16.mxu0 0
    %2546 = vmatpush1.bf16.xpose.msra.mxu0 0
    %2547 = vmatprep.subr.bf16.mxu0 0
    %2548 = vmatpush1.bf16.xpose.msra.mxu0 0
    %2549 = vmatprep.subr.bf16.mxu0 0
    %2550 = vmatpush1.bf16.xpose.msra.mxu0 0
    %2551 = vmatprep.subr.bf16.mxu0 0
    %2552 = vmatpush1.bf16.xpose.msra.mxu0 0
    %2553 = vmatprep.subr.bf16.mxu0 0
    %2554 = vmatpush1.bf16.xpose.msra.mxu0 0
    %2555 = vmatprep.subr.bf16.mxu0 0
    %2556 = vmatpush1.bf16.xpose.msra.mxu0 0
    %2557 = vmatprep.subr.bf16.mxu0 0
    %2558 = vmatpush1.bf16.xpose.msra.mxu0 0
    %2559 = vmatprep.subr.bf16.mxu0 0
    %2560 = vmatpush1.bf16.xpose.msra.mxu0 %v2543
    %2561 = vmatprep.subr.bf16.mxu0 0
    %2562 = vmatpush2.bf16.xpose.msra.mxu0 0
    %2563 = vmatprep.subr.bf16.mxu0 0
    %2564 = vmatpush2.bf16.xpose.msra.mxu0 0
    %2565 = vmatprep.subr.bf16.mxu0 0
    %2566 = vmatpush2.bf16.xpose.msra.mxu0 0
    %2567 = vmatprep.subr.bf16.mxu0 0
    %2568 = vmatpush2.bf16.xpose.msra.mxu0 0
    %2569 = vmatprep.subr.bf16.mxu0 0
    %2570 = vmatpush2.bf16.xpose.msra.mxu0 0
    %2571 = vmatprep.subr.bf16.mxu0 0
    %2572 = vmatpush2.bf16.xpose.msra.mxu0 0
    %2573 = vmatprep.subr.bf16.mxu0 0
    %2574 = vmatpush2.bf16.xpose.msra.mxu0 0
    %2575 = vmatprep.subr.bf16.mxu0 0
    %2576 = vmatpush2.bf16.xpose.msra.mxu0 0
    %2577 = vmatprep.mubr.bf16.mxu0 0
    %2578 = vmatmul.mubr.bf16.gmra.mxu0 %v2540
    %v2579 = vpop.f32.mrf.mxu0
    %v2580 = vadd.f32 0.0, %v2579
    %v2581 = vpop.f32.mrf.mxu0
    %v2582 = vpop.f32.mrf.mxu0
    %v2583 = vpop.f32.mrf.mxu0
    %2584 = vdwg.mxu0
    %v2585 = vmul.f32 %v2534, 0.35355338
    %v2586 = vmul.f32 %v2580, 0.35355338
    %v2587 = vadd.f32 %v2585, %v77
    %v2588 = vadd.f32 %v2586, %v77
    %v2589 = vsel %vm326, %v2587, -inf
    %2590 = vmax.xlane.f32.xlu0 %v2589
    %v2591 = vpop.xlane.xlu0 %2590
    %v2592 = vsel %vm326, %v2588, -inf
    %2593 = vmax.xlane.f32.xlu0 %v2592
    %v2594 = vpop.xlane.xlu0 %2593
    %v2595 = vsub.f32 %v2587, %v2591
    %v2596 = vsub.f32 %v2588, %v2594
    %v2597 = vmul.f32 %v2595, 1.442695
    %v2598 = vpow.pop %v2597
    %v2599 = vmul.f32 %v2596, 1.442695
    %v2600 = vpow.pop %v2599
    %v2601 = vsel %vm326, %v2598, 0.0
    %2602 = vadd.xlane.f32.xlu0 %v2601
    %v2603 = vpop.xlane.xlu0 %2602
    %v2604 = vsel %vm326, %v2600, 0.0
    %2605 = vadd.xlane.f32.xlu0 %v2604
    %v2606 = vpop.xlane.xlu0 %2605
    %v2607 = vrcp.pop %v2603
    %v2608 = vrcp.pop %v2606
    %v2609 = vmul.f32 %v2598, %v2607
    %v2610 = vmul.f32 %v2600, %v2608
    %v2611 = vpack.c.bf16 %v2609, %v2609
    %v2612 = vpack.c.bf16 %v2610, %v2610
    %v2614 = vsel %vm326, %v2611, 0
    %v2617 = vsel %vm450, %v2491, 0
    %2619 = vmatprep.subr.bf16.mxu0 0
    %2620 = vmatpush1.bf16.msra.mxu0 0
    %2621 = vmatprep.subr.bf16.mxu0 0
    %2622 = vmatpush1.bf16.msra.mxu0 0
    %2623 = vmatprep.subr.bf16.mxu0 0
    %2624 = vmatpush1.bf16.msra.mxu0 0
    %2625 = vmatprep.subr.bf16.mxu0 0
    %2626 = vmatpush1.bf16.msra.mxu0 0
    %2627 = vmatprep.subr.bf16.mxu0 0
    %2628 = vmatpush1.bf16.msra.mxu0 0
    %2629 = vmatprep.subr.bf16.mxu0 0
    %2630 = vmatpush1.bf16.msra.mxu0 0
    %2631 = vmatprep.subr.bf16.mxu0 0
    %2632 = vmatpush1.bf16.msra.mxu0 0
    %2633 = vmatprep.subr.bf16.mxu0 0
    %2634 = vmatpush1.bf16.msra.mxu0 %v2617
    %2635 = vmatprep.subr.bf16.mxu0 0
    %2636 = vmatpush2.bf16.msra.mxu0 0
    %2637 = vmatprep.subr.bf16.mxu0 0
    %2638 = vmatpush2.bf16.msra.mxu0 0
    %2639 = vmatprep.subr.bf16.mxu0 0
    %2640 = vmatpush2.bf16.msra.mxu0 0
    %2641 = vmatprep.subr.bf16.mxu0 0
    %2642 = vmatpush2.bf16.msra.mxu0 0
    %2643 = vmatprep.subr.bf16.mxu0 0
    %2644 = vmatpush2.bf16.msra.mxu0 0
    %2645 = vmatprep.subr.bf16.mxu0 0
    %2646 = vmatpush2.bf16.msra.mxu0 0
    %2647 = vmatprep.subr.bf16.mxu0 0
    %2648 = vmatpush2.bf16.msra.mxu0 0
    %2649 = vmatprep.subr.bf16.mxu0 0
    %2650 = vmatpush2.bf16.msra.mxu0 0
    %2651 = vmatprep.mubr.bf16.mxu0 0
    %2652 = vmatmul.mubr.bf16.gmra.mxu0 %v2614
    %v2653 = vpop.f32.mrf.mxu0
    %v2654 = vadd.f32 0.0, %v2653
    %v2655 = vpop.f32.mrf.mxu0
    %v2656 = vpop.f32.mrf.mxu0
    %v2657 = vpop.f32.mrf.mxu0
    %2658 = vdwg.mxu0
    %v2660 = vsel %vm326, %v2612, 0
    %v2663 = vsel %vm450, %v2492, 0
    %2665 = vmatprep.subr.bf16.mxu0 0
    %2666 = vmatpush1.bf16.msra.mxu0 0
    %2667 = vmatprep.subr.bf16.mxu0 0
    %2668 = vmatpush1.bf16.msra.mxu0 0
    %2669 = vmatprep.subr.bf16.mxu0 0
    %2670 = vmatpush1.bf16.msra.mxu0 0
    %2671 = vmatprep.subr.bf16.mxu0 0
    %2672 = vmatpush1.bf16.msra.mxu0 0
    %2673 = vmatprep.subr.bf16.mxu0 0
    %2674 = vmatpush1.bf16.msra.mxu0 0
    %2675 = vmatprep.subr.bf16.mxu0 0
    %2676 = vmatpush1.bf16.msra.mxu0 0
    %2677 = vmatprep.subr.bf16.mxu0 0
    %2678 = vmatpush1.bf16.msra.mxu0 0
    %2679 = vmatprep.subr.bf16.mxu0 0
    %2680 = vmatpush1.bf16.msra.mxu0 %v2663
    %2681 = vmatprep.subr.bf16.mxu0 0
    %2682 = vmatpush2.bf16.msra.mxu0 0
    %2683 = vmatprep.subr.bf16.mxu0 0
    %2684 = vmatpush2.bf16.msra.mxu0 0
    %2685 = vmatprep.subr.bf16.mxu0 0
    %2686 = vmatpush2.bf16.msra.mxu0 0
    %2687 = vmatprep.subr.bf16.mxu0 0
    %2688 = vmatpush2.bf16.msra.mxu0 0
    %2689 = vmatprep.subr.bf16.mxu0 0
    %2690 = vmatpush2.bf16.msra.mxu0 0
    %2691 = vmatprep.subr.bf16.mxu0 0
    %2692 = vmatpush2.bf16.msra.mxu0 0
    %2693 = vmatprep.subr.bf16.mxu0 0
    %2694 = vmatpush2.bf16.msra.mxu0 0
    %2695 = vmatprep.subr.bf16.mxu0 0
    %2696 = vmatpush2.bf16.msra.mxu0 0
    %2697 = vmatprep.mubr.bf16.mxu0 0
    %2698 = vmatmul.mubr.bf16.gmra.mxu0 %v2660
    %v2699 = vpop.f32.mrf.mxu0
    %v2700 = vadd.f32 0.0, %v2699
    %v2701 = vpop.f32.mrf.mxu0
    %v2702 = vpop.f32.mrf.mxu0
    %v2703 = vpop.f32.mrf.mxu0
    %2704 = vdwg.mxu0
    %v2705 = vpack.c.bf16 %v2700, %v2654
    %s2706 = scalar_lea.vmem %s9, 16
    %v2707 = vld [vmem:[%s2706] sm:$0xf]
    %s2708 = scalar_lea.vmem %s3, 80
    %v2709 = vld [vmem:[%s2708] sm:$0xf]
    %v2710 = vld [vmem:[%s2708 + $0x4] sm:$0xf]
    %v2711 = vld [vmem:[%s2708 + $0x8] sm:$0xf]
    %v2712 = vld [vmem:[%s2708 + $0xc] sm:$0xf]
    %s2713 = scalar_lea.vmem %s6, 5
    %v2714 = vld [vmem:[%s2713] sm:$0x1]
    %v2716 = vlaneseq
    %v2717 = vshrl.u32 %v2716, 7
    %v2718 = vsub.s32 0, %v2717
    %v2719 = vrot.slane %v2714, %v2718
    %v2725 = vunpack.c.l.b16 %v2709
    %v2726 = vunpack.c.l.b16 %v2710
    %v2727 = vunpack.c.l.b16 %v2711
    %v2728 = vunpack.c.l.b16 %v2712
    %v2729 = vpack.c.b16 %v2726, %v2725
    %v2730 = vpack.c.b16 %v2728, %v2727
    %2733 = vmatprep.subr.bf16.mxu0 0
    %2734 = vmatpush1.bf16.msra.mxu0 0
    %2735 = vmatprep.subr.bf16.mxu0 0
    %2736 = vmatpush1.bf16.msra.mxu0 0
    %2737 = vmatprep.subr.bf16.mxu0 0
    %2738 = vmatpush1.bf16.msra.mxu0 0
    %2739 = vmatprep.subr.bf16.mxu0 0
    %2740 = vmatpush1.bf16.msra.mxu0 0
    %2741 = vmatprep.subr.bf16.mxu0 0
    %2742 = vmatpush1.bf16.msra.mxu0 0
    %2743 = vmatprep.subr.bf16.mxu0 0
    %2744 = vmatpush1.bf16.msra.mxu0 0
    %2745 = vmatprep.subr.bf16.mxu0 0
    %2746 = vmatpush1.bf16.msra.mxu0 %v2730
    %2747 = vmatprep.subr.bf16.mxu0 0
    %2748 = vmatpush1.bf16.msra.mxu0 %v2729
    %2749 = vmatprep.subr.bf16.mxu0 0
    %2750 = vmatpush2.bf16.msra.mxu0 0
    %2751 = vmatprep.subr.bf16.mxu0 0
    %2752 = vmatpush2.bf16.msra.mxu0 0
    %2753 = vmatprep.subr.bf16.mxu0 0
    %2754 = vmatpush2.bf16.msra.mxu0 0
    %2755 = vmatprep.subr.bf16.mxu0 0
    %2756 = vmatpush2.bf16.msra.mxu0 0
    %2757 = vmatprep.subr.bf16.mxu0 0
    %2758 = vmatpush2.bf16.msra.mxu0 0
    %2759 = vmatprep.subr.bf16.mxu0 0
    %2760 = vmatpush2.bf16.msra.mxu0 0
    %2761 = vmatprep.subr.bf16.mxu0 0
    %2762 = vmatpush2.bf16.msra.mxu0 0
    %2763 = vmatprep.subr.bf16.mxu0 0
    %2764 = vmatpush2.bf16.msra.mxu0 0
    %2765 = vmatprep.mubr.bf16.mxu0 0
    %2766 = vmatmul.mubr.bf16.gmra.mxu0 %v2312
    %v2767 = vpop.f32.mrf.mxu0
    %v2768 = vadd.f32 %v2719, %v2767
    %v2769 = vpop.f32.mrf.mxu0
    %v2770 = vpop.f32.mrf.mxu0
    %v2771 = vadd.f32 %v2719, %v2770
    %v2772 = vpop.f32.mrf.mxu0
    %2773 = vdwg.mxu0
    %s2774 = scalar_lea.vmem %s4, 80
    %v2775 = vld [vmem:[%s2774] sm:$0xf]
    %v2776 = vld [vmem:[%s2774 + $0x4] sm:$0xf]
    %v2777 = vld [vmem:[%s2774 + $0x8] sm:$0xf]
    %v2778 = vld [vmem:[%s2774 + $0xc] sm:$0xf]
    %s2779 = scalar_lea.vmem %s7, 5
    %v2780 = vld [vmem:[%s2779] sm:$0x1]
    %v2782 = vlaneseq
    %v2783 = vshrl.u32 %v2782, 7
    %v2784 = vsub.s32 0, %v2783
    %v2785 = vrot.slane %v2780, %v2784
    %v2791 = vunpack.c.l.b16 %v2775
    %v2792 = vunpack.c.l.b16 %v2776
    %v2793 = vunpack.c.l.b16 %v2777
    %v2794 = vunpack.c.l.b16 %v2778
    %v2795 = vpack.c.b16 %v2792, %v2791
    %v2796 = vpack.c.b16 %v2794, %v2793
    %2799 = vmatprep.subr.bf16.mxu0 0
    %2800 = vmatpush1.bf16.msra.mxu0 0
    %2801 = vmatprep.subr.bf16.mxu0 0
    %2802 = vmatpush1.bf16.msra.mxu0 0
    %2803 = vmatprep.subr.bf16.mxu0 0
    %2804 = vmatpush1.bf16.msra.mxu0 0
    %2805 = vmatprep.subr.bf16.mxu0 0
    %2806 = vmatpush1.bf16.msra.mxu0 0
    %2807 = vmatprep.subr.bf16.mxu0 0
    %2808 = vmatpush1.bf16.msra.mxu0 0
    %2809 = vmatprep.subr.bf16.mxu0 0
    %2810 = vmatpush1.bf16.msra.mxu0 0
    %2811 = vmatprep.subr.bf16.mxu0 0
    %2812 = vmatpush1.bf16.msra.mxu0 %v2796
    %2813 = vmatprep.subr.bf16.mxu0 0
    %2814 = vmatpush1.bf16.msra.mxu0 %v2795
    %2815 = vmatprep.subr.bf16.mxu0 0
    %2816 = vmatpush2.bf16.msra.mxu0 0
    %2817 = vmatprep.subr.bf16.mxu0 0
    %2818 = vmatpush2.bf16.msra.mxu0 0
    %2819 = vmatprep.subr.bf16.mxu0 0
    %2820 = vmatpush2.bf16.msra.mxu0 0
    %2821 = vmatprep.subr.bf16.mxu0 0
    %2822 = vmatpush2.bf16.msra.mxu0 0
    %2823 = vmatprep.subr.bf16.mxu0 0
    %2824 = vmatpush2.bf16.msra.mxu0 0
    %2825 = vmatprep.subr.bf16.mxu0 0
    %2826 = vmatpush2.bf16.msra.mxu0 0
    %2827 = vmatprep.subr.bf16.mxu0 0
    %2828 = vmatpush2.bf16.msra.mxu0 0
    %2829 = vmatprep.subr.bf16.mxu0 0
    %2830 = vmatpush2.bf16.msra.mxu0 0
    %2831 = vmatprep.mubr.bf16.mxu0 0
    %2832 = vmatmul.mubr.bf16.gmra.mxu0 %v2312
    %v2833 = vpop.f32.mrf.mxu0
    %v2834 = vadd.f32 %v2785, %v2833
    %v2835 = vpop.f32.mrf.mxu0
    %v2836 = vpop.f32.mrf.mxu0
    %v2837 = vadd.f32 %v2785, %v2836
    %v2838 = vpop.f32.mrf.mxu0
    %2839 = vdwg.mxu0
    %s2840 = scalar_lea.vmem %s5, 80
    %v2841 = vld [vmem:[%s2840] sm:$0xf]
    %v2842 = vld [vmem:[%s2840 + $0x4] sm:$0xf]
    %v2843 = vld [vmem:[%s2840 + $0x8] sm:$0xf]
    %v2844 = vld [vmem:[%s2840 + $0xc] sm:$0xf]
    %s2845 = scalar_lea.vmem %s8, 5
    %v2846 = vld [vmem:[%s2845] sm:$0x1]
    %v2848 = vlaneseq
    %v2849 = vshrl.u32 %v2848, 7
    %v2850 = vsub.s32 0, %v2849
    %v2851 = vrot.slane %v2846, %v2850
    %v2857 = vunpack.c.l.b16 %v2841
    %v2858 = vunpack.c.l.b16 %v2842
    %v2859 = vunpack.c.l.b16 %v2843
    %v2860 = vunpack.c.l.b16 %v2844
    %v2861 = vpack.c.b16 %v2858, %v2857
    %v2862 = vpack.c.b16 %v2860, %v2859
    %2865 = vmatprep.subr.bf16.mxu0 0
    %2866 = vmatpush1.bf16.msra.mxu0 0
    %2867 = vmatprep.subr.bf16.mxu0 0
    %2868 = vmatpush1.bf16.msra.mxu0 0
    %2869 = vmatprep.subr.bf16.mxu0 0
    %2870 = vmatpush1.bf16.msra.mxu0 0
    %2871 = vmatprep.subr.bf16.mxu0 0
    %2872 = vmatpush1.bf16.msra.mxu0 0
    %2873 = vmatprep.subr.bf16.mxu0 0
    %2874 = vmatpush1.bf16.msra.mxu0 0
    %2875 = vmatprep.subr.bf16.mxu0 0
    %2876 = vmatpush1.bf16.msra.mxu0 0
    %2877 = vmatprep.subr.bf16.mxu0 0
    %2878 = vmatpush1.bf16.msra.mxu0 %v2862
    %2879 = vmatprep.subr.bf16.mxu0 0
    %2880 = vmatpush1.bf16.msra.mxu0 %v2861
    %2881 = vmatprep.subr.bf16.mxu0 0
    %2882 = vmatpush2.bf16.msra.mxu0 0
    %2883 = vmatprep.subr.bf16.mxu0 0
    %2884 = vmatpush2.bf16.msra.mxu0 0
    %2885 = vmatprep.subr.bf16.mxu0 0
    %2886 = vmatpush2.bf16.msra.mxu0 0
    %2887 = vmatprep.subr.bf16.mxu0 0
    %2888 = vmatpush2.bf16.msra.mxu0 0
    %2889 = vmatprep.subr.bf16.mxu0 0
    %2890 = vmatpush2.bf16.msra.mxu0 0
    %2891 = vmatprep.subr.bf16.mxu0 0
    %2892 = vmatpush2.bf16.msra.mxu0 0
    %2893 = vmatprep.subr.bf16.mxu0 0
    %2894 = vmatpush2.bf16.msra.mxu0 0
    %2895 = vmatprep.subr.bf16.mxu0 0
    %2896 = vmatpush2.bf16.msra.mxu0 0
    %2897 = vmatprep.mubr.bf16.mxu0 0
    %2898 = vmatmul.mubr.bf16.gmra.mxu0 %v2312
    %v2899 = vpop.f32.mrf.mxu0
    %v2900 = vadd.f32 %v2851, %v2899
    %v2901 = vpop.f32.mrf.mxu0
    %v2902 = vpop.f32.mrf.mxu0
    %v2903 = vadd.f32 %v2851, %v2902
    %v2904 = vpop.f32.mrf.mxu0
    %2905 = vdwg.mxu0
    %v2906 = vpack.c.bf16 %v2768, %v2768
    %v2907 = vpack.c.bf16 %v2771, %v2771
    %v2908 = vpack.c.bf16 %v2834, %v2834
    %v2909 = vpack.c.bf16 %v2837, %v2837
    %v2910 = vpack.c.bf16 %v2900, %v2900
    %v2911 = vpack.c.bf16 %v2903, %v2903
    %v2913 = vsel %vm326, %v2906, 0
    %v2916 = vsel %vm326, %v2908, 0
    %2918 = vmatprep.subr.bf16.mxu0 0
    %2919 = vmatpush1.bf16.xpose.msra.mxu0 0
    %2920 = vmatprep.subr.bf16.mxu0 0
    %2921 = vmatpush1.bf16.xpose.msra.mxu0 0
    %2922 = vmatprep.subr.bf16.mxu0 0
    %2923 = vmatpush1.bf16.xpose.msra.mxu0 0
    %2924 = vmatprep.subr.bf16.mxu0 0
    %2925 = vmatpush1.bf16.xpose.msra.mxu0 0
    %2926 = vmatprep.subr.bf16.mxu0 0
    %2927 = vmatpush1.bf16.xpose.msra.mxu0 0
    %2928 = vmatprep.subr.bf16.mxu0 0
    %2929 = vmatpush1.bf16.xpose.msra.mxu0 0
    %2930 = vmatprep.subr.bf16.mxu0 0
    %2931 = vmatpush1.bf16.xpose.msra.mxu0 0
    %2932 = vmatprep.subr.bf16.mxu0 0
    %2933 = vmatpush1.bf16.xpose.msra.mxu0 %v2916
    %2934 = vmatprep.subr.bf16.mxu0 0
    %2935 = vmatpush2.bf16.xpose.msra.mxu0 0
    %2936 = vmatprep.subr.bf16.mxu0 0
    %2937 = vmatpush2.bf16.xpose.msra.mxu0 0
    %2938 = vmatprep.subr.bf16.mxu0 0
    %2939 = vmatpush2.bf16.xpose.msra.mxu0 0
    %2940 = vmatprep.subr.bf16.mxu0 0
    %2941 = vmatpush2.bf16.xpose.msra.mxu0 0
    %2942 = vmatprep.subr.bf16.mxu0 0
    %2943 = vmatpush2.bf16.xpose.msra.mxu0 0
    %2944 = vmatprep.subr.bf16.mxu0 0
    %2945 = vmatpush2.bf16.xpose.msra.mxu0 0
    %2946 = vmatprep.subr.bf16.mxu0 0
    %2947 = vmatpush2.bf16.xpose.msra.mxu0 0
    %2948 = vmatprep.subr.bf16.mxu0 0
    %2949 = vmatpush2.bf16.xpose.msra.mxu0 0
    %2950 = vmatprep.mubr.bf16.mxu0 0
    %2951 = vmatmul.mubr.bf16.gmra.mxu0 %v2913
    %v2952 = vpop.f32.mrf.mxu0
    %v2953 = vadd.f32 0.0, %v2952
    %v2954 = vpop.f32.mrf.mxu0
    %v2955 = vpop.f32.mrf.mxu0
    %v2956 = vpop.f32.mrf.mxu0
    %2957 = vdwg.mxu0
    %v2959 = vsel %vm326, %v2907, 0
    %v2962 = vsel %vm326, %v2909, 0
    %2964 = vmatprep.subr.bf16.mxu0 0
    %2965 = vmatpush1.bf16.xpose.msra.mxu0 0
    %2966 = vmatprep.subr.bf16.mxu0 0
    %2967 = vmatpush1.bf16.xpose.msra.mxu0 0
    %2968 = vmatprep.subr.bf16.mxu0 0
    %2969 = vmatpush1.bf16.xpose.msra.mxu0 0
    %2970 = vmatprep.subr.bf16.mxu0 0
    %2971 = vmatpush1.bf16.xpose.msra.mxu0 0
    %2972 = vmatprep.subr.bf16.mxu0 0
    %2973 = vmatpush1.bf16.xpose.msra.mxu0 0
    %2974 = vmatprep.subr.bf16.mxu0 0
    %2975 = vmatpush1.bf16.xpose.msra.mxu0 0
    %2976 = vmatprep.subr.bf16.mxu0 0
    %2977 = vmatpush1.bf16.xpose.msra.mxu0 0
    %2978 = vmatprep.subr.bf16.mxu0 0
    %2979 = vmatpush1.bf16.xpose.msra.mxu0 %v2962
    %2980 = vmatprep.subr.bf16.mxu0 0
    %2981 = vmatpush2.bf16.xpose.msra.mxu0 0
    %2982 = vmatprep.subr.bf16.mxu0 0
    %2983 = vmatpush2.bf16.xpose.msra.mxu0 0
    %2984 = vmatprep.subr.bf16.mxu0 0
    %2985 = vmatpush2.bf16.xpose.msra.mxu0 0
    %2986 = vmatprep.subr.bf16.mxu0 0
    %2987 = vmatpush2.bf16.xpose.msra.mxu0 0
    %2988 = vmatprep.subr.bf16.mxu0 0
    %2989 = vmatpush2.bf16.xpose.msra.mxu0 0
    %2990 = vmatprep.subr.bf16.mxu0 0
    %2991 = vmatpush2.bf16.xpose.msra.mxu0 0
    %2992 = vmatprep.subr.bf16.mxu0 0
    %2993 = vmatpush2.bf16.xpose.msra.mxu0 0
    %2994 = vmatprep.subr.bf16.mxu0 0
    %2995 = vmatpush2.bf16.xpose.msra.mxu0 0
    %2996 = vmatprep.mubr.bf16.mxu0 0
    %2997 = vmatmul.mubr.bf16.gmra.mxu0 %v2959
    %v2998 = vpop.f32.mrf.mxu0
    %v2999 = vadd.f32 0.0, %v2998
    %v3000 = vpop.f32.mrf.mxu0
    %v3001 = vpop.f32.mrf.mxu0
    %v3002 = vpop.f32.mrf.mxu0
    %3003 = vdwg.mxu0
    %v3004 = vmul.f32 %v2953, 0.35355338
    %v3005 = vmul.f32 %v2999, 0.35355338
    %v3006 = vadd.f32 %v3004, %v77
    %v3007 = vadd.f32 %v3005, %v77
    %v3008 = vsel %vm326, %v3006, -inf
    %3009 = vmax.xlane.f32.xlu0 %v3008
    %v3010 = vpop.xlane.xlu0 %3009
    %v3011 = vsel %vm326, %v3007, -inf
    %3012 = vmax.xlane.f32.xlu0 %v3011
    %v3013 = vpop.xlane.xlu0 %3012
    %v3014 = vsub.f32 %v3006, %v3010
    %v3015 = vsub.f32 %v3007, %v3013
    %v3016 = vmul.f32 %v3014, 1.442695
    %v3017 = vpow.pop %v3016
    %v3018 = vmul.f32 %v3015, 1.442695
    %v3019 = vpow.pop %v3018
    %v3020 = vsel %vm326, %v3017, 0.0
    %3021 = vadd.xlane.f32.xlu0 %v3020
    %v3022 = vpop.xlane.xlu0 %3021
    %v3023 = vsel %vm326, %v3019, 0.0
    %3024 = vadd.xlane.f32.xlu0 %v3023
    %v3025 = vpop.xlane.xlu0 %3024
    %v3026 = vrcp.pop %v3022
    %v3027 = vrcp.pop %v3025
    %v3028 = vmul.f32 %v3017, %v3026
    %v3029 = vmul.f32 %v3019, %v3027
    %v3030 = vpack.c.bf16 %v3028, %v3028
    %v3031 = vpack.c.bf16 %v3029, %v3029
    %v3033 = vsel %vm326, %v3030, 0
    %v3036 = vsel %vm450, %v2910, 0
    %3038 = vmatprep.subr.bf16.mxu0 0
    %3039 = vmatpush1.bf16.msra.mxu0 0
    %3040 = vmatprep.subr.bf16.mxu0 0
    %3041 = vmatpush1.bf16.msra.mxu0 0
    %3042 = vmatprep.subr.bf16.mxu0 0
    %3043 = vmatpush1.bf16.msra.mxu0 0
    %3044 = vmatprep.subr.bf16.mxu0 0
    %3045 = vmatpush1.bf16.msra.mxu0 0
    %3046 = vmatprep.subr.bf16.mxu0 0
    %3047 = vmatpush1.bf16.msra.mxu0 0
    %3048 = vmatprep.subr.bf16.mxu0 0
    %3049 = vmatpush1.bf16.msra.mxu0 0
    %3050 = vmatprep.subr.bf16.mxu0 0
    %3051 = vmatpush1.bf16.msra.mxu0 0
    %3052 = vmatprep.subr.bf16.mxu0 0
    %3053 = vmatpush1.bf16.msra.mxu0 %v3036
    %3054 = vmatprep.subr.bf16.mxu0 0
    %3055 = vmatpush2.bf16.msra.mxu0 0
    %3056 = vmatprep.subr.bf16.mxu0 0
    %3057 = vmatpush2.bf16.msra.mxu0 0
    %3058 = vmatprep.subr.bf16.mxu0 0
    %3059 = vmatpush2.bf16.msra.mxu0 0
    %3060 = vmatprep.subr.bf16.mxu0 0
    %3061 = vmatpush2.bf16.msra.mxu0 0
    %3062 = vmatprep.subr.bf16.mxu0 0
    %3063 = vmatpush2.bf16.msra.mxu0 0
    %3064 = vmatprep.subr.bf16.mxu0 0
    %3065 = vmatpush2.bf16.msra.mxu0 0
    %3066 = vmatprep.subr.bf16.mxu0 0
    %3067 = vmatpush2.bf16.msra.mxu0 0
    %3068 = vmatprep.subr.bf16.mxu0 0
    %3069 = vmatpush2.bf16.msra.mxu0 0
    %3070 = vmatprep.mubr.bf16.mxu0 0
    %3071 = vmatmul.mubr.bf16.gmra.mxu0 %v3033
    %v3072 = vpop.f32.mrf.mxu0
    %v3073 = vadd.f32 0.0, %v3072
    %v3074 = vpop.f32.mrf.mxu0
    %v3075 = vpop.f32.mrf.mxu0
    %v3076 = vpop.f32.mrf.mxu0
    %3077 = vdwg.mxu0
    %v3079 = vsel %vm326, %v3031, 0
    %v3082 = vsel %vm450, %v2911, 0
    %3084 = vmatprep.subr.bf16.mxu0 0
    %3085 = vmatpush1.bf16.msra.mxu0 0
    %3086 = vmatprep.subr.bf16.mxu0 0
    %3087 = vmatpush1.bf16.msra.mxu0 0
    %3088 = vmatprep.subr.bf16.mxu0 0
    %3089 = vmatpush1.bf16.msra.mxu0 0
    %3090 = vmatprep.subr.bf16.mxu0 0
    %3091 = vmatpush1.bf16.msra.mxu0 0
    %3092 = vmatprep.subr.bf16.mxu0 0
    %3093 = vmatpush1.bf16.msra.mxu0 0
    %3094 = vmatprep.subr.bf16.mxu0 0
    %3095 = vmatpush1.bf16.msra.mxu0 0
    %3096 = vmatprep.subr.bf16.mxu0 0
    %3097 = vmatpush1.bf16.msra.mxu0 0
    %3098 = vmatprep.subr.bf16.mxu0 0
    %3099 = vmatpush1.bf16.msra.mxu0 %v3082
    %3100 = vmatprep.subr.bf16.mxu0 0
    %3101 = vmatpush2.bf16.msra.mxu0 0
    %3102 = vmatprep.subr.bf16.mxu0 0
    %3103 = vmatpush2.bf16.msra.mxu0 0
    %3104 = vmatprep.subr.bf16.mxu0 0
    %3105 = vmatpush2.bf16.msra.mxu0 0
    %3106 = vmatprep.subr.bf16.mxu0 0
    %3107 = vmatpush2.bf16.msra.mxu0 0
    %3108 = vmatprep.subr.bf16.mxu0 0
    %3109 = vmatpush2.bf16.msra.mxu0 0
    %3110 = vmatprep.subr.bf16.mxu0 0
    %3111 = vmatpush2.bf16.msra.mxu0 0
    %3112 = vmatprep.subr.bf16.mxu0 0
    %3113 = vmatpush2.bf16.msra.mxu0 0
    %3114 = vmatprep.subr.bf16.mxu0 0
    %3115 = vmatpush2.bf16.msra.mxu0 0
    %3116 = vmatprep.mubr.bf16.mxu0 0
    %3117 = vmatmul.mubr.bf16.gmra.mxu0 %v3079
    %v3118 = vpop.f32.mrf.mxu0
    %v3119 = vadd.f32 0.0, %v3118
    %v3120 = vpop.f32.mrf.mxu0
    %v3121 = vpop.f32.mrf.mxu0
    %v3122 = vpop.f32.mrf.mxu0
    %3123 = vdwg.mxu0
    %v3124 = vpack.c.bf16 %v3119, %v3073
    %s3125 = scalar_lea.vmem %s9, 20
    %v3126 = vld [vmem:[%s3125] sm:$0xf]
    %v3128 = vsel %vm326, %v3124, 0
    %v3131 = vsel %vm450, %v3126, 0
    %3133 = vmatprep.subr.bf16.mxu0 0
    %3134 = vmatpush1.bf16.msra.mxu0 0
    %3135 = vmatprep.subr.bf16.mxu0 0
    %3136 = vmatpush1.bf16.msra.mxu0 0
    %3137 = vmatprep.subr.bf16.mxu0 0
    %3138 = vmatpush1.bf16.msra.mxu0 0
    %3139 = vmatprep.subr.bf16.mxu0 0
    %3140 = vmatpush1.bf16.msra.mxu0 0
    %3141 = vmatprep.subr.bf16.mxu0 0
    %3142 = vmatpush1.bf16.msra.mxu0 0
    %3143 = vmatprep.subr.bf16.mxu0 0
    %3144 = vmatpush1.bf16.msra.mxu0 0
    %3145 = vmatprep.subr.bf16.mxu0 0
    %3146 = vmatpush1.bf16.msra.mxu0 0
    %3147 = vmatprep.subr.bf16.mxu0 0
    %3148 = vmatpush1.bf16.msra.mxu0 %v3131
    %3149 = vmatprep.subr.bf16.mxu0 0
    %3150 = vmatpush2.bf16.msra.mxu0 0
    %3151 = vmatprep.subr.bf16.mxu0 0
    %3152 = vmatpush2.bf16.msra.mxu0 0
    %3153 = vmatprep.subr.bf16.mxu0 0
    %3154 = vmatpush2.bf16.msra.mxu0 0
    %3155 = vmatprep.subr.bf16.mxu0 0
    %3156 = vmatpush2.bf16.msra.mxu0 0
    %3157 = vmatprep.subr.bf16.mxu0 0
    %3158 = vmatpush2.bf16.msra.mxu0 0
    %3159 = vmatprep.subr.bf16.mxu0 0
    %3160 = vmatpush2.bf16.msra.mxu0 0
    %3161 = vmatprep.subr.bf16.mxu0 0
    %3162 = vmatpush2.bf16.msra.mxu0 0
    %3163 = vmatprep.subr.bf16.mxu0 0
    %3164 = vmatpush2.bf16.msra.mxu0 0
    %3165 = vmatprep.mubr.bf16.mxu0 0
    %3166 = vmatmul.mubr.bf16.gmra.mxu0 %v3128
    %v3167 = vpop.f32.mrf.mxu0
    %v3168 = vadd.f32 0.0, %v3167
    %v3169 = vpop.f32.mrf.mxu0
    %v3170 = vpop.f32.mrf.mxu0
    %v3171 = vadd.f32 0.0, %v3170
    %v3172 = vpop.f32.mrf.mxu0
    %3173 = vdwg.mxu0
    %v3175 = vsel %vm326, %v2705, 0
    %v3178 = vsel %vm450, %v2707, 0
    %3180 = vmatprep.subr.bf16.mxu0 0
    %3181 = vmatpush1.bf16.msra.mxu0 0
    %3182 = vmatprep.subr.bf16.mxu0 0
    %3183 = vmatpush1.bf16.msra.mxu0 0
    %3184 = vmatprep.subr.bf16.mxu0 0
    %3185 = vmatpush1.bf16.msra.mxu0 0
    %3186 = vmatprep.subr.bf16.mxu0 0
    %3187 = vmatpush1.bf16.msra.mxu0 0
    %3188 = vmatprep.subr.bf16.mxu0 0
    %3189 = vmatpush1.bf16.msra.mxu0 0
    %3190 = vmatprep.subr.bf16.mxu0 0
    %3191 = vmatpush1.bf16.msra.mxu0 0
    %3192 = vmatprep.subr.bf16.mxu0 0
    %3193 = vmatpush1.bf16.msra.mxu0 0
    %3194 = vmatprep.subr.bf16.mxu0 0
    %3195 = vmatpush1.bf16.msra.mxu0 %v3178
    %3196 = vmatprep.subr.bf16.mxu0 0
    %3197 = vmatpush2.bf16.msra.mxu0 0
    %3198 = vmatprep.subr.bf16.mxu0 0
    %3199 = vmatpush2.bf16.msra.mxu0 0
    %3200 = vmatprep.subr.bf16.mxu0 0
    %3201 = vmatpush2.bf16.msra.mxu0 0
    %3202 = vmatprep.subr.bf16.mxu0 0
    %3203 = vmatpush2.bf16.msra.mxu0 0
    %3204 = vmatprep.subr.bf16.mxu0 0
    %3205 = vmatpush2.bf16.msra.mxu0 0
    %3206 = vmatprep.subr.bf16.mxu0 0
    %3207 = vmatpush2.bf16.msra.mxu0 0
    %3208 = vmatprep.subr.bf16.mxu0 0
    %3209 = vmatpush2.bf16.msra.mxu0 0
    %3210 = vmatprep.subr.bf16.mxu0 0
    %3211 = vmatpush2.bf16.msra.mxu0 0
    %3212 = vmatprep.mubr.bf16.mxu0 0
    %3213 = vmatmul.mubr.bf16.gmra.mxu0 %v3175
    %v3214 = vpop.f32.mrf.mxu0
    %v3215 = vadd.f32 %v3168, %v3214
    %v3216 = vpop.f32.mrf.mxu0
    %v3217 = vpop.f32.mrf.mxu0
    %v3218 = vadd.f32 %v3171, %v3217
    %v3219 = vpop.f32.mrf.mxu0
    %3220 = vdwg.mxu0
    %s3221 = scalar_lea.vmem %s3, 96
    %v3222 = vld [vmem:[%s3221] sm:$0xf]
    %v3223 = vld [vmem:[%s3221 + $0x4] sm:$0xf]
    %v3224 = vld [vmem:[%s3221 + $0x8] sm:$0xf]
    %v3225 = vld [vmem:[%s3221 + $0xc] sm:$0xf]
    %s3226 = scalar_lea.vmem %s6, 6
    %v3227 = vld [vmem:[%s3226] sm:$0x1]
    %v3229 = vlaneseq
    %v3230 = vshrl.u32 %v3229, 7
    %v3231 = vsub.s32 0, %v3230
    %v3232 = vrot.slane %v3227, %v3231
    %v3238 = vunpack.c.l.b16 %v3222
    %v3239 = vunpack.c.l.b16 %v3223
    %v3240 = vunpack.c.l.b16 %v3224
    %v3241 = vunpack.c.l.b16 %v3225
    %v3242 = vpack.c.b16 %v3239, %v3238
    %v3243 = vpack.c.b16 %v3241, %v3240
    %3246 = vmatprep.subr.bf16.mxu0 0
    %3247 = vmatpush1.bf16.msra.mxu0 0
    %3248 = vmatprep.subr.bf16.mxu0 0
    %3249 = vmatpush1.bf16.msra.mxu0 0
    %3250 = vmatprep.subr.bf16.mxu0 0
    %3251 = vmatpush1.bf16.msra.mxu0 0
    %3252 = vmatprep.subr.bf16.mxu0 0
    %3253 = vmatpush1.bf16.msra.mxu0 0
    %3254 = vmatprep.subr.bf16.mxu0 0
    %3255 = vmatpush1.bf16.msra.mxu0 0
    %3256 = vmatprep.subr.bf16.mxu0 0
    %3257 = vmatpush1.bf16.msra.mxu0 0
    %3258 = vmatprep.subr.bf16.mxu0 0
    %3259 = vmatpush1.bf16.msra.mxu0 %v3243
    %3260 = vmatprep.subr.bf16.mxu0 0
    %3261 = vmatpush1.bf16.msra.mxu0 %v3242
    %3262 = vmatprep.subr.bf16.mxu0 0
    %3263 = vmatpush2.bf16.msra.mxu0 0
    %3264 = vmatprep.subr.bf16.mxu0 0
    %3265 = vmatpush2.bf16.msra.mxu0 0
    %3266 = vmatprep.subr.bf16.mxu0 0
    %3267 = vmatpush2.bf16.msra.mxu0 0
    %3268 = vmatprep.subr.bf16.mxu0 0
    %3269 = vmatpush2.bf16.msra.mxu0 0
    %3270 = vmatprep.subr.bf16.mxu0 0
    %3271 = vmatpush2.bf16.msra.mxu0 0
    %3272 = vmatprep.subr.bf16.mxu0 0
    %3273 = vmatpush2.bf16.msra.mxu0 0
    %3274 = vmatprep.subr.bf16.mxu0 0
    %3275 = vmatpush2.bf16.msra.mxu0 0
    %3276 = vmatprep.subr.bf16.mxu0 0
    %3277 = vmatpush2.bf16.msra.mxu0 0
    %3278 = vmatprep.mubr.bf16.mxu0 0
    %3279 = vmatmul.mubr.bf16.gmra.mxu0 %v2312
    %v3280 = vpop.f32.mrf.mxu0
    %v3281 = vadd.f32 %v3232, %v3280
    %v3282 = vpop.f32.mrf.mxu0
    %v3283 = vpop.f32.mrf.mxu0
    %v3284 = vadd.f32 %v3232, %v3283
    %v3285 = vpop.f32.mrf.mxu0
    %3286 = vdwg.mxu0
    %s3287 = scalar_lea.vmem %s4, 96
    %v3288 = vld [vmem:[%s3287] sm:$0xf]
    %v3289 = vld [vmem:[%s3287 + $0x4] sm:$0xf]
    %v3290 = vld [vmem:[%s3287 + $0x8] sm:$0xf]
    %v3291 = vld [vmem:[%s3287 + $0xc] sm:$0xf]
    %s3292 = scalar_lea.vmem %s7, 6
    %v3293 = vld [vmem:[%s3292] sm:$0x1]
    %v3295 = vlaneseq
    %v3296 = vshrl.u32 %v3295, 7
    %v3297 = vsub.s32 0, %v3296
    %v3298 = vrot.slane %v3293, %v3297
    %v3304 = vunpack.c.l.b16 %v3288
    %v3305 = vunpack.c.l.b16 %v3289
    %v3306 = vunpack.c.l.b16 %v3290
    %v3307 = vunpack.c.l.b16 %v3291
    %v3308 = vpack.c.b16 %v3305, %v3304
    %v3309 = vpack.c.b16 %v3307, %v3306
    %3312 = vmatprep.subr.bf16.mxu0 0
    %3313 = vmatpush1.bf16.msra.mxu0 0
    %3314 = vmatprep.subr.bf16.mxu0 0
    %3315 = vmatpush1.bf16.msra.mxu0 0
    %3316 = vmatprep.subr.bf16.mxu0 0
    %3317 = vmatpush1.bf16.msra.mxu0 0
    %3318 = vmatprep.subr.bf16.mxu0 0
    %3319 = vmatpush1.bf16.msra.mxu0 0
    %3320 = vmatprep.subr.bf16.mxu0 0
    %3321 = vmatpush1.bf16.msra.mxu0 0
    %3322 = vmatprep.subr.bf16.mxu0 0
    %3323 = vmatpush1.bf16.msra.mxu0 0
    %3324 = vmatprep.subr.bf16.mxu0 0
    %3325 = vmatpush1.bf16.msra.mxu0 %v3309
    %3326 = vmatprep.subr.bf16.mxu0 0
    %3327 = vmatpush1.bf16.msra.mxu0 %v3308
    %3328 = vmatprep.subr.bf16.mxu0 0
    %3329 = vmatpush2.bf16.msra.mxu0 0
    %3330 = vmatprep.subr.bf16.mxu0 0
    %3331 = vmatpush2.bf16.msra.mxu0 0
    %3332 = vmatprep.subr.bf16.mxu0 0
    %3333 = vmatpush2.bf16.msra.mxu0 0
    %3334 = vmatprep.subr.bf16.mxu0 0
    %3335 = vmatpush2.bf16.msra.mxu0 0
    %3336 = vmatprep.subr.bf16.mxu0 0
    %3337 = vmatpush2.bf16.msra.mxu0 0
    %3338 = vmatprep.subr.bf16.mxu0 0
    %3339 = vmatpush2.bf16.msra.mxu0 0
    %3340 = vmatprep.subr.bf16.mxu0 0
    %3341 = vmatpush2.bf16.msra.mxu0 0
    %3342 = vmatprep.subr.bf16.mxu0 0
    %3343 = vmatpush2.bf16.msra.mxu0 0
    %3344 = vmatprep.mubr.bf16.mxu0 0
    %3345 = vmatmul.mubr.bf16.gmra.mxu0 %v2312
    %v3346 = vpop.f32.mrf.mxu0
    %v3347 = vadd.f32 %v3298, %v3346
    %v3348 = vpop.f32.mrf.mxu0
    %v3349 = vpop.f32.mrf.mxu0
    %v3350 = vadd.f32 %v3298, %v3349
    %v3351 = vpop.f32.mrf.mxu0
    %3352 = vdwg.mxu0
    %s3353 = scalar_lea.vmem %s5, 96
    %v3354 = vld [vmem:[%s3353] sm:$0xf]
    %v3355 = vld [vmem:[%s3353 + $0x4] sm:$0xf]
    %v3356 = vld [vmem:[%s3353 + $0x8] sm:$0xf]
    %v3357 = vld [vmem:[%s3353 + $0xc] sm:$0xf]
    %s3358 = scalar_lea.vmem %s8, 6
    %v3359 = vld [vmem:[%s3358] sm:$0x1]
    %v3361 = vlaneseq
    %v3362 = vshrl.u32 %v3361, 7
    %v3363 = vsub.s32 0, %v3362
    %v3364 = vrot.slane %v3359, %v3363
    %v3370 = vunpack.c.l.b16 %v3354
    %v3371 = vunpack.c.l.b16 %v3355
    %v3372 = vunpack.c.l.b16 %v3356
    %v3373 = vunpack.c.l.b16 %v3357
    %v3374 = vpack.c.b16 %v3371, %v3370
    %v3375 = vpack.c.b16 %v3373, %v3372
    %3378 = vmatprep.subr.bf16.mxu0 0
    %3379 = vmatpush1.bf16.msra.mxu0 0
    %3380 = vmatprep.subr.bf16.mxu0 0
    %3381 = vmatpush1.bf16.msra.mxu0 0
    %3382 = vmatprep.subr.bf16.mxu0 0
    %3383 = vmatpush1.bf16.msra.mxu0 0
    %3384 = vmatprep.subr.bf16.mxu0 0
    %3385 = vmatpush1.bf16.msra.mxu0 0
    %3386 = vmatprep.subr.bf16.mxu0 0
    %3387 = vmatpush1.bf16.msra.mxu0 0
    %3388 = vmatprep.subr.bf16.mxu0 0
    %3389 = vmatpush1.bf16.msra.mxu0 0
    %3390 = vmatprep.subr.bf16.mxu0 0
    %3391 = vmatpush1.bf16.msra.mxu0 %v3375
    %3392 = vmatprep.subr.bf16.mxu0 0
    %3393 = vmatpush1.bf16.msra.mxu0 %v3374
    %3394 = vmatprep.subr.bf16.mxu0 0
    %3395 = vmatpush2.bf16.msra.mxu0 0
    %3396 = vmatprep.subr.bf16.mxu0 0
    %3397 = vmatpush2.bf16.msra.mxu0 0
    %3398 = vmatprep.subr.bf16.mxu0 0
    %3399 = vmatpush2.bf16.msra.mxu0 0
    %3400 = vmatprep.subr.bf16.mxu0 0
    %3401 = vmatpush2.bf16.msra.mxu0 0
    %3402 = vmatprep.subr.bf16.mxu0 0
    %3403 = vmatpush2.bf16.msra.mxu0 0
    %3404 = vmatprep.subr.bf16.mxu0 0
    %3405 = vmatpush2.bf16.msra.mxu0 0
    %3406 = vmatprep.subr.bf16.mxu0 0
    %3407 = vmatpush2.bf16.msra.mxu0 0
    %3408 = vmatprep.subr.bf16.mxu0 0
    %3409 = vmatpush2.bf16.msra.mxu0 0
    %3410 = vmatprep.mubr.bf16.mxu0 0
    %3411 = vmatmul.mubr.bf16.gmra.mxu0 %v2312
    %v3412 = vpop.f32.mrf.mxu0
    %v3413 = vadd.f32 %v3364, %v3412
    %v3414 = vpop.f32.mrf.mxu0
    %v3415 = vpop.f32.mrf.mxu0
    %v3416 = vadd.f32 %v3364, %v3415
    %v3417 = vpop.f32.mrf.mxu0
    %3418 = vdwg.mxu0
    %v3419 = vpack.c.bf16 %v3281, %v3281
    %v3420 = vpack.c.bf16 %v3284, %v3284
    %v3421 = vpack.c.bf16 %v3347, %v3347
    %v3422 = vpack.c.bf16 %v3350, %v3350
    %v3423 = vpack.c.bf16 %v3413, %v3413
    %v3424 = vpack.c.bf16 %v3416, %v3416
    %v3426 = vsel %vm326, %v3419, 0
    %v3429 = vsel %vm326, %v3421, 0
    %3431 = vmatprep.subr.bf16.mxu0 0
    %3432 = vmatpush1.bf16.xpose.msra.mxu0 0
    %3433 = vmatprep.subr.bf16.mxu0 0
    %3434 = vmatpush1.bf16.xpose.msra.mxu0 0
    %3435 = vmatprep.subr.bf16.mxu0 0
    %3436 = vmatpush1.bf16.xpose.msra.mxu0 0
    %3437 = vmatprep.subr.bf16.mxu0 0
    %3438 = vmatpush1.bf16.xpose.msra.mxu0 0
    %3439 = vmatprep.subr.bf16.mxu0 0
    %3440 = vmatpush1.bf16.xpose.msra.mxu0 0
    %3441 = vmatprep.subr.bf16.mxu0 0
    %3442 = vmatpush1.bf16.xpose.msra.mxu0 0
    %3443 = vmatprep.subr.bf16.mxu0 0
    %3444 = vmatpush1.bf16.xpose.msra.mxu0 0
    %3445 = vmatprep.subr.bf16.mxu0 0
    %3446 = vmatpush1.bf16.xpose.msra.mxu0 %v3429
    %3447 = vmatprep.subr.bf16.mxu0 0
    %3448 = vmatpush2.bf16.xpose.msra.mxu0 0
    %3449 = vmatprep.subr.bf16.mxu0 0
    %3450 = vmatpush2.bf16.xpose.msra.mxu0 0
    %3451 = vmatprep.subr.bf16.mxu0 0
    %3452 = vmatpush2.bf16.xpose.msra.mxu0 0
    %3453 = vmatprep.subr.bf16.mxu0 0
    %3454 = vmatpush2.bf16.xpose.msra.mxu0 0
    %3455 = vmatprep.subr.bf16.mxu0 0
    %3456 = vmatpush2.bf16.xpose.msra.mxu0 0
    %3457 = vmatprep.subr.bf16.mxu0 0
    %3458 = vmatpush2.bf16.xpose.msra.mxu0 0
    %3459 = vmatprep.subr.bf16.mxu0 0
    %3460 = vmatpush2.bf16.xpose.msra.mxu0 0
    %3461 = vmatprep.subr.bf16.mxu0 0
    %3462 = vmatpush2.bf16.xpose.msra.mxu0 0
    %3463 = vmatprep.mubr.bf16.mxu0 0
    %3464 = vmatmul.mubr.bf16.gmra.mxu0 %v3426
    %v3465 = vpop.f32.mrf.mxu0
    %v3466 = vadd.f32 0.0, %v3465
    %v3467 = vpop.f32.mrf.mxu0
    %v3468 = vpop.f32.mrf.mxu0
    %v3469 = vpop.f32.mrf.mxu0
    %3470 = vdwg.mxu0
    %v3472 = vsel %vm326, %v3420, 0
    %v3475 = vsel %vm326, %v3422, 0
    %3477 = vmatprep.subr.bf16.mxu0 0
    %3478 = vmatpush1.bf16.xpose.msra.mxu0 0
    %3479 = vmatprep.subr.bf16.mxu0 0
    %3480 = vmatpush1.bf16.xpose.msra.mxu0 0
    %3481 = vmatprep.subr.bf16.mxu0 0
    %3482 = vmatpush1.bf16.xpose.msra.mxu0 0
    %3483 = vmatprep.subr.bf16.mxu0 0
    %3484 = vmatpush1.bf16.xpose.msra.mxu0 0
    %3485 = vmatprep.subr.bf16.mxu0 0
    %3486 = vmatpush1.bf16.xpose.msra.mxu0 0
    %3487 = vmatprep.subr.bf16.mxu0 0
    %3488 = vmatpush1.bf16.xpose.msra.mxu0 0
    %3489 = vmatprep.subr.bf16.mxu0 0
    %3490 = vmatpush1.bf16.xpose.msra.mxu0 0
    %3491 = vmatprep.subr.bf16.mxu0 0
    %3492 = vmatpush1.bf16.xpose.msra.mxu0 %v3475
    %3493 = vmatprep.subr.bf16.mxu0 0
    %3494 = vmatpush2.bf16.xpose.msra.mxu0 0
    %3495 = vmatprep.subr.bf16.mxu0 0
    %3496 = vmatpush2.bf16.xpose.msra.mxu0 0
    %3497 = vmatprep.subr.bf16.mxu0 0
    %3498 = vmatpush2.bf16.xpose.msra.mxu0 0
    %3499 = vmatprep.subr.bf16.mxu0 0
    %3500 = vmatpush2.bf16.xpose.msra.mxu0 0
    %3501 = vmatprep.subr.bf16.mxu0 0
    %3502 = vmatpush2.bf16.xpose.msra.mxu0 0
    %3503 = vmatprep.subr.bf16.mxu0 0
    %3504 = vmatpush2.bf16.xpose.msra.mxu0 0
    %3505 = vmatprep.subr.bf16.mxu0 0
    %3506 = vmatpush2.bf16.xpose.msra.mxu0 0
    %3507 = vmatprep.subr.bf16.mxu0 0
    %3508 = vmatpush2.bf16.xpose.msra.mxu0 0
    %3509 = vmatprep.mubr.bf16.mxu0 0
    %3510 = vmatmul.mubr.bf16.gmra.mxu0 %v3472
    %v3511 = vpop.f32.mrf.mxu0
    %v3512 = vadd.f32 0.0, %v3511
    %v3513 = vpop.f32.mrf.mxu0
    %v3514 = vpop.f32.mrf.mxu0
    %v3515 = vpop.f32.mrf.mxu0
    %3516 = vdwg.mxu0
    %v3517 = vmul.f32 %v3466, 0.35355338
    %v3518 = vmul.f32 %v3512, 0.35355338
    %v3519 = vadd.f32 %v3517, %v77
    %v3520 = vadd.f32 %v3518, %v77
    %v3521 = vsel %vm326, %v3519, -inf
    %3522 = vmax.xlane.f32.xlu0 %v3521
    %v3523 = vpop.xlane.xlu0 %3522
    %v3524 = vsel %vm326, %v3520, -inf
    %3525 = vmax.xlane.f32.xlu0 %v3524
    %v3526 = vpop.xlane.xlu0 %3525
    %v3527 = vsub.f32 %v3519, %v3523
    %v3528 = vsub.f32 %v3520, %v3526
    %v3529 = vmul.f32 %v3527, 1.442695
    %v3530 = vpow.pop %v3529
    %v3531 = vmul.f32 %v3528, 1.442695
    %v3532 = vpow.pop %v3531
    %v3533 = vsel %vm326, %v3530, 0.0
    %3534 = vadd.xlane.f32.xlu0 %v3533
    %v3535 = vpop.xlane.xlu0 %3534
    %v3536 = vsel %vm326, %v3532, 0.0
    %3537 = vadd.xlane.f32.xlu0 %v3536
    %v3538 = vpop.xlane.xlu0 %3537
    %v3539 = vrcp.pop %v3535
    %v3540 = vrcp.pop %v3538
    %v3541 = vmul.f32 %v3530, %v3539
    %v3542 = vmul.f32 %v3532, %v3540
    %v3543 = vpack.c.bf16 %v3541, %v3541
    %v3544 = vpack.c.bf16 %v3542, %v3542
    %v3546 = vsel %vm326, %v3543, 0
    %v3549 = vsel %vm450, %v3423, 0
    %3551 = vmatprep.subr.bf16.mxu0 0
    %3552 = vmatpush1.bf16.msra.mxu0 0
    %3553 = vmatprep.subr.bf16.mxu0 0
    %3554 = vmatpush1.bf16.msra.mxu0 0
    %3555 = vmatprep.subr.bf16.mxu0 0
    %3556 = vmatpush1.bf16.msra.mxu0 0
    %3557 = vmatprep.subr.bf16.mxu0 0
    %3558 = vmatpush1.bf16.msra.mxu0 0
    %3559 = vmatprep.subr.bf16.mxu0 0
    %3560 = vmatpush1.bf16.msra.mxu0 0
    %3561 = vmatprep.subr.bf16.mxu0 0
    %3562 = vmatpush1.bf16.msra.mxu0 0
    %3563 = vmatprep.subr.bf16.mxu0 0
    %3564 = vmatpush1.bf16.msra.mxu0 0
    %3565 = vmatprep.subr.bf16.mxu0 0
    %3566 = vmatpush1.bf16.msra.mxu0 %v3549
    %3567 = vmatprep.subr.bf16.mxu0 0
    %3568 = vmatpush2.bf16.msra.mxu0 0
    %3569 = vmatprep.subr.bf16.mxu0 0
    %3570 = vmatpush2.bf16.msra.mxu0 0
    %3571 = vmatprep.subr.bf16.mxu0 0
    %3572 = vmatpush2.bf16.msra.mxu0 0
    %3573 = vmatprep.subr.bf16.mxu0 0
    %3574 = vmatpush2.bf16.msra.mxu0 0
    %3575 = vmatprep.subr.bf16.mxu0 0
    %3576 = vmatpush2.bf16.msra.mxu0 0
    %3577 = vmatprep.subr.bf16.mxu0 0
    %3578 = vmatpush2.bf16.msra.mxu0 0
    %3579 = vmatprep.subr.bf16.mxu0 0
    %3580 = vmatpush2.bf16.msra.mxu0 0
    %3581 = vmatprep.subr.bf16.mxu0 0
    %3582 = vmatpush2.bf16.msra.mxu0 0
    %3583 = vmatprep.mubr.bf16.mxu0 0
    %3584 = vmatmul.mubr.bf16.gmra.mxu0 %v3546
    %v3585 = vpop.f32.mrf.mxu0
    %v3586 = vadd.f32 0.0, %v3585
    %v3587 = vpop.f32.mrf.mxu0
    %v3588 = vpop.f32.mrf.mxu0
    %v3589 = vpop.f32.mrf.mxu0
    %3590 = vdwg.mxu0
    %v3592 = vsel %vm326, %v3544, 0
    %v3595 = vsel %vm450, %v3424, 0
    %3597 = vmatprep.subr.bf16.mxu0 0
    %3598 = vmatpush1.bf16.msra.mxu0 0
    %3599 = vmatprep.subr.bf16.mxu0 0
    %3600 = vmatpush1.bf16.msra.mxu0 0
    %3601 = vmatprep.subr.bf16.mxu0 0
    %3602 = vmatpush1.bf16.msra.mxu0 0
    %3603 = vmatprep.subr.bf16.mxu0 0
    %3604 = vmatpush1.bf16.msra.mxu0 0
    %3605 = vmatprep.subr.bf16.mxu0 0
    %3606 = vmatpush1.bf16.msra.mxu0 0
    %3607 = vmatprep.subr.bf16.mxu0 0
    %3608 = vmatpush1.bf16.msra.mxu0 0
    %3609 = vmatprep.subr.bf16.mxu0 0
    %3610 = vmatpush1.bf16.msra.mxu0 0
    %3611 = vmatprep.subr.bf16.mxu0 0
    %3612 = vmatpush1.bf16.msra.mxu0 %v3595
    %3613 = vmatprep.subr.bf16.mxu0 0
    %3614 = vmatpush2.bf16.msra.mxu0 0
    %3615 = vmatprep.subr.bf16.mxu0 0
    %3616 = vmatpush2.bf16.msra.mxu0 0
    %3617 = vmatprep.subr.bf16.mxu0 0
    %3618 = vmatpush2.bf16.msra.mxu0 0
    %3619 = vmatprep.subr.bf16.mxu0 0
    %3620 = vmatpush2.bf16.msra.mxu0 0
    %3621 = vmatprep.subr.bf16.mxu0 0
    %3622 = vmatpush2.bf16.msra.mxu0 0
    %3623 = vmatprep.subr.bf16.mxu0 0
    %3624 = vmatpush2.bf16.msra.mxu0 0
    %3625 = vmatprep.subr.bf16.mxu0 0
    %3626 = vmatpush2.bf16.msra.mxu0 0
    %3627 = vmatprep.subr.bf16.mxu0 0
    %3628 = vmatpush2.bf16.msra.mxu0 0
    %3629 = vmatprep.mubr.bf16.mxu0 0
    %3630 = vmatmul.mubr.bf16.gmra.mxu0 %v3592
    %v3631 = vpop.f32.mrf.mxu0
    %v3632 = vadd.f32 0.0, %v3631
    %v3633 = vpop.f32.mrf.mxu0
    %v3634 = vpop.f32.mrf.mxu0
    %v3635 = vpop.f32.mrf.mxu0
    %3636 = vdwg.mxu0
    %v3637 = vpack.c.bf16 %v3632, %v3586
    %s3638 = scalar_lea.vmem %s9, 24
    %v3639 = vld [vmem:[%s3638] sm:$0xf]
    %v3641 = vsel %vm326, %v3637, 0
    %v3644 = vsel %vm450, %v3639, 0
    %3646 = vmatprep.subr.bf16.mxu0 0
    %3647 = vmatpush1.bf16.msra.mxu0 0
    %3648 = vmatprep.subr.bf16.mxu0 0
    %3649 = vmatpush1.bf16.msra.mxu0 0
    %3650 = vmatprep.subr.bf16.mxu0 0
    %3651 = vmatpush1.bf16.msra.mxu0 0
    %3652 = vmatprep.subr.bf16.mxu0 0
    %3653 = vmatpush1.bf16.msra.mxu0 0
    %3654 = vmatprep.subr.bf16.mxu0 0
    %3655 = vmatpush1.bf16.msra.mxu0 0
    %3656 = vmatprep.subr.bf16.mxu0 0
    %3657 = vmatpush1.bf16.msra.mxu0 0
    %3658 = vmatprep.subr.bf16.mxu0 0
    %3659 = vmatpush1.bf16.msra.mxu0 0
    %3660 = vmatprep.subr.bf16.mxu0 0
    %3661 = vmatpush1.bf16.msra.mxu0 %v3644
    %3662 = vmatprep.subr.bf16.mxu0 0
    %3663 = vmatpush2.bf16.msra.mxu0 0
    %3664 = vmatprep.subr.bf16.mxu0 0
    %3665 = vmatpush2.bf16.msra.mxu0 0
    %3666 = vmatprep.subr.bf16.mxu0 0
    %3667 = vmatpush2.bf16.msra.mxu0 0
    %3668 = vmatprep.subr.bf16.mxu0 0
    %3669 = vmatpush2.bf16.msra.mxu0 0
    %3670 = vmatprep.subr.bf16.mxu0 0
    %3671 = vmatpush2.bf16.msra.mxu0 0
    %3672 = vmatprep.subr.bf16.mxu0 0
    %3673 = vmatpush2.bf16.msra.mxu0 0
    %3674 = vmatprep.subr.bf16.mxu0 0
    %3675 = vmatpush2.bf16.msra.mxu0 0
    %3676 = vmatprep.subr.bf16.mxu0 0
    %3677 = vmatpush2.bf16.msra.mxu0 0
    %3678 = vmatprep.mubr.bf16.mxu0 0
    %3679 = vmatmul.mubr.bf16.gmra.mxu0 %v3641
    %v3680 = vpop.f32.mrf.mxu0
    %v3681 = vadd.f32 0.0, %v3680
    %v3682 = vpop.f32.mrf.mxu0
    %v3683 = vpop.f32.mrf.mxu0
    %v3684 = vadd.f32 0.0, %v3683
    %v3685 = vpop.f32.mrf.mxu0
    %3686 = vdwg.mxu0
    %v3687 = vadd.f32 %v3215, %v3681
    %v3688 = vadd.f32 %v3218, %v3684
    %s3689 = scalar_lea.vmem %s3, 112
    %v3690 = vld [vmem:[%s3689] sm:$0xf]
    %v3691 = vld [vmem:[%s3689 + $0x4] sm:$0xf]
    %v3692 = vld [vmem:[%s3689 + $0x8] sm:$0xf]
    %v3693 = vld [vmem:[%s3689 + $0xc] sm:$0xf]
    %s3694 = scalar_lea.vmem %s6, 7
    %v3695 = vld [vmem:[%s3694] sm:$0x1]
    %v3697 = vlaneseq
    %v3698 = vshrl.u32 %v3697, 7
    %v3699 = vsub.s32 0, %v3698
    %v3700 = vrot.slane %v3695, %v3699
    %v3706 = vunpack.c.l.b16 %v3690
    %v3707 = vunpack.c.l.b16 %v3691
    %v3708 = vunpack.c.l.b16 %v3692
    %v3709 = vunpack.c.l.b16 %v3693
    %v3710 = vpack.c.b16 %v3707, %v3706
    %v3711 = vpack.c.b16 %v3709, %v3708
    %3714 = vmatprep.subr.bf16.mxu0 0
    %3715 = vmatpush1.bf16.msra.mxu0 0
    %3716 = vmatprep.subr.bf16.mxu0 0
    %3717 = vmatpush1.bf16.msra.mxu0 0
    %3718 = vmatprep.subr.bf16.mxu0 0
    %3719 = vmatpush1.bf16.msra.mxu0 0
    %3720 = vmatprep.subr.bf16.mxu0 0
    %3721 = vmatpush1.bf16.msra.mxu0 0
    %3722 = vmatprep.subr.bf16.mxu0 0
    %3723 = vmatpush1.bf16.msra.mxu0 0
    %3724 = vmatprep.subr.bf16.mxu0 0
    %3725 = vmatpush1.bf16.msra.mxu0 0
    %3726 = vmatprep.subr.bf16.mxu0 0
    %3727 = vmatpush1.bf16.msra.mxu0 %v3711
    %3728 = vmatprep.subr.bf16.mxu0 0
    %3729 = vmatpush1.bf16.msra.mxu0 %v3710
    %3730 = vmatprep.subr.bf16.mxu0 0
    %3731 = vmatpush2.bf16.msra.mxu0 0
    %3732 = vmatprep.subr.bf16.mxu0 0
    %3733 = vmatpush2.bf16.msra.mxu0 0
    %3734 = vmatprep.subr.bf16.mxu0 0
    %3735 = vmatpush2.bf16.msra.mxu0 0
    %3736 = vmatprep.subr.bf16.mxu0 0
    %3737 = vmatpush2.bf16.msra.mxu0 0
    %3738 = vmatprep.subr.bf16.mxu0 0
    %3739 = vmatpush2.bf16.msra.mxu0 0
    %3740 = vmatprep.subr.bf16.mxu0 0
    %3741 = vmatpush2.bf16.msra.mxu0 0
    %3742 = vmatprep.subr.bf16.mxu0 0
    %3743 = vmatpush2.bf16.msra.mxu0 0
    %3744 = vmatprep.subr.bf16.mxu0 0
    %3745 = vmatpush2.bf16.msra.mxu0 0
    %3746 = vmatprep.mubr.bf16.mxu0 0
    %3747 = vmatmul.mubr.bf16.gmra.mxu0 %v2312
    %v3748 = vpop.f32.mrf.mxu0
    %v3749 = vadd.f32 %v3700, %v3748
    %v3750 = vpop.f32.mrf.mxu0
    %v3751 = vpop.f32.mrf.mxu0
    %v3752 = vadd.f32 %v3700, %v3751
    %v3753 = vpop.f32.mrf.mxu0
    %3754 = vdwg.mxu0
    %s3755 = scalar_lea.vmem %s4, 112
    %v3756 = vld [vmem:[%s3755] sm:$0xf]
    %v3757 = vld [vmem:[%s3755 + $0x4] sm:$0xf]
    %v3758 = vld [vmem:[%s3755 + $0x8] sm:$0xf]
    %v3759 = vld [vmem:[%s3755 + $0xc] sm:$0xf]
    %s3760 = scalar_lea.vmem %s7, 7
    %v3761 = vld [vmem:[%s3760] sm:$0x1]
    %v3763 = vlaneseq
    %v3764 = vshrl.u32 %v3763, 7
    %v3765 = vsub.s32 0, %v3764
    %v3766 = vrot.slane %v3761, %v3765
    %v3772 = vunpack.c.l.b16 %v3756
    %v3773 = vunpack.c.l.b16 %v3757
    %v3774 = vunpack.c.l.b16 %v3758
    %v3775 = vunpack.c.l.b16 %v3759
    %v3776 = vpack.c.b16 %v3773, %v3772
    %v3777 = vpack.c.b16 %v3775, %v3774
    %3780 = vmatprep.subr.bf16.mxu0 0
    %3781 = vmatpush1.bf16.msra.mxu0 0
    %3782 = vmatprep.subr.bf16.mxu0 0
    %3783 = vmatpush1.bf16.msra.mxu0 0
    %3784 = vmatprep.subr.bf16.mxu0 0
    %3785 = vmatpush1.bf16.msra.mxu0 0
    %3786 = vmatprep.subr.bf16.mxu0 0
    %3787 = vmatpush1.bf16.msra.mxu0 0
    %3788 = vmatprep.subr.bf16.mxu0 0
    %3789 = vmatpush1.bf16.msra.mxu0 0
    %3790 = vmatprep.subr.bf16.mxu0 0
    %3791 = vmatpush1.bf16.msra.mxu0 0
    %3792 = vmatprep.subr.bf16.mxu0 0
    %3793 = vmatpush1.bf16.msra.mxu0 %v3777
    %3794 = vmatprep.subr.bf16.mxu0 0
    %3795 = vmatpush1.bf16.msra.mxu0 %v3776
    %3796 = vmatprep.subr.bf16.mxu0 0
    %3797 = vmatpush2.bf16.msra.mxu0 0
    %3798 = vmatprep.subr.bf16.mxu0 0
    %3799 = vmatpush2.bf16.msra.mxu0 0
    %3800 = vmatprep.subr.bf16.mxu0 0
    %3801 = vmatpush2.bf16.msra.mxu0 0
    %3802 = vmatprep.subr.bf16.mxu0 0
    %3803 = vmatpush2.bf16.msra.mxu0 0
    %3804 = vmatprep.subr.bf16.mxu0 0
    %3805 = vmatpush2.bf16.msra.mxu0 0
    %3806 = vmatprep.subr.bf16.mxu0 0
    %3807 = vmatpush2.bf16.msra.mxu0 0
    %3808 = vmatprep.subr.bf16.mxu0 0
    %3809 = vmatpush2.bf16.msra.mxu0 0
    %3810 = vmatprep.subr.bf16.mxu0 0
    %3811 = vmatpush2.bf16.msra.mxu0 0
    %3812 = vmatprep.mubr.bf16.mxu0 0
    %3813 = vmatmul.mubr.bf16.gmra.mxu0 %v2312
    %v3814 = vpop.f32.mrf.mxu0
    %v3815 = vadd.f32 %v3766, %v3814
    %v3816 = vpop.f32.mrf.mxu0
    %v3817 = vpop.f32.mrf.mxu0
    %v3818 = vadd.f32 %v3766, %v3817
    %v3819 = vpop.f32.mrf.mxu0
    %3820 = vdwg.mxu0
    %s3821 = scalar_lea.vmem %s5, 112
    %v3822 = vld [vmem:[%s3821] sm:$0xf]
    %v3823 = vld [vmem:[%s3821 + $0x4] sm:$0xf]
    %v3824 = vld [vmem:[%s3821 + $0x8] sm:$0xf]
    %v3825 = vld [vmem:[%s3821 + $0xc] sm:$0xf]
    %s3826 = scalar_lea.vmem %s8, 7
    %v3827 = vld [vmem:[%s3826] sm:$0x1]
    %v3829 = vlaneseq
    %v3830 = vshrl.u32 %v3829, 7
    %v3831 = vsub.s32 0, %v3830
    %v3832 = vrot.slane %v3827, %v3831
    %v3838 = vunpack.c.l.b16 %v3822
    %v3839 = vunpack.c.l.b16 %v3823
    %v3840 = vunpack.c.l.b16 %v3824
    %v3841 = vunpack.c.l.b16 %v3825
    %v3842 = vpack.c.b16 %v3839, %v3838
    %v3843 = vpack.c.b16 %v3841, %v3840
    %3846 = vmatprep.subr.bf16.mxu0 0
    %3847 = vmatpush1.bf16.msra.mxu0 0
    %3848 = vmatprep.subr.bf16.mxu0 0
    %3849 = vmatpush1.bf16.msra.mxu0 0
    %3850 = vmatprep.subr.bf16.mxu0 0
    %3851 = vmatpush1.bf16.msra.mxu0 0
    %3852 = vmatprep.subr.bf16.mxu0 0
    %3853 = vmatpush1.bf16.msra.mxu0 0
    %3854 = vmatprep.subr.bf16.mxu0 0
    %3855 = vmatpush1.bf16.msra.mxu0 0
    %3856 = vmatprep.subr.bf16.mxu0 0
    %3857 = vmatpush1.bf16.msra.mxu0 0
    %3858 = vmatprep.subr.bf16.mxu0 0
    %3859 = vmatpush1.bf16.msra.mxu0 %v3843
    %3860 = vmatprep.subr.bf16.mxu0 0
    %3861 = vmatpush1.bf16.msra.mxu0 %v3842
    %3862 = vmatprep.subr.bf16.mxu0 0
    %3863 = vmatpush2.bf16.msra.mxu0 0
    %3864 = vmatprep.subr.bf16.mxu0 0
    %3865 = vmatpush2.bf16.msra.mxu0 0
    %3866 = vmatprep.subr.bf16.mxu0 0
    %3867 = vmatpush2.bf16.msra.mxu0 0
    %3868 = vmatprep.subr.bf16.mxu0 0
    %3869 = vmatpush2.bf16.msra.mxu0 0
    %3870 = vmatprep.subr.bf16.mxu0 0
    %3871 = vmatpush2.bf16.msra.mxu0 0
    %3872 = vmatprep.subr.bf16.mxu0 0
    %3873 = vmatpush2.bf16.msra.mxu0 0
    %3874 = vmatprep.subr.bf16.mxu0 0
    %3875 = vmatpush2.bf16.msra.mxu0 0
    %3876 = vmatprep.subr.bf16.mxu0 0
    %3877 = vmatpush2.bf16.msra.mxu0 0
    %3878 = vmatprep.mubr.bf16.mxu0 0
    %3879 = vmatmul.mubr.bf16.gmra.mxu0 %v2312
    %v3880 = vpop.f32.mrf.mxu0
    %v3881 = vadd.f32 %v3832, %v3880
    %v3882 = vpop.f32.mrf.mxu0
    %v3883 = vpop.f32.mrf.mxu0
    %v3884 = vadd.f32 %v3832, %v3883
    %v3885 = vpop.f32.mrf.mxu0
    %3886 = vdwg.mxu0
    %v3887 = vpack.c.bf16 %v3749, %v3749
    %v3888 = vpack.c.bf16 %v3752, %v3752
    %v3889 = vpack.c.bf16 %v3815, %v3815
    %v3890 = vpack.c.bf16 %v3818, %v3818
    %v3891 = vpack.c.bf16 %v3881, %v3881
    %v3892 = vpack.c.bf16 %v3884, %v3884
    %v3894 = vsel %vm326, %v3887, 0
    %v3897 = vsel %vm326, %v3889, 0
    %3899 = vmatprep.subr.bf16.mxu0 0
    %3900 = vmatpush1.bf16.xpose.msra.mxu0 0
    %3901 = vmatprep.subr.bf16.mxu0 0
    %3902 = vmatpush1.bf16.xpose.msra.mxu0 0
    %3903 = vmatprep.subr.bf16.mxu0 0
    %3904 = vmatpush1.bf16.xpose.msra.mxu0 0
    %3905 = vmatprep.subr.bf16.mxu0 0
    %3906 = vmatpush1.bf16.xpose.msra.mxu0 0
    %3907 = vmatprep.subr.bf16.mxu0 0
    %3908 = vmatpush1.bf16.xpose.msra.mxu0 0
    %3909 = vmatprep.subr.bf16.mxu0 0
    %3910 = vmatpush1.bf16.xpose.msra.mxu0 0
    %3911 = vmatprep.subr.bf16.mxu0 0
    %3912 = vmatpush1.bf16.xpose.msra.mxu0 0
    %3913 = vmatprep.subr.bf16.mxu0 0
    %3914 = vmatpush1.bf16.xpose.msra.mxu0 %v3897
    %3915 = vmatprep.subr.bf16.mxu0 0
    %3916 = vmatpush2.bf16.xpose.msra.mxu0 0
    %3917 = vmatprep.subr.bf16.mxu0 0
    %3918 = vmatpush2.bf16.xpose.msra.mxu0 0
    %3919 = vmatprep.subr.bf16.mxu0 0
    %3920 = vmatpush2.bf16.xpose.msra.mxu0 0
    %3921 = vmatprep.subr.bf16.mxu0 0
    %3922 = vmatpush2.bf16.xpose.msra.mxu0 0
    %3923 = vmatprep.subr.bf16.mxu0 0
    %3924 = vmatpush2.bf16.xpose.msra.mxu0 0
    %3925 = vmatprep.subr.bf16.mxu0 0
    %3926 = vmatpush2.bf16.xpose.msra.mxu0 0
    %3927 = vmatprep.subr.bf16.mxu0 0
    %3928 = vmatpush2.bf16.xpose.msra.mxu0 0
    %3929 = vmatprep.subr.bf16.mxu0 0
    %3930 = vmatpush2.bf16.xpose.msra.mxu0 0
    %3931 = vmatprep.mubr.bf16.mxu0 0
    %3932 = vmatmul.mubr.bf16.gmra.mxu0 %v3894
    %v3933 = vpop.f32.mrf.mxu0
    %v3934 = vadd.f32 0.0, %v3933
    %v3935 = vpop.f32.mrf.mxu0
    %v3936 = vpop.f32.mrf.mxu0
    %v3937 = vpop.f32.mrf.mxu0
    %3938 = vdwg.mxu0
    %v3940 = vsel %vm326, %v3888, 0
    %v3943 = vsel %vm326, %v3890, 0
    %3945 = vmatprep.subr.bf16.mxu0 0
    %3946 = vmatpush1.bf16.xpose.msra.mxu0 0
    %3947 = vmatprep.subr.bf16.mxu0 0
    %3948 = vmatpush1.bf16.xpose.msra.mxu0 0
    %3949 = vmatprep.subr.bf16.mxu0 0
    %3950 = vmatpush1.bf16.xpose.msra.mxu0 0
    %3951 = vmatprep.subr.bf16.mxu0 0
    %3952 = vmatpush1.bf16.xpose.msra.mxu0 0
    %3953 = vmatprep.subr.bf16.mxu0 0
    %3954 = vmatpush1.bf16.xpose.msra.mxu0 0
    %3955 = vmatprep.subr.bf16.mxu0 0
    %3956 = vmatpush1.bf16.xpose.msra.mxu0 0
    %3957 = vmatprep.subr.bf16.mxu0 0
    %3958 = vmatpush1.bf16.xpose.msra.mxu0 0
    %3959 = vmatprep.subr.bf16.mxu0 0
    %3960 = vmatpush1.bf16.xpose.msra.mxu0 %v3943
    %3961 = vmatprep.subr.bf16.mxu0 0
    %3962 = vmatpush2.bf16.xpose.msra.mxu0 0
    %3963 = vmatprep.subr.bf16.mxu0 0
    %3964 = vmatpush2.bf16.xpose.msra.mxu0 0
    %3965 = vmatprep.subr.bf16.mxu0 0
    %3966 = vmatpush2.bf16.xpose.msra.mxu0 0
    %3967 = vmatprep.subr.bf16.mxu0 0
    %3968 = vmatpush2.bf16.xpose.msra.mxu0 0
    %3969 = vmatprep.subr.bf16.mxu0 0
    %3970 = vmatpush2.bf16.xpose.msra.mxu0 0
    %3971 = vmatprep.subr.bf16.mxu0 0
    %3972 = vmatpush2.bf16.xpose.msra.mxu0 0
    %3973 = vmatprep.subr.bf16.mxu0 0
    %3974 = vmatpush2.bf16.xpose.msra.mxu0 0
    %3975 = vmatprep.subr.bf16.mxu0 0
    %3976 = vmatpush2.bf16.xpose.msra.mxu0 0
    %3977 = vmatprep.mubr.bf16.mxu0 0
    %3978 = vmatmul.mubr.bf16.gmra.mxu0 %v3940
    %v3979 = vpop.f32.mrf.mxu0
    %v3980 = vadd.f32 0.0, %v3979
    %v3981 = vpop.f32.mrf.mxu0
    %v3982 = vpop.f32.mrf.mxu0
    %v3983 = vpop.f32.mrf.mxu0
    %3984 = vdwg.mxu0
    %v3985 = vmul.f32 %v3934, 0.35355338
    %v3986 = vmul.f32 %v3980, 0.35355338
    %v3987 = vadd.f32 %v3985, %v77
    %v3988 = vadd.f32 %v3986, %v77
    %v3989 = vsel %vm326, %v3987, -inf
    %3990 = vmax.xlane.f32.xlu0 %v3989
    %v3991 = vpop.xlane.xlu0 %3990
    %v3992 = vsel %vm326, %v3988, -inf
    %3993 = vmax.xlane.f32.xlu0 %v3992
    %v3994 = vpop.xlane.xlu0 %3993
    %v3995 = vsub.f32 %v3987, %v3991
    %v3996 = vsub.f32 %v3988, %v3994
    %v3997 = vmul.f32 %v3995, 1.442695
    %v3998 = vpow.pop %v3997
    %v3999 = vmul.f32 %v3996, 1.442695
    %v4000 = vpow.pop %v3999
    %v4001 = vsel %vm326, %v3998, 0.0
    %4002 = vadd.xlane.f32.xlu0 %v4001
    %v4003 = vpop.xlane.xlu0 %4002
    %v4004 = vsel %vm326, %v4000, 0.0
    %4005 = vadd.xlane.f32.xlu0 %v4004
    %v4006 = vpop.xlane.xlu0 %4005
    %v4007 = vrcp.pop %v4003
    %v4008 = vrcp.pop %v4006
    %v4009 = vmul.f32 %v3998, %v4007
    %v4010 = vmul.f32 %v4000, %v4008
    %v4011 = vpack.c.bf16 %v4009, %v4009
    %v4012 = vpack.c.bf16 %v4010, %v4010
    %v4014 = vsel %vm326, %v4011, 0
    %v4017 = vsel %vm450, %v3891, 0
    %4019 = vmatprep.subr.bf16.mxu0 0
    %4020 = vmatpush1.bf16.msra.mxu0 0
    %4021 = vmatprep.subr.bf16.mxu0 0
    %4022 = vmatpush1.bf16.msra.mxu0 0
    %4023 = vmatprep.subr.bf16.mxu0 0
    %4024 = vmatpush1.bf16.msra.mxu0 0
    %4025 = vmatprep.subr.bf16.mxu0 0
    %4026 = vmatpush1.bf16.msra.mxu0 0
    %4027 = vmatprep.subr.bf16.mxu0 0
    %4028 = vmatpush1.bf16.msra.mxu0 0
    %4029 = vmatprep.subr.bf16.mxu0 0
    %4030 = vmatpush1.bf16.msra.mxu0 0
    %4031 = vmatprep.subr.bf16.mxu0 0
    %4032 = vmatpush1.bf16.msra.mxu0 0
    %4033 = vmatprep.subr.bf16.mxu0 0
    %4034 = vmatpush1.bf16.msra.mxu0 %v4017
    %4035 = vmatprep.subr.bf16.mxu0 0
    %4036 = vmatpush2.bf16.msra.mxu0 0
    %4037 = vmatprep.subr.bf16.mxu0 0
    %4038 = vmatpush2.bf16.msra.mxu0 0
    %4039 = vmatprep.subr.bf16.mxu0 0
    %4040 = vmatpush2.bf16.msra.mxu0 0
    %4041 = vmatprep.subr.bf16.mxu0 0
    %4042 = vmatpush2.bf16.msra.mxu0 0
    %4043 = vmatprep.subr.bf16.mxu0 0
    %4044 = vmatpush2.bf16.msra.mxu0 0
    %4045 = vmatprep.subr.bf16.mxu0 0
    %4046 = vmatpush2.bf16.msra.mxu0 0
    %4047 = vmatprep.subr.bf16.mxu0 0
    %4048 = vmatpush2.bf16.msra.mxu0 0
    %4049 = vmatprep.subr.bf16.mxu0 0
    %4050 = vmatpush2.bf16.msra.mxu0 0
    %4051 = vmatprep.mubr.bf16.mxu0 0
    %4052 = vmatmul.mubr.bf16.gmra.mxu0 %v4014
    %v4053 = vpop.f32.mrf.mxu0
    %v4054 = vadd.f32 0.0, %v4053
    %v4055 = vpop.f32.mrf.mxu0
    %v4056 = vpop.f32.mrf.mxu0
    %v4057 = vpop.f32.mrf.mxu0
    %4058 = vdwg.mxu0
    %v4060 = vsel %vm326, %v4012, 0
    %v4063 = vsel %vm450, %v3892, 0
    %4065 = vmatprep.subr.bf16.mxu0 0
    %4066 = vmatpush1.bf16.msra.mxu0 0
    %4067 = vmatprep.subr.bf16.mxu0 0
    %4068 = vmatpush1.bf16.msra.mxu0 0
    %4069 = vmatprep.subr.bf16.mxu0 0
    %4070 = vmatpush1.bf16.msra.mxu0 0
    %4071 = vmatprep.subr.bf16.mxu0 0
    %4072 = vmatpush1.bf16.msra.mxu0 0
    %4073 = vmatprep.subr.bf16.mxu0 0
    %4074 = vmatpush1.bf16.msra.mxu0 0
    %4075 = vmatprep.subr.bf16.mxu0 0
    %4076 = vmatpush1.bf16.msra.mxu0 0
    %4077 = vmatprep.subr.bf16.mxu0 0
    %4078 = vmatpush1.bf16.msra.mxu0 0
    %4079 = vmatprep.subr.bf16.mxu0 0
    %4080 = vmatpush1.bf16.msra.mxu0 %v4063
    %4081 = vmatprep.subr.bf16.mxu0 0
    %4082 = vmatpush2.bf16.msra.mxu0 0
    %4083 = vmatprep.subr.bf16.mxu0 0
    %4084 = vmatpush2.bf16.msra.mxu0 0
    %4085 = vmatprep.subr.bf16.mxu0 0
    %4086 = vmatpush2.bf16.msra.mxu0 0
    %4087 = vmatprep.subr.bf16.mxu0 0
    %4088 = vmatpush2.bf16.msra.mxu0 0
    %4089 = vmatprep.subr.bf16.mxu0 0
    %4090 = vmatpush2.bf16.msra.mxu0 0
    %4091 = vmatprep.subr.bf16.mxu0 0
    %4092 = vmatpush2.bf16.msra.mxu0 0
    %4093 = vmatprep.subr.bf16.mxu0 0
    %4094 = vmatpush2.bf16.msra.mxu0 0
    %4095 = vmatprep.subr.bf16.mxu0 0
    %4096 = vmatpush2.bf16.msra.mxu0 0
    %4097 = vmatprep.mubr.bf16.mxu0 0
    %4098 = vmatmul.mubr.bf16.gmra.mxu0 %v4060
    %v4099 = vpop.f32.mrf.mxu0
    %v4100 = vadd.f32 0.0, %v4099
    %v4101 = vpop.f32.mrf.mxu0
    %v4102 = vpop.f32.mrf.mxu0
    %v4103 = vpop.f32.mrf.mxu0
    %4104 = vdwg.mxu0
    %v4105 = vpack.c.bf16 %v4100, %v4054
    %s4106 = scalar_lea.vmem %s9, 28
    %v4107 = vld [vmem:[%s4106] sm:$0xf]
    %v4109 = vsel %vm326, %v4105, 0
    %v4112 = vsel %vm450, %v4107, 0
    %4114 = vmatprep.subr.bf16.mxu0 0
    %4115 = vmatpush1.bf16.msra.mxu0 0
    %4116 = vmatprep.subr.bf16.mxu0 0
    %4117 = vmatpush1.bf16.msra.mxu0 0
    %4118 = vmatprep.subr.bf16.mxu0 0
    %4119 = vmatpush1.bf16.msra.mxu0 0
    %4120 = vmatprep.subr.bf16.mxu0 0
    %4121 = vmatpush1.bf16.msra.mxu0 0
    %4122 = vmatprep.subr.bf16.mxu0 0
    %4123 = vmatpush1.bf16.msra.mxu0 0
    %4124 = vmatprep.subr.bf16.mxu0 0
    %4125 = vmatpush1.bf16.msra.mxu0 0
    %4126 = vmatprep.subr.bf16.mxu0 0
    %4127 = vmatpush1.bf16.msra.mxu0 0
    %4128 = vmatprep.subr.bf16.mxu0 0
    %4129 = vmatpush1.bf16.msra.mxu0 %v4112
    %4130 = vmatprep.subr.bf16.mxu0 0
    %4131 = vmatpush2.bf16.msra.mxu0 0
    %4132 = vmatprep.subr.bf16.mxu0 0
    %4133 = vmatpush2.bf16.msra.mxu0 0
    %4134 = vmatprep.subr.bf16.mxu0 0
    %4135 = vmatpush2.bf16.msra.mxu0 0
    %4136 = vmatprep.subr.bf16.mxu0 0
    %4137 = vmatpush2.bf16.msra.mxu0 0
    %4138 = vmatprep.subr.bf16.mxu0 0
    %4139 = vmatpush2.bf16.msra.mxu0 0
    %4140 = vmatprep.subr.bf16.mxu0 0
    %4141 = vmatpush2.bf16.msra.mxu0 0
    %4142 = vmatprep.subr.bf16.mxu0 0
    %4143 = vmatpush2.bf16.msra.mxu0 0
    %4144 = vmatprep.subr.bf16.mxu0 0
    %4145 = vmatpush2.bf16.msra.mxu0 0
    %4146 = vmatprep.mubr.bf16.mxu0 0
    %4147 = vmatmul.mubr.bf16.gmra.mxu0 %v4109
    %v4148 = vpop.f32.mrf.mxu0
    %v4149 = vadd.f32 0.0, %v4148
    %v4150 = vpop.f32.mrf.mxu0
    %v4151 = vpop.f32.mrf.mxu0
    %v4152 = vadd.f32 0.0, %v4151
    %v4153 = vpop.f32.mrf.mxu0
    %4154 = vdwg.mxu0
    %v4155 = vadd.f32 %v3687, %v4149
    %v4156 = vadd.f32 %v3688, %v4152
    %v4157 = vadd.f32 %v2237, %v4155
    %v4158 = vadd.f32 %v2238, %v4156
    %s4159 = scalar_lea.vmem %s10, 1
    %v4160 = vld [vmem:[%s4159] sm:$0x1]
    %v4162 = vlaneseq
    %v4163 = vshrl.u32 %v4162, 7
    %v4164 = vsub.s32 0, %v4163
    %v4165 = vrot.slane %v4160, %v4164
    %v4167 = vadd.f32 %v4157, %v4165
    %v4168 = vadd.f32 %v4158, %v4165
    %s4169 = scalar_lea.vmem %s11, 1
    %v4170 = vld [vmem:[%s4169] sm:$0x1]
    %s4171 = scalar_lea.vmem %s12, 1
    %v4172 = vld [vmem:[%s4171] sm:$0x1]
    %v4173 = vsel %vm80, %v4167, 0.0
    %4174 = vadd.xlane.f32.xlu0 %v4173
    %v4175 = vpop.xlane.xlu0 %4174
    %v4176 = vsel %vm80, %v4168, 0.0
    %4177 = vadd.xlane.f32.xlu0 %v4176
    %v4178 = vpop.xlane.xlu0 %4177
    %v4179 = vmul.f32 %v4175, %v87
    %v4180 = vmul.f32 %v4178, %v87
    %v4181 = vsub.f32 %v4167, %v4179
    %v4182 = vsub.f32 %v4168, %v4180
    %v4183 = vmul.f32 %v4181, %v4181
    %v4184 = vmul.f32 %v4182, %v4182
    %v4185 = vsel %vm80, %v4183, 0.0
    %4186 = vadd.xlane.f32.xlu0 %v4185
    %v4187 = vpop.xlane.xlu0 %4186
    %v4188 = vsel %vm80, %v4184, 0.0
    %4189 = vadd.xlane.f32.xlu0 %v4188
    %v4190 = vpop.xlane.xlu0 %4189
    %v4191 = vmul.f32 %v4187, %v87
    %v4192 = vmul.f32 %v4190, %v87
    %v4193 = vadd.f32 %v4191, 1e-05
    %v4194 = vadd.f32 %v4192, 1e-05
    %v4195 = vrsqrt.pop %v4193
    %v4196 = vrsqrt.pop %v4194
    %v4197 = vmul.f32 %v4181, %v4195
    %v4198 = vmul.f32 %v4182, %v4196
    %v4200 = vlaneseq
    %v4201 = vshrl.u32 %v4200, 7
    %v4202 = vsub.s32 0, %v4201
    %v4203 = vrot.slane %v4170, %v4202
    %v4205 = vmul.f32 %v4197, %v4203
    %v4206 = vmul.f32 %v4198, %v4203
    %v4208 = vlaneseq
    %v4209 = vshrl.u32 %v4208, 7
    %v4210 = vsub.s32 0, %v4209
    %v4211 = vrot.slane %v4172, %v4210
    %v4213 = vadd.f32 %v4205, %v4211
    %v4214 = vadd.f32 %v4206, %v4211
    %v4215 = vpack.c.bf16 %v4214, %v4213
    %s4216 = scalar_lea.vmem %s13, 16
    %v4217 = vld [vmem:[%s4216] sm:$0xf]
    %v4218 = vld [vmem:[%s4216 + $0x4] sm:$0xf]
    %v4219 = vld [vmem:[%s4216 + $0x8] sm:$0xf]
    %v4220 = vld [vmem:[%s4216 + $0xc] sm:$0xf]
    %s4221 = scalar_lea.vmem %s14, 1
    %v4222 = vld [vmem:[%s4221] sm:$0x1]
    %v4224 = vlaneseq
    %v4225 = vshrl.u32 %v4224, 7
    %v4226 = vsub.s32 0, %v4225
    %v4227 = vrot.slane %v4222, %v4226
    %v4233 = vunpack.c.l.b16 %v4217
    %v4234 = vunpack.c.l.b16 %v4218
    %v4235 = vunpack.c.l.b16 %v4219
    %v4236 = vunpack.c.l.b16 %v4220
    %v4237 = vpack.c.b16 %v4234, %v4233
    %v4238 = vpack.c.b16 %v4236, %v4235
    %v4242 = vsel %vm80, %v4215, 0
    %4244 = vmatprep.subr.bf16.mxu0 0
    %4245 = vmatpush1.bf16.msra.mxu0 0
    %4246 = vmatprep.subr.bf16.mxu0 0
    %4247 = vmatpush1.bf16.msra.mxu0 0
    %4248 = vmatprep.subr.bf16.mxu0 0
    %4249 = vmatpush1.bf16.msra.mxu0 0
    %4250 = vmatprep.subr.bf16.mxu0 0
    %4251 = vmatpush1.bf16.msra.mxu0 0
    %4252 = vmatprep.subr.bf16.mxu0 0
    %4253 = vmatpush1.bf16.msra.mxu0 0
    %4254 = vmatprep.subr.bf16.mxu0 0
    %4255 = vmatpush1.bf16.msra.mxu0 0
    %4256 = vmatprep.subr.bf16.mxu0 0
    %4257 = vmatpush1.bf16.msra.mxu0 %v4238
    %4258 = vmatprep.subr.bf16.mxu0 0
    %4259 = vmatpush1.bf16.msra.mxu0 %v4237
    %4260 = vmatprep.subr.bf16.mxu0 0
    %4261 = vmatpush2.bf16.msra.mxu0 0
    %4262 = vmatprep.subr.bf16.mxu0 0
    %4263 = vmatpush2.bf16.msra.mxu0 0
    %4264 = vmatprep.subr.bf16.mxu0 0
    %4265 = vmatpush2.bf16.msra.mxu0 0
    %4266 = vmatprep.subr.bf16.mxu0 0
    %4267 = vmatpush2.bf16.msra.mxu0 0
    %4268 = vmatprep.subr.bf16.mxu0 0
    %4269 = vmatpush2.bf16.msra.mxu0 0
    %4270 = vmatprep.subr.bf16.mxu0 0
    %4271 = vmatpush2.bf16.msra.mxu0 0
    %4272 = vmatprep.subr.bf16.mxu0 0
    %4273 = vmatpush2.bf16.msra.mxu0 0
    %4274 = vmatprep.subr.bf16.mxu0 0
    %4275 = vmatpush2.bf16.msra.mxu0 0
    %4276 = vmatprep.mubr.bf16.mxu0 0
    %4277 = vmatmul.mubr.bf16.gmra.mxu0 %v4242
    %v4278 = vpop.f32.mrf.mxu0
    %v4279 = vadd.f32 %v4227, %v4278
    %v4280 = vpop.f32.mrf.mxu0
    %v4281 = vpop.f32.mrf.mxu0
    %v4282 = vadd.f32 %v4227, %v4281
    %v4283 = vpop.f32.mrf.mxu0
    %4284 = vdwg.mxu0
    %v4285 = vmul.f32 %v4279, 0.5
    %v4286 = vmul.f32 %v4282, 0.5
    %v4287 = vmul.f32 %v4279, 0.70710677
    %v4288 = vmul.f32 %v4282, 0.70710677
    %v4289 = verf.f32.pop %v4287
    %v4290 = verf.f32.pop %v4288
    %v4291 = vadd.f32 %v4289, 1.0
    %v4292 = vadd.f32 %v4290, 1.0
    %v4293 = vmul.f32 %v4285, %v4291
    %v4294 = vmul.f32 %v4286, %v4292
    %v4295 = vpack.c.bf16 %v4294, %v4293
    %s4296 = scalar_lea.vmem %s15, 64
    %v4297 = vld [vmem:[%s4296] sm:$0xf]
    %v4298 = vld [vmem:[%s4296 + $0x4] sm:$0xf]
    %v4299 = vld [vmem:[%s4296 + $0x8] sm:$0xf]
    %v4300 = vld [vmem:[%s4296 + $0xc] sm:$0xf]
    %v4301 = vld [vmem:[%s4296 + $0x10] sm:$0xf]
    %v4302 = vld [vmem:[%s4296 + $0x14] sm:$0xf]
    %v4303 = vld [vmem:[%s4296 + $0x18] sm:$0xf]
    %v4304 = vld [vmem:[%s4296 + $0x1c] sm:$0xf]
    %v4305 = vld [vmem:[%s4296 + $0x20] sm:$0xf]
    %v4306 = vld [vmem:[%s4296 + $0x24] sm:$0xf]
    %v4307 = vld [vmem:[%s4296 + $0x28] sm:$0xf]
    %v4308 = vld [vmem:[%s4296 + $0x2c] sm:$0xf]
    %v4309 = vld [vmem:[%s4296 + $0x30] sm:$0xf]
    %v4310 = vld [vmem:[%s4296 + $0x34] sm:$0xf]
    %v4311 = vld [vmem:[%s4296 + $0x38] sm:$0xf]
    %v4312 = vld [vmem:[%s4296 + $0x3c] sm:$0xf]
    %s4313 = scalar_lea.vmem %s16, 1
    %v4314 = vld [vmem:[%s4313] sm:$0x1]
    %v4316 = vlaneseq
    %v4317 = vshrl.u32 %v4316, 7
    %v4318 = vsub.s32 0, %v4317
    %v4319 = vrot.slane %v4314, %v4318
    %v4337 = vunpack.c.l.b16 %v4297
    %v4338 = vunpack.c.l.b16 %v4298
    %v4339 = vunpack.c.l.b16 %v4299
    %v4340 = vunpack.c.l.b16 %v4300
    %v4341 = vunpack.c.l.b16 %v4301
    %v4342 = vunpack.c.l.b16 %v4302
    %v4343 = vunpack.c.l.b16 %v4303
    %v4344 = vunpack.c.l.b16 %v4304
    %v4345 = vunpack.c.l.b16 %v4305
    %v4346 = vunpack.c.l.b16 %v4306
    %v4347 = vunpack.c.l.b16 %v4307
    %v4348 = vunpack.c.l.b16 %v4308
    %v4349 = vunpack.c.l.b16 %v4309
    %v4350 = vunpack.c.l.b16 %v4310
    %v4351 = vunpack.c.l.b16 %v4311
    %v4352 = vunpack.c.l.b16 %v4312
    %v4353 = vpack.c.b16 %v4338, %v4337
    %v4354 = vpack.c.b16 %v4340, %v4339
    %v4355 = vpack.c.b16 %v4342, %v4341
    %v4356 = vpack.c.b16 %v4344, %v4343
    %v4357 = vpack.c.b16 %v4346, %v4345
    %v4358 = vpack.c.b16 %v4348, %v4347
    %v4359 = vpack.c.b16 %v4350, %v4349
    %v4360 = vpack.c.b16 %v4352, %v4351
    %4369 = vmatprep.subr.bf16.mxu0 0
    %4370 = vmatpush1.bf16.msra.mxu0 %v4360
    %4371 = vmatprep.subr.bf16.mxu0 0
    %4372 = vmatpush1.bf16.msra.mxu0 %v4359
    %4373 = vmatprep.subr.bf16.mxu0 0
    %4374 = vmatpush1.bf16.msra.mxu0 %v4358
    %4375 = vmatprep.subr.bf16.mxu0 0
    %4376 = vmatpush1.bf16.msra.mxu0 %v4357
    %4377 = vmatprep.subr.bf16.mxu0 0
    %4378 = vmatpush1.bf16.msra.mxu0 %v4356
    %4379 = vmatprep.subr.bf16.mxu0 0
    %4380 = vmatpush1.bf16.msra.mxu0 %v4355
    %4381 = vmatprep.subr.bf16.mxu0 0
    %4382 = vmatpush1.bf16.msra.mxu0 %v4354
    %4383 = vmatprep.subr.bf16.mxu0 0
    %4384 = vmatpush1.bf16.msra.mxu0 %v4353
    %4385 = vmatprep.subr.bf16.mxu0 0
    %4386 = vmatpush2.bf16.msra.mxu0 0
    %4387 = vmatprep.subr.bf16.mxu0 0
    %4388 = vmatpush2.bf16.msra.mxu0 0
    %4389 = vmatprep.subr.bf16.mxu0 0
    %4390 = vmatpush2.bf16.msra.mxu0 0
    %4391 = vmatprep.subr.bf16.mxu0 0
    %4392 = vmatpush2.bf16.msra.mxu0 0
    %4393 = vmatprep.subr.bf16.mxu0 0
    %4394 = vmatpush2.bf16.msra.mxu0 0
    %4395 = vmatprep.subr.bf16.mxu0 0
    %4396 = vmatpush2.bf16.msra.mxu0 0
    %4397 = vmatprep.subr.bf16.mxu0 0
    %4398 = vmatpush2.bf16.msra.mxu0 0
    %4399 = vmatprep.subr.bf16.mxu0 0
    %4400 = vmatpush2.bf16.msra.mxu0 0
    %4401 = vmatprep.mubr.bf16.mxu0 0
    %4402 = vmatmul.mubr.bf16.gmra.mxu0 %v4295
    %v4403 = vpop.f32.mrf.mxu0
    %v4404 = vadd.f32 %v4319, %v4403
    %v4405 = vpop.f32.mrf.mxu0
    %v4406 = vpop.f32.mrf.mxu0
    %v4407 = vadd.f32 %v4319, %v4406
    %v4408 = vpop.f32.mrf.mxu0
    %4409 = vdwg.mxu0
    %v4410 = vadd.f32 %v4167, %v4404
    %v4411 = vadd.f32 %v4168, %v4407
    %v4412 = vld [vmem:[%s17] sm:$0x1]
    %v4413 = vld [vmem:[%s18] sm:$0x1]
    %v4414 = vsel %vm80, %v4410, 0.0
    %4415 = vadd.xlane.f32.xlu0 %v4414
    %v4416 = vpop.xlane.xlu0 %4415
    %v4417 = vsel %vm80, %v4411, 0.0
    %4418 = vadd.xlane.f32.xlu0 %v4417
    %v4419 = vpop.xlane.xlu0 %4418
    %v4420 = vmul.f32 %v4416, %v87
    %v4421 = vmul.f32 %v4419, %v87
    %v4422 = vsub.f32 %v4410, %v4420
    %v4423 = vsub.f32 %v4411, %v4421
    %v4424 = vmul.f32 %v4422, %v4422
    %v4425 = vmul.f32 %v4423, %v4423
    %v4426 = vsel %vm80, %v4424, 0.0
    %4427 = vadd.xlane.f32.xlu0 %v4426
    %v4428 = vpop.xlane.xlu0 %4427
    %v4429 = vsel %vm80, %v4425, 0.0
    %4430 = vadd.xlane.f32.xlu0 %v4429
    %v4431 = vpop.xlane.xlu0 %4430
    %v4432 = vmul.f32 %v4428, %v87
    %v4433 = vmul.f32 %v4431, %v87
    %v4434 = vadd.f32 %v4432, 1e-05
    %v4435 = vadd.f32 %v4433, 1e-05
    %v4436 = vrsqrt.pop %v4434
    %v4437 = vrsqrt.pop %v4435
    %v4438 = vmul.f32 %v4422, %v4436
    %v4439 = vmul.f32 %v4423, %v4437
    %v4441 = vlaneseq
    %v4442 = vshrl.u32 %v4441, 7
    %v4443 = vsub.s32 0, %v4442
    %v4444 = vrot.slane %v4412, %v4443
    %v4446 = vmul.f32 %v4438, %v4444
    %v4447 = vmul.f32 %v4439, %v4444
    %v4449 = vlaneseq
    %v4450 = vshrl.u32 %v4449, 7
    %v4451 = vsub.s32 0, %v4450
    %v4452 = vrot.slane %v4413, %v4451
    %v4454 = vadd.f32 %v4446, %v4452
    %v4455 = vadd.f32 %v4447, %v4452
    %v4456 = vpack.c.bf16 %v4455, %v4454
    %v4457 = vld [vmem:[%s19] sm:$0xf]
    %v4458 = vld [vmem:[%s19 + $0x4] sm:$0xf]
    %v4459 = vld [vmem:[%s19 + $0x8] sm:$0xf]
    %v4460 = vld [vmem:[%s19 + $0xc] sm:$0xf]
    %v4461 = vld [vmem:[%s20] sm:$0x1]
    %v4463 = vlaneseq
    %v4464 = vshrl.u32 %v4463, 7
    %v4465 = vsub.s32 0, %v4464
    %v4466 = vrot.slane %v4461, %v4465
    %v4472 = vunpack.c.l.b16 %v4457
    %v4473 = vunpack.c.l.b16 %v4458
    %v4474 = vunpack.c.l.b16 %v4459
    %v4475 = vunpack.c.l.b16 %v4460
    %v4476 = vpack.c.b16 %v4473, %v4472
    %v4477 = vpack.c.b16 %v4475, %v4474
    %v4481 = vsel %vm80, %v4456, 0
    %4483 = vmatprep.subr.bf16.mxu0 0
    %4484 = vmatpush1.bf16.msra.mxu0 0
    %4485 = vmatprep.subr.bf16.mxu0 0
    %4486 = vmatpush1.bf16.msra.mxu0 0
    %4487 = vmatprep.subr.bf16.mxu0 0
    %4488 = vmatpush1.bf16.msra.mxu0 0
    %4489 = vmatprep.subr.bf16.mxu0 0
    %4490 = vmatpush1.bf16.msra.mxu0 0
    %4491 = vmatprep.subr.bf16.mxu0 0
    %4492 = vmatpush1.bf16.msra.mxu0 0
    %4493 = vmatprep.subr.bf16.mxu0 0
    %4494 = vmatpush1.bf16.msra.mxu0 0
    %4495 = vmatprep.subr.bf16.mxu0 0
    %4496 = vmatpush1.bf16.msra.mxu0 %v4477
    %4497 = vmatprep.subr.bf16.mxu0 0
    %4498 = vmatpush1.bf16.msra.mxu0 %v4476
    %4499 = vmatprep.subr.bf16.mxu0 0
    %4500 = vmatpush2.bf16.msra.mxu0 0
    %4501 = vmatprep.subr.bf16.mxu0 0
    %4502 = vmatpush2.bf16.msra.mxu0 0
    %4503 = vmatprep.subr.bf16.mxu0 0
    %4504 = vmatpush2.bf16.msra.mxu0 0
    %4505 = vmatprep.subr.bf16.mxu0 0
    %4506 = vmatpush2.bf16.msra.mxu0 0
    %4507 = vmatprep.subr.bf16.mxu0 0
    %4508 = vmatpush2.bf16.msra.mxu0 0
    %4509 = vmatprep.subr.bf16.mxu0 0
    %4510 = vmatpush2.bf16.msra.mxu0 0
    %4511 = vmatprep.subr.bf16.mxu0 0
    %4512 = vmatpush2.bf16.msra.mxu0 0
    %4513 = vmatprep.subr.bf16.mxu0 0
    %4514 = vmatpush2.bf16.msra.mxu0 0
    %4515 = vmatprep.mubr.bf16.mxu0 0
    %4516 = vmatmul.mubr.bf16.gmra.mxu0 %v4481
    %v4517 = vpop.f32.mrf.mxu0
    %v4518 = vadd.f32 %v4466, %v4517
    %v4519 = vpop.f32.mrf.mxu0
    %v4520 = vpop.f32.mrf.mxu0
    %v4521 = vadd.f32 %v4466, %v4520
    %v4522 = vpop.f32.mrf.mxu0
    %4523 = vdwg.mxu0
    %4524 = vst [vmem:[#allocation2] sm:$0xff] %v4518
    %4525 = vst [vmem:[#allocation2 + $0x8] sm:$0xff] %v4521
    // Predicated region
    $region86: #{tpu_custom_call.1} parent=1 // pred_check
      _
    $region87: #{tpu_custom_call.1} parent=1 // pred_check_branch
      %4527 = sbr.rel (0) target = $region89
    $region88: #{tpu_custom_call.1} parent=1 // pred_region
      %s4529 = ssub.s32 256, 256
      %4530 = vsyncadd [#allocation3], %s4529
      %s4531 = sshll.u32 [#allocation2], 4
      %s4532 = int_to_ptr.vmem [resolvable:$true] %s4531
      %4537 = dma.vmem_to_hbm [thread:$0]  %s4532, 256, %s21, [#allocation3], 128, 128, 8
    $region89: #{tpu_custom_call.1} parent=1 // pred_fallthru
      _
    // Predicated region
    $region90: #{tpu_custom_call.1} parent=1 // pred_check
      _
    $region91: #{tpu_custom_call.1} parent=1 // pred_check_branch
      %4539 = sbr.rel (0) target = $region93
    $region92: #{tpu_custom_call.1} parent=1 // pred_region
      %4540 = dma.done [#allocation3], 256
    $region93: #{tpu_custom_call.1} parent=1 // pred_fallthru
      _
    %4541 = vsyncpa [#allocation3], 1

</llo_original>
